<compile_context>
chip_gen: v6e
topology: v6e:2x2x1
jax: 0.10.0
libtpu: 0.0.40
codegen_flags: <defaults>
</compile_context>

<pallas_src>
import functools

import jax
import jax.numpy as jnp
import numpy as np
from jax.experimental import pallas as pl
from jax.experimental.pallas import tpu as pltpu

SIZE = 15
C_IN = 8
K = 3
C1, C2, C3 = 256, 32, 16
L1, L2, L3 = SIZE - 2, SIZE - 4, SIZE - 6   # 13, 11, 9
FC_IN = C2 + C3       # 48
FC_OUT = 2
FC_PAD = 128          # lane-dense padded FC output width
EPS = 1e-5
MAX_TILE_N = 256      # fits v7x 64 MiB VMEM comfortably; fine on v5e/v6e too


def cnn_kernel(cols1_ref, w1_ref, s1_ref, t1_ref,
               w2_ref, s2_ref, t2_ref,
               w3_ref, s3_ref, t3_ref,
               wfc1_ref, wfc2_ref, bfc_ref,
               out_ref, *, tile_n):
    f32 = jnp.float32

    # ---- layer 1: plain 2-D matmul on the wrapper-built im2col --------------
    cols1 = cols1_ref[...]                                        # (tn*13, 24)
    h1 = jnp.dot(cols1, w1_ref[...], preferred_element_type=f32)  # (tn*13, 256)
    h1 = jnp.maximum(h1 * s1_ref[...] + t1_ref[...], 0.0)

    # ---- layer 2: one depth-256 matmul for all 3 taps, then shifted adds ----
    y2 = jnp.dot(h1, w2_ref[...], preferred_element_type=f32)     # (tn*13, 96)
    y2 = y2.reshape(tile_n, L1, K * C2)
    acc2 = (y2[:, 0:L2, 0:C2]
            + y2[:, 1:L2 + 1, C2:2 * C2]
            + y2[:, 2:L2 + 2, 2 * C2:3 * C2])                     # (tn, 11, 32)
    h2 = jnp.maximum(acc2 * s2_ref[...] + t2_ref[...], 0.0)
    p1 = jnp.max(h2, axis=1)                                      # (tn, 32)

    # ---- layer 3: same pattern, contraction depth 32 ------------------------
    y3 = jnp.dot(h2.reshape(tile_n * L2, C2), w3_ref[...],
                 preferred_element_type=f32)                      # (tn*11, 48)
    y3 = y3.reshape(tile_n, L2, K * C3)
    acc3 = (y3[:, 0:L3, 0:C3]
            + y3[:, 1:L3 + 1, C3:2 * C3]
            + y3[:, 2:L3 + 2, 2 * C3:3 * C3])                     # (tn, 9, 16)
    h3 = jnp.maximum(acc3 * s3_ref[...] + t3_ref[...], 0.0)
    p2 = jnp.max(h3, axis=1)                                      # (tn, 16)

    # ---- FC (lane-dense, 128-wide padded output) -----------------------------
    out = (jnp.dot(p1, wfc1_ref[...], preferred_element_type=f32)
           + jnp.dot(p2, wfc2_ref[...], preferred_element_type=f32)
           + bfc_ref[...])                                        # (tn, 128)
    out_ref[...] = out.astype(out_ref.dtype)


def _fold_bn_scale_shift(b, gamma, beta, mean, var):
    scale = gamma / jnp.sqrt(var + EPS)
    shift = beta + scale * (b - mean)
    return scale, shift


def _fold_l1(w, b, g, be, m, v):
    """Layer-1 weight as (K*Cin, Cout) for the wrapper-side im2col (col = k*Cin+ci)."""
    Cout, Cin, Kk = w.shape
    w_mat = jnp.transpose(w, (2, 1, 0)).reshape(Kk * Cin, Cout)
    s, t = _fold_bn_scale_shift(b, g, be, m, v)
    return w_mat, s.reshape(1, Cout), t.reshape(1, Cout)


def _fold_kwide(w, b, g, be, m, v):
    """Conv weight as one (Cin, K*Cout) matrix (col = k*Cout+co) for the
    matmul-then-shift-add formulation."""
    Cout, Cin, Kk = w.shape
    w_all = jnp.transpose(w, (1, 2, 0)).reshape(Cin, Kk * Cout)
    s, t = _fold_bn_scale_shift(b, g, be, m, v)
    return w_all, s.reshape(1, Cout), t.reshape(1, Cout)


def _round_up(x, m):
    return ((x + m - 1) // m) * m


@jax.jit
def cnn_forward(x_ncl, params):
    """x_ncl: (N, 8, 15) PyTorch NCL layout. Returns (N, 2) float32."""
    x = jnp.transpose(x_ncl, (0, 2, 1)).astype(jnp.float32)       # (N, 15, 8)
    N = x.shape[0]

    # Layer-1 im2col in the wrapper (XLA): (N, 13, 24), col order = k*Cin + ci.
    cols1 = jnp.concatenate([x[:, k:k + L1, :] for k in range(K)], axis=-1)

    tile_n = min(MAX_TILE_N, _round_up(max(N, 1), 8))
    n_blocks = pl.cdiv(N, tile_n)
    n_pad = n_blocks * tile_n
    if n_pad != N:
        cols1 = jnp.pad(cols1, ((0, n_pad - N), (0, 0), (0, 0)))
    cols1_2d = cols1.reshape(n_pad * L1, K * C_IN)                # (n_pad*13, 24)

    # Fold conv bias + eval-mode BatchNorm into per-channel scale / shift.
    w1, s1, t1 = _fold_l1(params['w1'], params['b1'], params['g1'],
                          params['be1'], params['m1'], params['v1'])
    w2, s2, t2 = _fold_kwide(params['w2'], params['b2'], params['g2'],
                             params['be2'], params['m2'], params['v2'])
    w3, s3, t3 = _fold_kwide(params['w3'], params['b3'], params['g3'],
                             params['be3'], params['m3'], params['v3'])

    wfc = params['wfc']                                           # (2, 48)
    wfc1 = jnp.pad(wfc[:, :C2].T, ((0, 0), (0, FC_PAD - FC_OUT))) # (32, 128)
    wfc2 = jnp.pad(wfc[:, C2:].T, ((0, 0), (0, FC_PAD - FC_OUT))) # (16, 128)
    bfc = jnp.pad(params['bfc'].reshape(1, FC_OUT),
                  ((0, 0), (0, FC_PAD - FC_OUT)))                 # (1, 128)

    const = lambda i: (0, 0)
    out = pl.pallas_call(
        functools.partial(cnn_kernel, tile_n=tile_n),
        out_shape=jax.ShapeDtypeStruct((n_pad, FC_PAD), jnp.float32),
        grid=(n_blocks,),
        in_specs=[
            pl.BlockSpec((tile_n * L1, K * C_IN), lambda i: (i, 0)),  # cols1
            pl.BlockSpec((K * C_IN, C1), const),                      # w1 (24,256)
            pl.BlockSpec((1, C1), const),                             # s1
            pl.BlockSpec((1, C1), const),                             # t1
            pl.BlockSpec((C1, K * C2), const),                        # w2 (256,96)
            pl.BlockSpec((1, C2), const),                             # s2
            pl.BlockSpec((1, C2), const),                             # t2
            pl.BlockSpec((C2, K * C3), const),                        # w3 (32,48)
            pl.BlockSpec((1, C3), const),                             # s3
            pl.BlockSpec((1, C3), const),                             # t3
            pl.BlockSpec((C2, FC_PAD), const),                        # wfc1
            pl.BlockSpec((C3, FC_PAD), const),                        # wfc2
            pl.BlockSpec((1, FC_PAD), const),                         # bfc
        ],
        out_specs=pl.BlockSpec((tile_n, FC_PAD), lambda i: (i, 0)),
        compiler_params=pltpu.CompilerParams(
            dimension_semantics=("parallel",),
            vmem_limit_bytes=48 * 1024 * 1024,
        ),
    )(cols1_2d, w1, s1, t1, w2, s2, t2, w3, s3, t3, wfc1, wfc2, bfc)

    return out[:N, :FC_OUT]


def init_params(key):
    ks = jax.random.split(key, 8)
    p = {}
    p['w1'] = 0.1 * jax.random.normal(ks[0], (C1, C_IN, 3), jnp.float32)
    p['b1'] = 0.05 * jax.random.normal(ks[1], (C1,), jnp.float32)
    p['w2'] = 0.1 * jax.random.normal(ks[2], (C2, C1, 3), jnp.float32)
    p['b2'] = 0.05 * jax.random.normal(ks[3], (C2,), jnp.float32)
    p['w3'] = 0.1 * jax.random.normal(ks[4], (C3, C2, 3), jnp.float32)
    p['b3'] = 0.05 * jax.random.normal(ks[5], (C3,), jnp.float32)
    p['wfc'] = 0.1 * jax.random.normal(ks[6], (FC_OUT, FC_IN), jnp.float32)
    p['bfc'] = 0.05 * jax.random.normal(ks[7], (FC_OUT,), jnp.float32)
    # BatchNorm (eval mode): affine params + running stats, deterministic.
    for i, c in zip((1, 2, 3), (C1, C2, C3)):
        p[f'g{i}'] = 1.0 + 0.01 * jnp.arange(c, dtype=jnp.float32)
        p[f'be{i}'] = 0.01 * jnp.arange(c, dtype=jnp.float32) - 0.05
        p[f'm{i}'] = 0.02 * jnp.sin(jnp.arange(c, dtype=jnp.float32))
        p[f'v{i}'] = 1.0 + 0.05 * jnp.cos(jnp.arange(c, dtype=jnp.float32)) ** 2
    return p


def reference_forward(x_ncl, params):
    """Pure-JAX reference (lax.conv) for correctness check."""
    def conv1d(x, w, b):   # x: (N, Cin, L), w: (Cout, Cin, K)
        y = jax.lax.conv_general_dilated(
            x, w, window_strides=(1,), padding='VALID',
            dimension_numbers=('NCH', 'OIH', 'NCH'))
        return y + b[None, :, None]

    def bn(x, g, be, m, v):
        return g[None, :, None] * (x - m[None, :, None]) / jnp.sqrt(
            v[None, :, None] + EPS) + be[None, :, None]

    x = x_ncl.astype(jnp.float32)
    h = jax.nn.relu(bn(conv1d(x, params['w1'], params['b1']),
                       params['g1'], params['be1'], params['m1'], params['v1']))
    h = jax.nn.relu(bn(conv1d(h, params['w2'], params['b2']),
                       params['g2'], params['be2'], params['m2'], params['v2']))
    x1 = jnp.max(h, axis=2)                                   # max_pool1d(k=SIZE-4) -> (N, C2)
    h = jax.nn.relu(bn(conv1d(h, params['w3'], params['b3']),
                       params['g3'], params['be3'], params['m3'], params['v3']))
    x2 = jnp.max(h, axis=2)                                   # max_pool1d(k=SIZE-6) -> (N, C3)
    feat = jnp.concatenate([x1, x2], axis=1)                  # (N, 48)
    return feat @ params['wfc'].T + params['bfc']


if __name__ == "__main__":
    key = jax.random.PRNGKey(0)
    k_x, k_p, k_x2 = jax.random.split(key, 3)
    params = init_params(k_p)

    # Small batch (single grid step, tile_n=8).
    x_small = jax.random.normal(k_x, (2, C_IN, SIZE), jnp.float32)   # PyTorch NCL input
    out_small = jax.block_until_ready(cnn_forward(x_small, params))
    assert out_small.shape == (2, FC_OUT), out_small.shape
    ref_small = reference_forward(x_small, params)
    np.testing.assert_allclose(np.asarray(out_small), np.asarray(ref_small),
                               rtol=1e-4, atol=1e-4)

    # Larger batch exercising multiple grid steps (tile_n=256, grid=(2,), padded to 512).
    x_big = jax.random.normal(k_x2, (300, C_IN, SIZE), jnp.float32)
    out_big = jax.block_until_ready(cnn_forward(x_big, params))
    assert out_big.shape == (300, FC_OUT), out_big.shape
    ref_big = reference_forward(x_big, params)
    np.testing.assert_allclose(np.asarray(out_big), np.asarray(ref_big),
                               rtol=1e-4, atol=1e-4)

    print("KERNEL_OK")
</pallas_src>

<mosaic_0001>
module attributes {stable_mosaic.version = 11 : i64} {
  func.func @cnn_kernel(%arg0: i32, %arg1: memref<104x24xf32, #tpu.memory_space<vmem>>, %arg2: memref<24x256xf32, #tpu.memory_space<vmem>>, %arg3: memref<1x256xf32, #tpu.memory_space<vmem>>, %arg4: memref<1x256xf32, #tpu.memory_space<vmem>>, %arg5: memref<256x96xf32, #tpu.memory_space<vmem>>, %arg6: memref<1x32xf32, #tpu.memory_space<vmem>>, %arg7: memref<1x32xf32, #tpu.memory_space<vmem>>, %arg8: memref<32x48xf32, #tpu.memory_space<vmem>>, %arg9: memref<1x16xf32, #tpu.memory_space<vmem>>, %arg10: memref<1x16xf32, #tpu.memory_space<vmem>>, %arg11: memref<32x128xf32, #tpu.memory_space<vmem>>, %arg12: memref<16x128xf32, #tpu.memory_space<vmem>>, %arg13: memref<1x128xf32, #tpu.memory_space<vmem>>, %arg14: memref<8x128xf32, #tpu.memory_space<vmem>>) attributes {dimension_semantics = [#tpu.dimension_semantics<parallel>], iteration_bounds = array<i64: 1>, scalar_prefetch = 0 : i64, scratch_operands = 0 : i64, tpu.core_type = #tpu.core_type<tc>, window_params = [{transform_indices = @transform_0, window_bounds = array<i64: 104, 24>}, {pipeline_mode = #tpu.pipeline_mode<synchronous>, transform_indices = @transform_1, window_bounds = array<i64: 24, 256>}, {pipeline_mode = #tpu.pipeline_mode<synchronous>, transform_indices = @transform_2, window_bounds = array<i64: 1, 256>}, {pipeline_mode = #tpu.pipeline_mode<synchronous>, transform_indices = @transform_3, window_bounds = array<i64: 1, 256>}, {pipeline_mode = #tpu.pipeline_mode<synchronous>, transform_indices = @transform_4, window_bounds = array<i64: 256, 96>}, {pipeline_mode = #tpu.pipeline_mode<synchronous>, transform_indices = @transform_5, window_bounds = array<i64: 1, 32>}, {pipeline_mode = #tpu.pipeline_mode<synchronous>, transform_indices = @transform_6, window_bounds = array<i64: 1, 32>}, {pipeline_mode = #tpu.pipeline_mode<synchronous>, transform_indices = @transform_7, window_bounds = array<i64: 32, 48>}, {pipeline_mode = #tpu.pipeline_mode<synchronous>, transform_indices = @transform_8, window_bounds = array<i64: 1, 16>}, {pipeline_mode = #tpu.pipeline_mode<synchronous>, transform_indices = @transform_9, window_bounds = array<i64: 1, 16>}, {pipeline_mode = #tpu.pipeline_mode<synchronous>, transform_indices = @transform_10, window_bounds = array<i64: 32, 128>}, {pipeline_mode = #tpu.pipeline_mode<synchronous>, transform_indices = @transform_11, window_bounds = array<i64: 16, 128>}, {pipeline_mode = #tpu.pipeline_mode<synchronous>, transform_indices = @transform_12, window_bounds = array<i64: 1, 128>}, {transform_indices = @transform_13, window_bounds = array<i64: 8, 128>}]} {
    %c0 = arith.constant 0 : index
    %c0_0 = arith.constant 0 : index
    %0 = vector.load %arg1[%c0, %c0_0] : memref<104x24xf32, #tpu.memory_space<vmem>>, vector<104x24xf32>
    %c0_1 = arith.constant 0 : index
    %c0_2 = arith.constant 0 : index
    %1 = vector.load %arg2[%c0_1, %c0_2] : memref<24x256xf32, #tpu.memory_space<vmem>>, vector<24x256xf32>
    %cst = arith.constant dense<0.000000e+00> : vector<104x256xf32>
    %2 = tpu.matmul %0, %1, %cst {dimension_numbers = #tpu.dot_dimension_numbers<[1], [0], [0], [1], [0, 0, 1, 1], [], []>} : vector<104x24xf32>, vector<24x256xf32>, vector<104x256xf32> -> vector<104x256xf32>
    %c0_3 = arith.constant 0 : index
    %c0_4 = arith.constant 0 : index
    %3 = vector.load %arg3[%c0_3, %c0_4] : memref<1x256xf32, #tpu.memory_space<vmem>>, vector<1x256xf32>
    %4 = vector.broadcast %3 : vector<1x256xf32> to vector<104x256xf32>
    %5 = arith.mulf %2, %4 : vector<104x256xf32>
    %c0_5 = arith.constant 0 : index
    %c0_6 = arith.constant 0 : index
    %6 = vector.load %arg4[%c0_5, %c0_6] : memref<1x256xf32, #tpu.memory_space<vmem>>, vector<1x256xf32>
    %7 = vector.broadcast %6 : vector<1x256xf32> to vector<104x256xf32>
    %8 = arith.addf %5, %7 : vector<104x256xf32>
    %cst_7 = arith.constant 0.000000e+00 : f32
    %9 = vector.broadcast %cst_7 : f32 to vector<104x256xf32>
    %10 = arith.maximumf %8, %9 : vector<104x256xf32>
    %c0_8 = arith.constant 0 : index
    %c0_9 = arith.constant 0 : index
    %11 = vector.load %arg5[%c0_8, %c0_9] : memref<256x96xf32, #tpu.memory_space<vmem>>, vector<256x96xf32>
    %cst_10 = arith.constant dense<0.000000e+00> : vector<104x96xf32>
    %12 = tpu.matmul %10, %11, %cst_10 {dimension_numbers = #tpu.dot_dimension_numbers<[1], [0], [0], [1], [0, 0, 1, 1], [], []>} : vector<104x256xf32>, vector<256x96xf32>, vector<104x96xf32> -> vector<104x96xf32>
    %13 = vector.shape_cast %12 : vector<104x96xf32> to vector<8x13x96xf32>
    %14 = vector.extract_strided_slice %13 {offsets = [0, 0, 0], sizes = [8, 11, 32], strides = [1, 1, 1]} : vector<8x13x96xf32> to vector<8x11x32xf32>
    %15 = vector.extract_strided_slice %13 {offsets = [0, 1, 32], sizes = [8, 11, 32], strides = [1, 1, 1]} : vector<8x13x96xf32> to vector<8x11x32xf32>
    %16 = arith.addf %14, %15 : vector<8x11x32xf32>
    %17 = vector.extract_strided_slice %13 {offsets = [0, 2, 64], sizes = [8, 11, 32], strides = [1, 1, 1]} : vector<8x13x96xf32> to vector<8x11x32xf32>
    %18 = arith.addf %16, %17 : vector<8x11x32xf32>
    %c0_11 = arith.constant 0 : index
    %c0_12 = arith.constant 0 : index
    %19 = vector.load %arg6[%c0_11, %c0_12] : memref<1x32xf32, #tpu.memory_space<vmem>>, vector<1x32xf32>
    %20 = vector.shape_cast %19 : vector<1x32xf32> to vector<1x1x32xf32>
    %21 = vector.broadcast %20 : vector<1x1x32xf32> to vector<8x11x32xf32>
    %22 = arith.mulf %18, %21 : vector<8x11x32xf32>
    %c0_13 = arith.constant 0 : index
    %c0_14 = arith.constant 0 : index
    %23 = vector.load %arg7[%c0_13, %c0_14] : memref<1x32xf32, #tpu.memory_space<vmem>>, vector<1x32xf32>
    %24 = vector.shape_cast %23 : vector<1x32xf32> to vector<1x1x32xf32>
    %25 = vector.broadcast %24 : vector<1x1x32xf32> to vector<8x11x32xf32>
    %26 = arith.addf %22, %25 : vector<8x11x32xf32>
    %cst_15 = arith.constant 0.000000e+00 : f32
    %27 = vector.broadcast %cst_15 : f32 to vector<8x11x32xf32>
    %28 = arith.maximumf %26, %27 : vector<8x11x32xf32>
    %cst_16 = arith.constant dense<0xFF800000> : vector<8x32xf32>
    %29 = vector.multi_reduction <maximumf>, %28, %cst_16 [1] : vector<8x11x32xf32> to vector<8x32xf32>
    %30 = vector.shape_cast %28 : vector<8x11x32xf32> to vector<88x32xf32>
    %c0_17 = arith.constant 0 : index
    %c0_18 = arith.constant 0 : index
    %31 = vector.load %arg8[%c0_17, %c0_18] : memref<32x48xf32, #tpu.memory_space<vmem>>, vector<32x48xf32>
    %cst_19 = arith.constant dense<0.000000e+00> : vector<88x48xf32>
    %32 = tpu.matmul %30, %31, %cst_19 {dimension_numbers = #tpu.dot_dimension_numbers<[1], [0], [0], [1], [0, 0, 1, 1], [], []>} : vector<88x32xf32>, vector<32x48xf32>, vector<88x48xf32> -> vector<88x48xf32>
    %33 = vector.shape_cast %32 : vector<88x48xf32> to vector<8x11x48xf32>
    %34 = vector.extract_strided_slice %33 {offsets = [0, 0, 0], sizes = [8, 9, 16], strides = [1, 1, 1]} : vector<8x11x48xf32> to vector<8x9x16xf32>
    %35 = vector.extract_strided_slice %33 {offsets = [0, 1, 16], sizes = [8, 9, 16], strides = [1, 1, 1]} : vector<8x11x48xf32> to vector<8x9x16xf32>
    %36 = arith.addf %34, %35 : vector<8x9x16xf32>
    %37 = vector.extract_strided_slice %33 {offsets = [0, 2, 32], sizes = [8, 9, 16], strides = [1, 1, 1]} : vector<8x11x48xf32> to vector<8x9x16xf32>
    %38 = arith.addf %36, %37 : vector<8x9x16xf32>
    %c0_20 = arith.constant 0 : index
    %c0_21 = arith.constant 0 : index
    %39 = vector.load %arg9[%c0_20, %c0_21] : memref<1x16xf32, #tpu.memory_space<vmem>>, vector<1x16xf32>
    %40 = vector.shape_cast %39 : vector<1x16xf32> to vector<1x1x16xf32>
    %41 = vector.broadcast %40 : vector<1x1x16xf32> to vector<8x9x16xf32>
    %42 = arith.mulf %38, %41 : vector<8x9x16xf32>
    %c0_22 = arith.constant 0 : index
    %c0_23 = arith.constant 0 : index
    %43 = vector.load %arg10[%c0_22, %c0_23] : memref<1x16xf32, #tpu.memory_space<vmem>>, vector<1x16xf32>
    %44 = vector.shape_cast %43 : vector<1x16xf32> to vector<1x1x16xf32>
    %45 = vector.broadcast %44 : vector<1x1x16xf32> to vector<8x9x16xf32>
    %46 = arith.addf %42, %45 : vector<8x9x16xf32>
    %cst_24 = arith.constant 0.000000e+00 : f32
    %47 = vector.broadcast %cst_24 : f32 to vector<8x9x16xf32>
    %48 = arith.maximumf %46, %47 : vector<8x9x16xf32>
    %cst_25 = arith.constant dense<0xFF800000> : vector<8x16xf32>
    %49 = vector.multi_reduction <maximumf>, %48, %cst_25 [1] : vector<8x9x16xf32> to vector<8x16xf32>
    %c0_26 = arith.constant 0 : index
    %c0_27 = arith.constant 0 : index
    %50 = vector.load %arg11[%c0_26, %c0_27] : memref<32x128xf32, #tpu.memory_space<vmem>>, vector<32x128xf32>
    %cst_28 = arith.constant dense<0.000000e+00> : vector<8x128xf32>
    %51 = tpu.matmul %29, %50, %cst_28 {dimension_numbers = #tpu.dot_dimension_numbers<[1], [0], [0], [1], [0, 0, 1, 1], [], []>} : vector<8x32xf32>, vector<32x128xf32>, vector<8x128xf32> -> vector<8x128xf32>
    %c0_29 = arith.constant 0 : index
    %c0_30 = arith.constant 0 : index
    %52 = vector.load %arg12[%c0_29, %c0_30] : memref<16x128xf32, #tpu.memory_space<vmem>>, vector<16x128xf32>
    %cst_31 = arith.constant dense<0.000000e+00> : vector<8x128xf32>
    %53 = tpu.matmul %49, %52, %cst_31 {dimension_numbers = #tpu.dot_dimension_numbers<[1], [0], [0], [1], [0, 0, 1, 1], [], []>} : vector<8x16xf32>, vector<16x128xf32>, vector<8x128xf32> -> vector<8x128xf32>
    %54 = arith.addf %51, %53 : vector<8x128xf32>
    %c0_32 = arith.constant 0 : index
    %c0_33 = arith.constant 0 : index
    %55 = vector.load %arg13[%c0_32, %c0_33] : memref<1x128xf32, #tpu.memory_space<vmem>>, vector<1x128xf32>
    %56 = vector.broadcast %55 : vector<1x128xf32> to vector<8x128xf32>
    %57 = arith.addf %54, %56 : vector<8x128xf32>
    %c0_34 = arith.constant 0 : index
    %c0_35 = arith.constant 0 : index
    %58 = vector.load %arg14[%c0_34, %c0_35] : memref<8x128xf32, #tpu.memory_space<vmem>>, vector<8x128xf32>
    tpu.vector_store %arg14[%c0_34, %c0_35], %57 {strides = array<i32>} : memref<8x128xf32, #tpu.memory_space<vmem>>, vector<8x128xf32>,
    return
  }
  func.func @transform_0(%arg0: i32) -> (i32, i32) {
    %c0_i32 = arith.constant 0 : i32
    %c0_i32_0 = arith.constant 0 : i32
    return %arg0, %c0_i32 : i32, i32
  }
  func.func @transform_1(%arg0: i32) -> (i32, i32) {
    %c0_i32 = arith.constant 0 : i32
    %c0_i32_0 = arith.constant 0 : i32
    %c0_i32_1 = arith.constant 0 : i32
    return %c0_i32, %c0_i32_0 : i32, i32
  }
  func.func @transform_2(%arg0: i32) -> (i32, i32) {
    %c0_i32 = arith.constant 0 : i32
    %c0_i32_0 = arith.constant 0 : i32
    %c0_i32_1 = arith.constant 0 : i32
    return %c0_i32, %c0_i32_0 : i32, i32
  }
  func.func @transform_3(%arg0: i32) -> (i32, i32) {
    %c0_i32 = arith.constant 0 : i32
    %c0_i32_0 = arith.constant 0 : i32
    %c0_i32_1 = arith.constant 0 : i32
    return %c0_i32, %c0_i32_0 : i32, i32
  }
  func.func @transform_4(%arg0: i32) -> (i32, i32) {
    %c0_i32 = arith.constant 0 : i32
    %c0_i32_0 = arith.constant 0 : i32
    %c0_i32_1 = arith.constant 0 : i32
    return %c0_i32, %c0_i32_0 : i32, i32
  }
  func.func @transform_5(%arg0: i32) -> (i32, i32) {
    %c0_i32 = arith.constant 0 : i32
    %c0_i32_0 = arith.constant 0 : i32
    %c0_i32_1 = arith.constant 0 : i32
    return %c0_i32, %c0_i32_0 : i32, i32
  }
  func.func @transform_6(%arg0: i32) -> (i32, i32) {
    %c0_i32 = arith.constant 0 : i32
    %c0_i32_0 = arith.constant 0 : i32
    %c0_i32_1 = arith.constant 0 : i32
    return %c0_i32, %c0_i32_0 : i32, i32
  }
  func.func @transform_7(%arg0: i32) -> (i32, i32) {
    %c0_i32 = arith.constant 0 : i32
    %c0_i32_0 = arith.constant 0 : i32
    %c0_i32_1 = arith.constant 0 : i32
    return %c0_i32, %c0_i32_0 : i32, i32
  }
  func.func @transform_8(%arg0: i32) -> (i32, i32) {
    %c0_i32 = arith.constant 0 : i32
    %c0_i32_0 = arith.constant 0 : i32
    %c0_i32_1 = arith.constant 0 : i32
    return %c0_i32, %c0_i32_0 : i32, i32
  }
  func.func @transform_9(%arg0: i32) -> (i32, i32) {
    %c0_i32 = arith.constant 0 : i32
    %c0_i32_0 = arith.constant 0 : i32
    %c0_i32_1 = arith.constant 0 : i32
    return %c0_i32, %c0_i32_0 : i32, i32
  }
  func.func @transform_10(%arg0: i32) -> (i32, i32) {
    %c0_i32 = arith.constant 0 : i32
    %c0_i32_0 = arith.constant 0 : i32
    %c0_i32_1 = arith.constant 0 : i32
    return %c0_i32, %c0_i32_0 : i32, i32
  }
  func.func @transform_11(%arg0: i32) -> (i32, i32) {
    %c0_i32 = arith.constant 0 : i32
    %c0_i32_0 = arith.constant 0 : i32
    %c0_i32_1 = arith.constant 0 : i32
    return %c0_i32, %c0_i32_0 : i32, i32
  }
  func.func @transform_12(%arg0: i32) -> (i32, i32) {
    %c0_i32 = arith.constant 0 : i32
    %c0_i32_0 = arith.constant 0 : i32
    %c0_i32_1 = arith.constant 0 : i32
    return %c0_i32, %c0_i32_0 : i32, i32
  }
  func.func @transform_13(%arg0: i32) -> (i32, i32) {
    %c0_i32 = arith.constant 0 : i32
    %c0_i32_0 = arith.constant 0 : i32
    return %arg0, %c0_i32 : i32, i32
  }
}

</mosaic_0001>

<llo_original>
// kernel: cnn_forward.1
$region0: #{cnn_forward.1}
  #allocation0 [shape = 'u32[]', space=smem, size = 0x4, offset = 0x4, fixed_abs, tag = 'smem constant byte address 0x4 - core index']
  #allocation1 [shape = 'u32[144,128]{1,0:T(1,128)}', space=vmem, size = 0x12000, scoped, tag = 'internal scratch']
  %s0 = inlined_call_operand.vmem [shape: f32[104,24], index: 0, kind: input, shape index: {}]
  %s1 = inlined_call_operand.vmem [shape: f32[24,256], index: 1, kind: input, shape index: {}]
  %s2 = inlined_call_operand.vmem [shape: f32[1,256], index: 2, kind: input, shape index: {}]
  %s3 = inlined_call_operand.vmem [shape: f32[1,256], index: 3, kind: input, shape index: {}]
  %s4 = inlined_call_operand.vmem [shape: f32[256,96], index: 4, kind: input, shape index: {}]
  %s5 = inlined_call_operand.vmem [shape: f32[1,32], index: 5, kind: input, shape index: {}]
  %s6 = inlined_call_operand.vmem [shape: f32[1,32], index: 6, kind: input, shape index: {}]
  %s7 = inlined_call_operand.vmem [shape: f32[32,48], index: 7, kind: input, shape index: {}]
  %s8 = inlined_call_operand.vmem [shape: f32[1,16], index: 8, kind: input, shape index: {}]
  %s9 = inlined_call_operand.vmem [shape: f32[1,16], index: 9, kind: input, shape index: {}]
  %s10 = inlined_call_operand.vmem [shape: f32[32,128], index: 10, kind: input, shape index: {}]
  %s11 = inlined_call_operand.vmem [shape: f32[16,128], index: 11, kind: input, shape index: {}]
  %s12 = inlined_call_operand.vmem [shape: f32[1,128], index: 12, kind: input, shape index: {}]
  %s13 = inlined_call_operand.vmem [shape: f32[8,128], index: 13, kind: output, shape index: {}]
  %s14 = sld [smem:[#allocation0]]
  $region62: #{cnn_forward.1} parent=0
    _
  %s16 = ssub.s32 1, %s14
  %s17 = scalar_select 0, %s16, %s14
  // Predicated region
  $region2: #{cnn_forward.1} parent=0 // pred_check
    _
  $region3: #{cnn_forward.1} parent=0 // pred_check_branch
    %19 = sbr.rel (0) target = $region5
  $region4: #{cnn_forward.1} parent=0 // pred_region
    _
  $region5: #{cnn_forward.1} parent=0 // pred_fallthru
    _
  // Predicated region
  $region6: #{cnn_forward.1} parent=0 // pred_check
    _
  $region7: #{cnn_forward.1} parent=0 // pred_check_branch
    %21 = sbr.rel (0) target = $region9
  $region8: #{cnn_forward.1} parent=0 // pred_region
    _
  $region9: #{cnn_forward.1} parent=0 // pred_fallthru
    _
  // Predicated region
  $region10: #{cnn_forward.1} parent=0 // pred_check
    _
  $region11: #{cnn_forward.1} parent=0 // pred_check_branch
    %23 = sbr.rel (0) target = $region13
  $region12: #{cnn_forward.1} parent=0 // pred_region
    _
  $region13: #{cnn_forward.1} parent=0 // pred_fallthru
    _
  // Predicated region
  $region14: #{cnn_forward.1} parent=0 // pred_check
    _
  $region15: #{cnn_forward.1} parent=0 // pred_check_branch
    %25 = sbr.rel (0) target = $region17
  $region16: #{cnn_forward.1} parent=0 // pred_region
    _
  $region17: #{cnn_forward.1} parent=0 // pred_fallthru
    _
  // Predicated region
  $region18: #{cnn_forward.1} parent=0 // pred_check
    _
  $region19: #{cnn_forward.1} parent=0 // pred_check_branch
    %27 = sbr.rel (0) target = $region21
  $region20: #{cnn_forward.1} parent=0 // pred_region
    _
  $region21: #{cnn_forward.1} parent=0 // pred_fallthru
    _
  // Predicated region
  $region22: #{cnn_forward.1} parent=0 // pred_check
    _
  $region23: #{cnn_forward.1} parent=0 // pred_check_branch
    %29 = sbr.rel (0) target = $region25
  $region24: #{cnn_forward.1} parent=0 // pred_region
    _
  $region25: #{cnn_forward.1} parent=0 // pred_fallthru
    _
  // Predicated region
  $region26: #{cnn_forward.1} parent=0 // pred_check
    _
  $region27: #{cnn_forward.1} parent=0 // pred_check_branch
    %31 = sbr.rel (0) target = $region29
  $region28: #{cnn_forward.1} parent=0 // pred_region
    _
  $region29: #{cnn_forward.1} parent=0 // pred_fallthru
    _
  // Predicated region
  $region30: #{cnn_forward.1} parent=0 // pred_check
    _
  $region31: #{cnn_forward.1} parent=0 // pred_check_branch
    %33 = sbr.rel (0) target = $region33
  $region32: #{cnn_forward.1} parent=0 // pred_region
    _
  $region33: #{cnn_forward.1} parent=0 // pred_fallthru
    _
  // Predicated region
  $region34: #{cnn_forward.1} parent=0 // pred_check
    _
  $region35: #{cnn_forward.1} parent=0 // pred_check_branch
    %35 = sbr.rel (0) target = $region37
  $region36: #{cnn_forward.1} parent=0 // pred_region
    _
  $region37: #{cnn_forward.1} parent=0 // pred_fallthru
    _
  // Predicated region
  $region38: #{cnn_forward.1} parent=0 // pred_check
    _
  $region39: #{cnn_forward.1} parent=0 // pred_check_branch
    %37 = sbr.rel (0) target = $region41
  $region40: #{cnn_forward.1} parent=0 // pred_region
    _
  $region41: #{cnn_forward.1} parent=0 // pred_fallthru
    _
  // Predicated region
  $region42: #{cnn_forward.1} parent=0 // pred_check
    _
  $region43: #{cnn_forward.1} parent=0 // pred_check_branch
    %39 = sbr.rel (0) target = $region45
  $region44: #{cnn_forward.1} parent=0 // pred_region
    _
  $region45: #{cnn_forward.1} parent=0 // pred_fallthru
    _
  // Predicated region
  $region46: #{cnn_forward.1} parent=0 // pred_check
    _
  $region47: #{cnn_forward.1} parent=0 // pred_check_branch
    %41 = sbr.rel (0) target = $region49
  $region48: #{cnn_forward.1} parent=0 // pred_region
    _
  $region49: #{cnn_forward.1} parent=0 // pred_fallthru
    _
  // Predicated region
  $region50: #{cnn_forward.1} parent=0 // pred_check
    _
  $region51: #{cnn_forward.1} parent=0 // pred_check_branch
    %43 = sbr.rel (0) target = $region53
  $region52: #{cnn_forward.1} parent=0 // pred_region
    _
  $region53: #{cnn_forward.1} parent=0 // pred_fallthru
    _
  %v44 = vld [vmem:[%s0] sm:$0xff]
  %v45 = vld [vmem:[%s0 + $0x8] sm:$0xff]
  %v46 = vld [vmem:[%s0 + $0x10] sm:$0xff]
  %v47 = vld [vmem:[%s0 + $0x18] sm:$0xff]
  %v48 = vld [vmem:[%s0 + $0x20] sm:$0xff]
  %v49 = vld [vmem:[%s0 + $0x28] sm:$0xff]
  %v50 = vld [vmem:[%s0 + $0x30] sm:$0xff]
  %v51 = vld [vmem:[%s0 + $0x38] sm:$0xff]
  %v52 = vld [vmem:[%s0 + $0x40] sm:$0xff]
  %v53 = vld [vmem:[%s0 + $0x48] sm:$0xff]
  %v54 = vld [vmem:[%s0 + $0x50] sm:$0xff]
  %v55 = vld [vmem:[%s0 + $0x58] sm:$0xff]
  %v56 = vld [vmem:[%s0 + $0x60] sm:$0xff]
  %v57 = vld [vmem:[%s1] sm:$0xff]
  %v58 = vld [vmem:[%s1 + $0x8] sm:$0xff]
  %v59 = vld [vmem:[%s1 + $0x10] sm:$0xff]
  %v60 = vld [vmem:[%s1 + $0x18] sm:$0xff]
  %v61 = vld [vmem:[%s1 + $0x20] sm:$0xff]
  %v62 = vld [vmem:[%s1 + $0x28] sm:$0xff]
  %vm63 = vcmask 195584
  %v65 = vsel %vm63, %v44, 0
  %v68 = vsel %vm63, %v45, 0
  %v71 = vsel %vm63, %v46, 0
  %v74 = vsel %vm63, %v47, 0
  %v77 = vsel %vm63, %v48, 0
  %v80 = vsel %vm63, %v49, 0
  %v83 = vsel %vm63, %v50, 0
  %v86 = vsel %vm63, %v51, 0
  %v89 = vsel %vm63, %v52, 0
  %v92 = vsel %vm63, %v53, 0
  %v95 = vsel %vm63, %v54, 0
  %v98 = vsel %vm63, %v55, 0
  %v101 = vsel %vm63, %v56, 0
  %103 = vmatprep.subr.mxu0 0.0
  %104 = vmatpush1.msra.mxu0 0.0
  %105 = vmatprep.subr.mxu0 0.0
  %106 = vmatpush1.msra.mxu0 0.0
  %107 = vmatprep.subr.mxu0 0.0
  %108 = vmatpush1.msra.mxu0 0.0
  %109 = vmatprep.subr.mxu0 0.0
  %110 = vmatpush1.msra.mxu0 0.0
  %111 = vmatprep.subr.mxu0 0.0
  %112 = vmatpush1.msra.mxu0 0.0
  %113 = vmatprep.subr.mxu0 0.0
  %114 = vmatpush1.msra.mxu0 0.0
  %115 = vmatprep.subr.mxu0 0.0
  %116 = vmatpush1.msra.mxu0 0.0
  %117 = vmatprep.subr.mxu0 0.0
  %118 = vmatpush1.msra.mxu0 0.0
  %119 = vmatprep.subr.mxu0 0.0
  %120 = vmatpush1.msra.mxu0 0.0
  %121 = vmatprep.subr.mxu0 0.0
  %122 = vmatpush1.msra.mxu0 0.0
  %123 = vmatprep.subr.mxu0 0.0
  %124 = vmatpush1.msra.mxu0 0.0
  %125 = vmatprep.subr.mxu0 0.0
  %126 = vmatpush1.msra.mxu0 0.0
  %127 = vmatprep.subr.mxu0 0.0
  %128 = vmatpush1.msra.mxu0 0.0
  %129 = vmatprep.subr.mxu0 %v62
  %130 = vmatpush1.msra.mxu0 %v61
  %131 = vmatprep.subr.mxu0 %v60
  %132 = vmatpush1.msra.mxu0 %v59
  %133 = vmatprep.subr.mxu0 %v58
  %134 = vmatpush1.msra.mxu0 %v57
  %135 = vmatprep.subr.mxu0 0.0
  %136 = vmatpush2.msra.mxu0 0.0
  %137 = vmatprep.subr.mxu0 0.0
  %138 = vmatpush2.msra.mxu0 0.0
  %139 = vmatprep.subr.mxu0 0.0
  %140 = vmatpush2.msra.mxu0 0.0
  %141 = vmatprep.subr.mxu0 0.0
  %142 = vmatpush2.msra.mxu0 0.0
  %143 = vmatprep.subr.mxu0 0.0
  %144 = vmatpush2.msra.mxu0 0.0
  %145 = vmatprep.subr.mxu0 0.0
  %146 = vmatpush2.msra.mxu0 0.0
  %147 = vmatprep.subr.mxu0 0.0
  %148 = vmatpush2.msra.mxu0 0.0
  %149 = vmatprep.subr.mxu0 0.0
  %150 = vmatpush2.msra.mxu0 0.0
  %151 = vmatprep.subr.mxu0 0.0
  %152 = vmatpush2.msra.mxu0 0.0
  %153 = vmatprep.subr.mxu0 0.0
  %154 = vmatpush2.msra.mxu0 0.0
  %155 = vmatprep.subr.mxu0 0.0
  %156 = vmatpush2.msra.mxu0 0.0
  %157 = vmatprep.subr.mxu0 0.0
  %158 = vmatpush2.msra.mxu0 0.0
  %159 = vmatprep.subr.mxu0 0.0
  %160 = vmatpush2.msra.mxu0 0.0
  %161 = vmatprep.subr.mxu0 0.0
  %162 = vmatpush2.msra.mxu0 0.0
  %163 = vmatprep.subr.mxu0 0.0
  %164 = vmatpush2.msra.mxu0 0.0
  %165 = vmatprep.subr.mxu0 0.0
  %166 = vmatpush2.msra.mxu0 0.0
  %167 = vmatprep.mubr.f32.mxu0 0.0
  %168 = vmatmul.mubr.f32.gmra.mxu0 %v65
  %v169 = vpop.f32.mrf.mxu0
  %v170 = vadd.f32 0.0, %v169
  %v171 = vpop.f32.mrf.mxu0
  %v172 = vadd.f32 0.0, %v171
  %173 = vmatprep.mubr.f32.mxu0 0.0
  %174 = vmatmul.mubr.f32.gmra.mxu0 %v68
  %v175 = vpop.f32.mrf.mxu0
  %v176 = vadd.f32 0.0, %v175
  %v177 = vpop.f32.mrf.mxu0
  %v178 = vadd.f32 0.0, %v177
  %179 = vmatprep.mubr.f32.mxu0 0.0
  %180 = vmatmul.mubr.f32.gmra.mxu0 %v71
  %v181 = vpop.f32.mrf.mxu0
  %v182 = vadd.f32 0.0, %v181
  %v183 = vpop.f32.mrf.mxu0
  %v184 = vadd.f32 0.0, %v183
  %185 = vmatprep.mubr.f32.mxu0 0.0
  %186 = vmatmul.mubr.f32.gmra.mxu0 %v74
  %v187 = vpop.f32.mrf.mxu0
  %v188 = vadd.f32 0.0, %v187
  %v189 = vpop.f32.mrf.mxu0
  %v190 = vadd.f32 0.0, %v189
  %191 = vmatprep.mubr.f32.mxu0 0.0
  %192 = vmatmul.mubr.f32.gmra.mxu0 %v77
  %v193 = vpop.f32.mrf.mxu0
  %v194 = vadd.f32 0.0, %v193
  %v195 = vpop.f32.mrf.mxu0
  %v196 = vadd.f32 0.0, %v195
  %197 = vmatprep.mubr.f32.mxu0 0.0
  %198 = vmatmul.mubr.f32.gmra.mxu0 %v80
  %v199 = vpop.f32.mrf.mxu0
  %v200 = vadd.f32 0.0, %v199
  %v201 = vpop.f32.mrf.mxu0
  %v202 = vadd.f32 0.0, %v201
  %203 = vmatprep.mubr.f32.mxu0 0.0
  %204 = vmatmul.mubr.f32.gmra.mxu0 %v83
  %v205 = vpop.f32.mrf.mxu0
  %v206 = vadd.f32 0.0, %v205
  %v207 = vpop.f32.mrf.mxu0
  %v208 = vadd.f32 0.0, %v207
  %209 = vmatprep.mubr.f32.mxu0 0.0
  %210 = vmatmul.mubr.f32.gmra.mxu0 %v86
  %v211 = vpop.f32.mrf.mxu0
  %v212 = vadd.f32 0.0, %v211
  %v213 = vpop.f32.mrf.mxu0
  %v214 = vadd.f32 0.0, %v213
  %215 = vmatprep.mubr.f32.mxu0 0.0
  %216 = vmatmul.mubr.f32.gmra.mxu0 %v89
  %v217 = vpop.f32.mrf.mxu0
  %v218 = vadd.f32 0.0, %v217
  %v219 = vpop.f32.mrf.mxu0
  %v220 = vadd.f32 0.0, %v219
  %221 = vmatprep.mubr.f32.mxu0 0.0
  %222 = vmatmul.mubr.f32.gmra.mxu0 %v92
  %v223 = vpop.f32.mrf.mxu0
  %v224 = vadd.f32 0.0, %v223
  %v225 = vpop.f32.mrf.mxu0
  %v226 = vadd.f32 0.0, %v225
  %227 = vmatprep.mubr.f32.mxu0 0.0
  %228 = vmatmul.mubr.f32.gmra.mxu0 %v95
  %v229 = vpop.f32.mrf.mxu0
  %v230 = vadd.f32 0.0, %v229
  %v231 = vpop.f32.mrf.mxu0
  %v232 = vadd.f32 0.0, %v231
  %233 = vmatprep.mubr.f32.mxu0 0.0
  %234 = vmatmul.mubr.f32.gmra.mxu0 %v98
  %v235 = vpop.f32.mrf.mxu0
  %v236 = vadd.f32 0.0, %v235
  %v237 = vpop.f32.mrf.mxu0
  %v238 = vadd.f32 0.0, %v237
  %239 = vmatprep.mubr.f32.mxu0 0.0
  %240 = vmatmul.mubr.f32.gmra.mxu0 %v101
  %v241 = vpop.f32.mrf.mxu0
  %v242 = vadd.f32 0.0, %v241
  %v243 = vpop.f32.mrf.mxu0
  %v244 = vadd.f32 0.0, %v243
  %245 = vdwg.mxu0
  %v246 = vld [vmem:[%s2] sm:$0x3]
  %v248 = vlaneseq
  %v249 = vshrl.u32 %v248, 7
  %v250 = vsub.s32 0, %v249
  %v251 = vrot.slane %v246, %v250
  %v252 = vlaneseq
  %v253 = vshrl.u32 %v252, 7
  %v254 = vsub.s32 1, %v253
  %v255 = vrot.slane %v246, %v254
  %v258 = vmul.f32 %v170, %v251
  %v259 = vmul.f32 %v172, %v255
  %v260 = vmul.f32 %v176, %v251
  %v261 = vmul.f32 %v178, %v255
  %v262 = vmul.f32 %v182, %v251
  %v263 = vmul.f32 %v184, %v255
  %v264 = vmul.f32 %v188, %v251
  %v265 = vmul.f32 %v190, %v255
  %v266 = vmul.f32 %v194, %v251
  %v267 = vmul.f32 %v196, %v255
  %v268 = vmul.f32 %v200, %v251
  %v269 = vmul.f32 %v202, %v255
  %v270 = vmul.f32 %v206, %v251
  %v271 = vmul.f32 %v208, %v255
  %v272 = vmul.f32 %v212, %v251
  %v273 = vmul.f32 %v214, %v255
  %v274 = vmul.f32 %v218, %v251
  %v275 = vmul.f32 %v220, %v255
  %v276 = vmul.f32 %v224, %v251
  %v277 = vmul.f32 %v226, %v255
  %v278 = vmul.f32 %v230, %v251
  %v279 = vmul.f32 %v232, %v255
  %v280 = vmul.f32 %v236, %v251
  %v281 = vmul.f32 %v238, %v255
  %v282 = vmul.f32 %v242, %v251
  %v283 = vmul.f32 %v244, %v255
  %v284 = vld [vmem:[%s3] sm:$0x3]
  %v286 = vlaneseq
  %v287 = vshrl.u32 %v286, 7
  %v288 = vsub.s32 0, %v287
  %v289 = vrot.slane %v284, %v288
  %v290 = vlaneseq
  %v291 = vshrl.u32 %v290, 7
  %v292 = vsub.s32 1, %v291
  %v293 = vrot.slane %v284, %v292
  %v296 = vadd.f32 %v258, %v289
  %v297 = vadd.f32 %v259, %v293
  %v298 = vadd.f32 %v260, %v289
  %v299 = vadd.f32 %v261, %v293
  %v300 = vadd.f32 %v262, %v289
  %v301 = vadd.f32 %v263, %v293
  %v302 = vadd.f32 %v264, %v289
  %v303 = vadd.f32 %v265, %v293
  %v304 = vadd.f32 %v266, %v289
  %v305 = vadd.f32 %v267, %v293
  %v306 = vadd.f32 %v268, %v289
  %v307 = vadd.f32 %v269, %v293
  %v308 = vadd.f32 %v270, %v289
  %v309 = vadd.f32 %v271, %v293
  %v310 = vadd.f32 %v272, %v289
  %v311 = vadd.f32 %v273, %v293
  %v312 = vadd.f32 %v274, %v289
  %v313 = vadd.f32 %v275, %v293
  %v314 = vadd.f32 %v276, %v289
  %v315 = vadd.f32 %v277, %v293
  %v316 = vadd.f32 %v278, %v289
  %v317 = vadd.f32 %v279, %v293
  %v318 = vadd.f32 %v280, %v289
  %v319 = vadd.f32 %v281, %v293
  %v320 = vadd.f32 %v282, %v289
  %v321 = vadd.f32 %v283, %v293
  %v322 = vmax.f32 %v296, 0.0
  %v323 = vmax.f32 %v297, 0.0
  %v324 = vmax.f32 %v298, 0.0
  %v325 = vmax.f32 %v299, 0.0
  %v326 = vmax.f32 %v300, 0.0
  %v327 = vmax.f32 %v301, 0.0
  %v328 = vmax.f32 %v302, 0.0
  %v329 = vmax.f32 %v303, 0.0
  %v330 = vmax.f32 %v304, 0.0
  %v331 = vmax.f32 %v305, 0.0
  %v332 = vmax.f32 %v306, 0.0
  %v333 = vmax.f32 %v307, 0.0
  %v334 = vmax.f32 %v308, 0.0
  %v335 = vmax.f32 %v309, 0.0
  %v336 = vmax.f32 %v310, 0.0
  %v337 = vmax.f32 %v311, 0.0
  %v338 = vmax.f32 %v312, 0.0
  %v339 = vmax.f32 %v313, 0.0
  %v340 = vmax.f32 %v314, 0.0
  %v341 = vmax.f32 %v315, 0.0
  %v342 = vmax.f32 %v316, 0.0
  %v343 = vmax.f32 %v317, 0.0
  %v344 = vmax.f32 %v318, 0.0
  %v345 = vmax.f32 %v319, 0.0
  %v346 = vmax.f32 %v320, 0.0
  %v347 = vmax.f32 %v321, 0.0
  %v348 = vld [vmem:[%s4] sm:$0xff]
  %v349 = vld [vmem:[%s4 + $0x8] sm:$0xff]
  %v350 = vld [vmem:[%s4 + $0x10] sm:$0xff]
  %v351 = vld [vmem:[%s4 + $0x18] sm:$0xff]
  %v352 = vld [vmem:[%s4 + $0x20] sm:$0xff]
  %v353 = vld [vmem:[%s4 + $0x28] sm:$0xff]
  %v354 = vld [vmem:[%s4 + $0x30] sm:$0xff]
  %v355 = vld [vmem:[%s4 + $0x38] sm:$0xff]
  %v356 = vld [vmem:[%s4 + $0x40] sm:$0xff]
  %v357 = vld [vmem:[%s4 + $0x48] sm:$0xff]
  %v358 = vld [vmem:[%s4 + $0x50] sm:$0xff]
  %v359 = vld [vmem:[%s4 + $0x58] sm:$0xff]
  %v360 = vld [vmem:[%s4 + $0x60] sm:$0xff]
  %v361 = vld [vmem:[%s4 + $0x68] sm:$0xff]
  %v362 = vld [vmem:[%s4 + $0x70] sm:$0xff]
  %v363 = vld [vmem:[%s4 + $0x78] sm:$0xff]
  %v364 = vld [vmem:[%s4 + $0x80] sm:$0xff]
  %v365 = vld [vmem:[%s4 + $0x88] sm:$0xff]
  %v366 = vld [vmem:[%s4 + $0x90] sm:$0xff]
  %v367 = vld [vmem:[%s4 + $0x98] sm:$0xff]
  %v368 = vld [vmem:[%s4 + $0xa0] sm:$0xff]
  %v369 = vld [vmem:[%s4 + $0xa8] sm:$0xff]
  %v370 = vld [vmem:[%s4 + $0xb0] sm:$0xff]
  %v371 = vld [vmem:[%s4 + $0xb8] sm:$0xff]
  %v372 = vld [vmem:[%s4 + $0xc0] sm:$0xff]
  %v373 = vld [vmem:[%s4 + $0xc8] sm:$0xff]
  %v374 = vld [vmem:[%s4 + $0xd0] sm:$0xff]
  %v375 = vld [vmem:[%s4 + $0xd8] sm:$0xff]
  %v376 = vld [vmem:[%s4 + $0xe0] sm:$0xff]
  %v377 = vld [vmem:[%s4 + $0xe8] sm:$0xff]
  %v378 = vld [vmem:[%s4 + $0xf0] sm:$0xff]
  %v379 = vld [vmem:[%s4 + $0xf8] sm:$0xff]
  %380 = vmatprep.subr.mxu0 0.0
  %381 = vmatpush1.msra.mxu0 %v363
  %382 = vmatprep.subr.mxu0 0.0
  %383 = vmatpush1.msra.mxu0 %v362
  %384 = vmatprep.subr.mxu0 0.0
  %385 = vmatpush1.msra.mxu0 %v361
  %386 = vmatprep.subr.mxu0 0.0
  %387 = vmatpush1.msra.mxu0 %v360
  %388 = vmatprep.subr.mxu0 0.0
  %389 = vmatpush1.msra.mxu0 %v359
  %390 = vmatprep.subr.mxu0 0.0
  %391 = vmatpush1.msra.mxu0 %v358
  %392 = vmatprep.subr.mxu0 0.0
  %393 = vmatpush1.msra.mxu0 %v357
  %394 = vmatprep.subr.mxu0 0.0
  %395 = vmatpush1.msra.mxu0 %v356
  %396 = vmatprep.subr.mxu0 0.0
  %397 = vmatpush1.msra.mxu0 %v355
  %398 = vmatprep.subr.mxu0 0.0
  %399 = vmatpush1.msra.mxu0 %v354
  %400 = vmatprep.subr.mxu0 0.0
  %401 = vmatpush1.msra.mxu0 %v353
  %402 = vmatprep.subr.mxu0 0.0
  %403 = vmatpush1.msra.mxu0 %v352
  %404 = vmatprep.subr.mxu0 0.0
  %405 = vmatpush1.msra.mxu0 %v351
  %406 = vmatprep.subr.mxu0 0.0
  %407 = vmatpush1.msra.mxu0 %v350
  %408 = vmatprep.subr.mxu0 0.0
  %409 = vmatpush1.msra.mxu0 %v349
  %410 = vmatprep.subr.mxu0 0.0
  %411 = vmatpush1.msra.mxu0 %v348
  %412 = vmatprep.subr.mxu0 0.0
  %413 = vmatpush2.msra.mxu0 %v379
  %414 = vmatprep.subr.mxu0 0.0
  %415 = vmatpush2.msra.mxu0 %v378
  %416 = vmatprep.subr.mxu0 0.0
  %417 = vmatpush2.msra.mxu0 %v377
  %418 = vmatprep.subr.mxu0 0.0
  %419 = vmatpush2.msra.mxu0 %v376
  %420 = vmatprep.subr.mxu0 0.0
  %421 = vmatpush2.msra.mxu0 %v375
  %422 = vmatprep.subr.mxu0 0.0
  %423 = vmatpush2.msra.mxu0 %v374
  %424 = vmatprep.subr.mxu0 0.0
  %425 = vmatpush2.msra.mxu0 %v373
  %426 = vmatprep.subr.mxu0 0.0
  %427 = vmatpush2.msra.mxu0 %v372
  %428 = vmatprep.subr.mxu0 0.0
  %429 = vmatpush2.msra.mxu0 %v371
  %430 = vmatprep.subr.mxu0 0.0
  %431 = vmatpush2.msra.mxu0 %v370
  %432 = vmatprep.subr.mxu0 0.0
  %433 = vmatpush2.msra.mxu0 %v369
  %434 = vmatprep.subr.mxu0 0.0
  %435 = vmatpush2.msra.mxu0 %v368
  %436 = vmatprep.subr.mxu0 0.0
  %437 = vmatpush2.msra.mxu0 %v367
  %438 = vmatprep.subr.mxu0 0.0
  %439 = vmatpush2.msra.mxu0 %v366
  %440 = vmatprep.subr.mxu0 0.0
  %441 = vmatpush2.msra.mxu0 %v365
  %442 = vmatprep.subr.mxu0 0.0
  %443 = vmatpush2.msra.mxu0 %v364
  %444 = vmatprep.mubr.f32.mxu0 %v323
  %445 = vmatmul.mubr.f32.gmra.mxu0 %v322
  %v446 = vpop.f32.mrf.mxu0
  %v447 = vadd.f32 0.0, %v446
  %v448 = vpop.f32.mrf.mxu0
  %449 = vmatprep.mubr.f32.mxu0 %v325
  %450 = vmatmul.mubr.f32.gmra.mxu0 %v324
  %v451 = vpop.f32.mrf.mxu0
  %v452 = vadd.f32 0.0, %v451
  %v453 = vpop.f32.mrf.mxu0
  %454 = vmatprep.mubr.f32.mxu0 %v327
  %455 = vmatmul.mubr.f32.gmra.mxu0 %v326
  %v456 = vpop.f32.mrf.mxu0
  %v457 = vadd.f32 0.0, %v456
  %v458 = vpop.f32.mrf.mxu0
  %459 = vmatprep.mubr.f32.mxu0 %v329
  %460 = vmatmul.mubr.f32.gmra.mxu0 %v328
  %v461 = vpop.f32.mrf.mxu0
  %v462 = vadd.f32 0.0, %v461
  %v463 = vpop.f32.mrf.mxu0
  %464 = vmatprep.mubr.f32.mxu0 %v331
  %465 = vmatmul.mubr.f32.gmra.mxu0 %v330
  %v466 = vpop.f32.mrf.mxu0
  %v467 = vadd.f32 0.0, %v466
  %v468 = vpop.f32.mrf.mxu0
  %469 = vmatprep.mubr.f32.mxu0 %v333
  %470 = vmatmul.mubr.f32.gmra.mxu0 %v332
  %v471 = vpop.f32.mrf.mxu0
  %v472 = vadd.f32 0.0, %v471
  %v473 = vpop.f32.mrf.mxu0
  %474 = vmatprep.mubr.f32.mxu0 %v335
  %475 = vmatmul.mubr.f32.gmra.mxu0 %v334
  %v476 = vpop.f32.mrf.mxu0
  %v477 = vadd.f32 0.0, %v476
  %v478 = vpop.f32.mrf.mxu0
  %479 = vmatprep.mubr.f32.mxu0 %v337
  %480 = vmatmul.mubr.f32.gmra.mxu0 %v336
  %v481 = vpop.f32.mrf.mxu0
  %v482 = vadd.f32 0.0, %v481
  %v483 = vpop.f32.mrf.mxu0
  %484 = vmatprep.mubr.f32.mxu0 %v339
  %485 = vmatmul.mubr.f32.gmra.mxu0 %v338
  %v486 = vpop.f32.mrf.mxu0
  %v487 = vadd.f32 0.0, %v486
  %v488 = vpop.f32.mrf.mxu0
  %489 = vmatprep.mubr.f32.mxu0 %v341
  %490 = vmatmul.mubr.f32.gmra.mxu0 %v340
  %v491 = vpop.f32.mrf.mxu0
  %v492 = vadd.f32 0.0, %v491
  %v493 = vpop.f32.mrf.mxu0
  %494 = vmatprep.mubr.f32.mxu0 %v343
  %495 = vmatmul.mubr.f32.gmra.mxu0 %v342
  %v496 = vpop.f32.mrf.mxu0
  %v497 = vadd.f32 0.0, %v496
  %v498 = vpop.f32.mrf.mxu0
  %499 = vmatprep.mubr.f32.mxu0 %v345
  %500 = vmatmul.mubr.f32.gmra.mxu0 %v344
  %v501 = vpop.f32.mrf.mxu0
  %v502 = vadd.f32 0.0, %v501
  %v503 = vpop.f32.mrf.mxu0
  %504 = vmatprep.mubr.f32.mxu0 %v347
  %505 = vmatmul.mubr.f32.gmra.mxu0 %v346
  %v506 = vpop.f32.mrf.mxu0
  %v507 = vadd.f32 0.0, %v506
  %v508 = vpop.f32.mrf.mxu0
  %509 = vdwg.mxu0
  %v523 = vcombine.high %v447, %v447
  %v525 = vunpack.c.l.s4 1966171168
  %v526 = vunpack.c.0.s8 %v525
  %v527 = vlaneseq
  %v528 = vshrl.u32 %v527, 7
  %v529 = vsub.s32 %v526, %v528
  %v530 = vrot.slane %v447, %v529
  %v532 = vunpack.c.l.s4 1966171168
  %v533 = vunpack.c.0.s8 %v532
  %v534 = vlaneseq
  %v535 = vshrl.u32 %v534, 7
  %v536 = vsub.s32 %v533, %v535
  %v537 = vrot.slane %v523, %v536
  %v538 = vcombine.high %v530, %v530
  %v539 = vcombine.high %v537, %v537
  %v541 = vunpack.c.l.s4 1966171168
  %v542 = vunpack.c.0.s8 %v541
  %v543 = vlaneseq
  %v544 = vshrl.u32 %v543, 7
  %v545 = vsub.s32 %v542, %v544
  %v546 = vrot.slane %v530, %v545
  %v548 = vunpack.c.l.s4 1966171168
  %v549 = vunpack.c.0.s8 %v548
  %v550 = vlaneseq
  %v551 = vshrl.u32 %v550, 7
  %v552 = vsub.s32 %v549, %v551
  %v553 = vrot.slane %v537, %v552
  %v555 = vunpack.c.l.s4 1966171168
  %v556 = vunpack.c.0.s8 %v555
  %v557 = vlaneseq
  %v558 = vshrl.u32 %v557, 7
  %v559 = vsub.s32 %v556, %v558
  %v560 = vrot.slane %v538, %v559
  %v562 = vunpack.c.l.s4 1966171168
  %v563 = vunpack.c.0.s8 %v562
  %v564 = vlaneseq
  %v565 = vshrl.u32 %v564, 7
  %v566 = vsub.s32 %v563, %v565
  %v567 = vrot.slane %v539, %v566
  %v568 = vcombine.high %v546, %v546
  %v569 = vcombine.high %v553, %v553
  %v570 = vcombine.high %v560, %v560
  %v571 = vcombine.high %v567, %v567
  %v572 = vcombine.high %v452, %v452
  %v574 = vunpack.c.l.s4 1966171168
  %v575 = vunpack.c.0.s8 %v574
  %v576 = vlaneseq
  %v577 = vshrl.u32 %v576, 7
  %v578 = vsub.s32 %v575, %v577
  %v579 = vrot.slane %v452, %v578
  %v581 = vunpack.c.l.s4 1966171168
  %v582 = vunpack.c.0.s8 %v581
  %v583 = vlaneseq
  %v584 = vshrl.u32 %v583, 7
  %v585 = vsub.s32 %v582, %v584
  %v586 = vrot.slane %v572, %v585
  %v587 = vcombine.high %v579, %v579
  %v588 = vcombine.high %v586, %v586
  %v590 = vunpack.c.l.s4 1966171168
  %v591 = vunpack.c.0.s8 %v590
  %v592 = vlaneseq
  %v593 = vshrl.u32 %v592, 7
  %v594 = vsub.s32 %v591, %v593
  %v595 = vrot.slane %v579, %v594
  %v597 = vunpack.c.l.s4 1966171168
  %v598 = vunpack.c.0.s8 %v597
  %v599 = vlaneseq
  %v600 = vshrl.u32 %v599, 7
  %v601 = vsub.s32 %v598, %v600
  %v602 = vrot.slane %v586, %v601
  %v604 = vunpack.c.l.s4 1966171168
  %v605 = vunpack.c.0.s8 %v604
  %v606 = vlaneseq
  %v607 = vshrl.u32 %v606, 7
  %v608 = vsub.s32 %v605, %v607
  %v609 = vrot.slane %v587, %v608
  %v611 = vunpack.c.l.s4 1966171168
  %v612 = vunpack.c.0.s8 %v611
  %v613 = vlaneseq
  %v614 = vshrl.u32 %v613, 7
  %v615 = vsub.s32 %v612, %v614
  %v616 = vrot.slane %v588, %v615
  %v617 = vcombine.high %v595, %v595
  %v618 = vcombine.high %v602, %v602
  %v619 = vcombine.high %v609, %v609
  %v620 = vcombine.high %v616, %v616
  %v621 = vcombine.high %v457, %v457
  %v623 = vunpack.c.l.s4 1966171168
  %v624 = vunpack.c.0.s8 %v623
  %v625 = vlaneseq
  %v626 = vshrl.u32 %v625, 7
  %v627 = vsub.s32 %v624, %v626
  %v628 = vrot.slane %v457, %v627
  %v630 = vunpack.c.l.s4 1966171168
  %v631 = vunpack.c.0.s8 %v630
  %v632 = vlaneseq
  %v633 = vshrl.u32 %v632, 7
  %v634 = vsub.s32 %v631, %v633
  %v635 = vrot.slane %v621, %v634
  %v636 = vcombine.high %v628, %v628
  %v637 = vcombine.high %v635, %v635
  %v639 = vunpack.c.l.s4 1966171168
  %v640 = vunpack.c.0.s8 %v639
  %v641 = vlaneseq
  %v642 = vshrl.u32 %v641, 7
  %v643 = vsub.s32 %v640, %v642
  %v644 = vrot.slane %v628, %v643
  %v646 = vunpack.c.l.s4 1966171168
  %v647 = vunpack.c.0.s8 %v646
  %v648 = vlaneseq
  %v649 = vshrl.u32 %v648, 7
  %v650 = vsub.s32 %v647, %v649
  %v651 = vrot.slane %v635, %v650
  %v653 = vunpack.c.l.s4 1966171168
  %v654 = vunpack.c.0.s8 %v653
  %v655 = vlaneseq
  %v656 = vshrl.u32 %v655, 7
  %v657 = vsub.s32 %v654, %v656
  %v658 = vrot.slane %v636, %v657
  %v660 = vunpack.c.l.s4 1966171168
  %v661 = vunpack.c.0.s8 %v660
  %v662 = vlaneseq
  %v663 = vshrl.u32 %v662, 7
  %v664 = vsub.s32 %v661, %v663
  %v665 = vrot.slane %v637, %v664
  %v666 = vcombine.high %v644, %v644
  %v667 = vcombine.high %v651, %v651
  %v668 = vcombine.high %v658, %v658
  %v669 = vcombine.high %v665, %v665
  %v670 = vcombine.high %v462, %v462
  %v672 = vunpack.c.l.s4 1966171168
  %v673 = vunpack.c.0.s8 %v672
  %v674 = vlaneseq
  %v675 = vshrl.u32 %v674, 7
  %v676 = vsub.s32 %v673, %v675
  %v677 = vrot.slane %v462, %v676
  %v679 = vunpack.c.l.s4 1966171168
  %v680 = vunpack.c.0.s8 %v679
  %v681 = vlaneseq
  %v682 = vshrl.u32 %v681, 7
  %v683 = vsub.s32 %v680, %v682
  %v684 = vrot.slane %v670, %v683
  %v685 = vcombine.high %v677, %v677
  %v686 = vcombine.high %v684, %v684
  %v688 = vunpack.c.l.s4 1966171168
  %v689 = vunpack.c.0.s8 %v688
  %v690 = vlaneseq
  %v691 = vshrl.u32 %v690, 7
  %v692 = vsub.s32 %v689, %v691
  %v693 = vrot.slane %v677, %v692
  %v695 = vunpack.c.l.s4 1966171168
  %v696 = vunpack.c.0.s8 %v695
  %v697 = vlaneseq
  %v698 = vshrl.u32 %v697, 7
  %v699 = vsub.s32 %v696, %v698
  %v700 = vrot.slane %v684, %v699
  %v702 = vunpack.c.l.s4 1966171168
  %v703 = vunpack.c.0.s8 %v702
  %v704 = vlaneseq
  %v705 = vshrl.u32 %v704, 7
  %v706 = vsub.s32 %v703, %v705
  %v707 = vrot.slane %v685, %v706
  %v709 = vunpack.c.l.s4 1966171168
  %v710 = vunpack.c.0.s8 %v709
  %v711 = vlaneseq
  %v712 = vshrl.u32 %v711, 7
  %v713 = vsub.s32 %v710, %v712
  %v714 = vrot.slane %v686, %v713
  %v715 = vcombine.high %v693, %v693
  %v716 = vcombine.high %v700, %v700
  %v717 = vcombine.high %v707, %v707
  %v718 = vcombine.high %v714, %v714
  %v719 = vcombine.high %v467, %v467
  %v721 = vunpack.c.l.s4 1966171168
  %v722 = vunpack.c.0.s8 %v721
  %v723 = vlaneseq
  %v724 = vshrl.u32 %v723, 7
  %v725 = vsub.s32 %v722, %v724
  %v726 = vrot.slane %v467, %v725
  %v728 = vunpack.c.l.s4 1966171168
  %v729 = vunpack.c.0.s8 %v728
  %v730 = vlaneseq
  %v731 = vshrl.u32 %v730, 7
  %v732 = vsub.s32 %v729, %v731
  %v733 = vrot.slane %v719, %v732
  %v734 = vcombine.high %v726, %v726
  %v735 = vcombine.high %v733, %v733
  %v737 = vunpack.c.l.s4 1966171168
  %v738 = vunpack.c.0.s8 %v737
  %v739 = vlaneseq
  %v740 = vshrl.u32 %v739, 7
  %v741 = vsub.s32 %v738, %v740
  %v742 = vrot.slane %v726, %v741
  %v744 = vunpack.c.l.s4 1966171168
  %v745 = vunpack.c.0.s8 %v744
  %v746 = vlaneseq
  %v747 = vshrl.u32 %v746, 7
  %v748 = vsub.s32 %v745, %v747
  %v749 = vrot.slane %v733, %v748
  %v751 = vunpack.c.l.s4 1966171168
  %v752 = vunpack.c.0.s8 %v751
  %v753 = vlaneseq
  %v754 = vshrl.u32 %v753, 7
  %v755 = vsub.s32 %v752, %v754
  %v756 = vrot.slane %v734, %v755
  %v758 = vunpack.c.l.s4 1966171168
  %v759 = vunpack.c.0.s8 %v758
  %v760 = vlaneseq
  %v761 = vshrl.u32 %v760, 7
  %v762 = vsub.s32 %v759, %v761
  %v763 = vrot.slane %v735, %v762
  %v764 = vcombine.high %v742, %v742
  %v765 = vcombine.high %v749, %v749
  %v766 = vcombine.high %v756, %v756
  %v767 = vcombine.high %v763, %v763
  %v768 = vcombine.high %v472, %v472
  %v770 = vunpack.c.l.s4 1966171168
  %v771 = vunpack.c.0.s8 %v770
  %v772 = vlaneseq
  %v773 = vshrl.u32 %v772, 7
  %v774 = vsub.s32 %v771, %v773
  %v775 = vrot.slane %v472, %v774
  %v777 = vunpack.c.l.s4 1966171168
  %v778 = vunpack.c.0.s8 %v777
  %v779 = vlaneseq
  %v780 = vshrl.u32 %v779, 7
  %v781 = vsub.s32 %v778, %v780
  %v782 = vrot.slane %v768, %v781
  %v783 = vcombine.high %v775, %v775
  %v784 = vcombine.high %v782, %v782
  %v786 = vunpack.c.l.s4 1966171168
  %v787 = vunpack.c.0.s8 %v786
  %v788 = vlaneseq
  %v789 = vshrl.u32 %v788, 7
  %v790 = vsub.s32 %v787, %v789
  %v791 = vrot.slane %v775, %v790
  %v793 = vunpack.c.l.s4 1966171168
  %v794 = vunpack.c.0.s8 %v793
  %v795 = vlaneseq
  %v796 = vshrl.u32 %v795, 7
  %v797 = vsub.s32 %v794, %v796
  %v798 = vrot.slane %v782, %v797
  %v800 = vunpack.c.l.s4 1966171168
  %v801 = vunpack.c.0.s8 %v800
  %v802 = vlaneseq
  %v803 = vshrl.u32 %v802, 7
  %v804 = vsub.s32 %v801, %v803
  %v805 = vrot.slane %v783, %v804
  %v807 = vunpack.c.l.s4 1966171168
  %v808 = vunpack.c.0.s8 %v807
  %v809 = vlaneseq
  %v810 = vshrl.u32 %v809, 7
  %v811 = vsub.s32 %v808, %v810
  %v812 = vrot.slane %v784, %v811
  %v813 = vcombine.high %v791, %v791
  %v814 = vcombine.high %v798, %v798
  %v815 = vcombine.high %v805, %v805
  %v816 = vcombine.high %v812, %v812
  %v817 = vcombine.high %v477, %v477
  %v819 = vunpack.c.l.s4 1966171168
  %v820 = vunpack.c.0.s8 %v819
  %v821 = vlaneseq
  %v822 = vshrl.u32 %v821, 7
  %v823 = vsub.s32 %v820, %v822
  %v824 = vrot.slane %v477, %v823
  %v826 = vunpack.c.l.s4 1966171168
  %v827 = vunpack.c.0.s8 %v826
  %v828 = vlaneseq
  %v829 = vshrl.u32 %v828, 7
  %v830 = vsub.s32 %v827, %v829
  %v831 = vrot.slane %v817, %v830
  %v832 = vcombine.high %v824, %v824
  %v833 = vcombine.high %v831, %v831
  %v835 = vunpack.c.l.s4 1966171168
  %v836 = vunpack.c.0.s8 %v835
  %v837 = vlaneseq
  %v838 = vshrl.u32 %v837, 7
  %v839 = vsub.s32 %v836, %v838
  %v840 = vrot.slane %v824, %v839
  %v842 = vunpack.c.l.s4 1966171168
  %v843 = vunpack.c.0.s8 %v842
  %v844 = vlaneseq
  %v845 = vshrl.u32 %v844, 7
  %v846 = vsub.s32 %v843, %v845
  %v847 = vrot.slane %v831, %v846
  %v849 = vunpack.c.l.s4 1966171168
  %v850 = vunpack.c.0.s8 %v849
  %v851 = vlaneseq
  %v852 = vshrl.u32 %v851, 7
  %v853 = vsub.s32 %v850, %v852
  %v854 = vrot.slane %v832, %v853
  %v856 = vunpack.c.l.s4 1966171168
  %v857 = vunpack.c.0.s8 %v856
  %v858 = vlaneseq
  %v859 = vshrl.u32 %v858, 7
  %v860 = vsub.s32 %v857, %v859
  %v861 = vrot.slane %v833, %v860
  %v862 = vcombine.high %v840, %v840
  %v863 = vcombine.high %v847, %v847
  %v864 = vcombine.high %v854, %v854
  %v865 = vcombine.high %v861, %v861
  %v866 = vcombine.high %v482, %v482
  %v868 = vunpack.c.l.s4 1966171168
  %v869 = vunpack.c.0.s8 %v868
  %v870 = vlaneseq
  %v871 = vshrl.u32 %v870, 7
  %v872 = vsub.s32 %v869, %v871
  %v873 = vrot.slane %v482, %v872
  %v875 = vunpack.c.l.s4 1966171168
  %v876 = vunpack.c.0.s8 %v875
  %v877 = vlaneseq
  %v878 = vshrl.u32 %v877, 7
  %v879 = vsub.s32 %v876, %v878
  %v880 = vrot.slane %v866, %v879
  %v881 = vcombine.high %v873, %v873
  %v882 = vcombine.high %v880, %v880
  %v884 = vunpack.c.l.s4 1966171168
  %v885 = vunpack.c.0.s8 %v884
  %v886 = vlaneseq
  %v887 = vshrl.u32 %v886, 7
  %v888 = vsub.s32 %v885, %v887
  %v889 = vrot.slane %v873, %v888
  %v891 = vunpack.c.l.s4 1966171168
  %v892 = vunpack.c.0.s8 %v891
  %v893 = vlaneseq
  %v894 = vshrl.u32 %v893, 7
  %v895 = vsub.s32 %v892, %v894
  %v896 = vrot.slane %v880, %v895
  %v898 = vunpack.c.l.s4 1966171168
  %v899 = vunpack.c.0.s8 %v898
  %v900 = vlaneseq
  %v901 = vshrl.u32 %v900, 7
  %v902 = vsub.s32 %v899, %v901
  %v903 = vrot.slane %v881, %v902
  %v905 = vunpack.c.l.s4 1966171168
  %v906 = vunpack.c.0.s8 %v905
  %v907 = vlaneseq
  %v908 = vshrl.u32 %v907, 7
  %v909 = vsub.s32 %v906, %v908
  %v910 = vrot.slane %v882, %v909
  %v911 = vcombine.high %v889, %v889
  %v912 = vcombine.high %v896, %v896
  %v913 = vcombine.high %v903, %v903
  %v914 = vcombine.high %v910, %v910
  %v915 = vcombine.high %v487, %v487
  %v917 = vunpack.c.l.s4 1966171168
  %v918 = vunpack.c.0.s8 %v917
  %v919 = vlaneseq
  %v920 = vshrl.u32 %v919, 7
  %v921 = vsub.s32 %v918, %v920
  %v922 = vrot.slane %v487, %v921
  %v924 = vunpack.c.l.s4 1966171168
  %v925 = vunpack.c.0.s8 %v924
  %v926 = vlaneseq
  %v927 = vshrl.u32 %v926, 7
  %v928 = vsub.s32 %v925, %v927
  %v929 = vrot.slane %v915, %v928
  %v930 = vcombine.high %v922, %v922
  %v931 = vcombine.high %v929, %v929
  %v933 = vunpack.c.l.s4 1966171168
  %v934 = vunpack.c.0.s8 %v933
  %v935 = vlaneseq
  %v936 = vshrl.u32 %v935, 7
  %v937 = vsub.s32 %v934, %v936
  %v938 = vrot.slane %v922, %v937
  %v940 = vunpack.c.l.s4 1966171168
  %v941 = vunpack.c.0.s8 %v940
  %v942 = vlaneseq
  %v943 = vshrl.u32 %v942, 7
  %v944 = vsub.s32 %v941, %v943
  %v945 = vrot.slane %v929, %v944
  %v947 = vunpack.c.l.s4 1966171168
  %v948 = vunpack.c.0.s8 %v947
  %v949 = vlaneseq
  %v950 = vshrl.u32 %v949, 7
  %v951 = vsub.s32 %v948, %v950
  %v952 = vrot.slane %v930, %v951
  %v954 = vunpack.c.l.s4 1966171168
  %v955 = vunpack.c.0.s8 %v954
  %v956 = vlaneseq
  %v957 = vshrl.u32 %v956, 7
  %v958 = vsub.s32 %v955, %v957
  %v959 = vrot.slane %v931, %v958
  %v960 = vcombine.high %v938, %v938
  %v961 = vcombine.high %v945, %v945
  %v962 = vcombine.high %v952, %v952
  %v963 = vcombine.high %v959, %v959
  %v964 = vcombine.high %v492, %v492
  %v966 = vunpack.c.l.s4 1966171168
  %v967 = vunpack.c.0.s8 %v966
  %v968 = vlaneseq
  %v969 = vshrl.u32 %v968, 7
  %v970 = vsub.s32 %v967, %v969
  %v971 = vrot.slane %v492, %v970
  %v973 = vunpack.c.l.s4 1966171168
  %v974 = vunpack.c.0.s8 %v973
  %v975 = vlaneseq
  %v976 = vshrl.u32 %v975, 7
  %v977 = vsub.s32 %v974, %v976
  %v978 = vrot.slane %v964, %v977
  %v979 = vcombine.high %v971, %v971
  %v980 = vcombine.high %v978, %v978
  %v982 = vunpack.c.l.s4 1966171168
  %v983 = vunpack.c.0.s8 %v982
  %v984 = vlaneseq
  %v985 = vshrl.u32 %v984, 7
  %v986 = vsub.s32 %v983, %v985
  %v987 = vrot.slane %v971, %v986
  %v989 = vunpack.c.l.s4 1966171168
  %v990 = vunpack.c.0.s8 %v989
  %v991 = vlaneseq
  %v992 = vshrl.u32 %v991, 7
  %v993 = vsub.s32 %v990, %v992
  %v994 = vrot.slane %v978, %v993
  %v996 = vunpack.c.l.s4 1966171168
  %v997 = vunpack.c.0.s8 %v996
  %v998 = vlaneseq
  %v999 = vshrl.u32 %v998, 7
  %v1000 = vsub.s32 %v997, %v999
  %v1001 = vrot.slane %v979, %v1000
  %v1003 = vunpack.c.l.s4 1966171168
  %v1004 = vunpack.c.0.s8 %v1003
  %v1005 = vlaneseq
  %v1006 = vshrl.u32 %v1005, 7
  %v1007 = vsub.s32 %v1004, %v1006
  %v1008 = vrot.slane %v980, %v1007
  %v1009 = vcombine.high %v987, %v987
  %v1010 = vcombine.high %v994, %v994
  %v1011 = vcombine.high %v1001, %v1001
  %v1012 = vcombine.high %v1008, %v1008
  %v1013 = vcombine.high %v497, %v497
  %v1015 = vunpack.c.l.s4 1966171168
  %v1016 = vunpack.c.0.s8 %v1015
  %v1017 = vlaneseq
  %v1018 = vshrl.u32 %v1017, 7
  %v1019 = vsub.s32 %v1016, %v1018
  %v1020 = vrot.slane %v497, %v1019
  %v1022 = vunpack.c.l.s4 1966171168
  %v1023 = vunpack.c.0.s8 %v1022
  %v1024 = vlaneseq
  %v1025 = vshrl.u32 %v1024, 7
  %v1026 = vsub.s32 %v1023, %v1025
  %v1027 = vrot.slane %v1013, %v1026
  %v1028 = vcombine.high %v1020, %v1020
  %v1029 = vcombine.high %v1027, %v1027
  %v1031 = vunpack.c.l.s4 1966171168
  %v1032 = vunpack.c.0.s8 %v1031
  %v1033 = vlaneseq
  %v1034 = vshrl.u32 %v1033, 7
  %v1035 = vsub.s32 %v1032, %v1034
  %v1036 = vrot.slane %v1020, %v1035
  %v1038 = vunpack.c.l.s4 1966171168
  %v1039 = vunpack.c.0.s8 %v1038
  %v1040 = vlaneseq
  %v1041 = vshrl.u32 %v1040, 7
  %v1042 = vsub.s32 %v1039, %v1041
  %v1043 = vrot.slane %v1027, %v1042
  %v1045 = vunpack.c.l.s4 1966171168
  %v1046 = vunpack.c.0.s8 %v1045
  %v1047 = vlaneseq
  %v1048 = vshrl.u32 %v1047, 7
  %v1049 = vsub.s32 %v1046, %v1048
  %v1050 = vrot.slane %v1028, %v1049
  %v1052 = vunpack.c.l.s4 1966171168
  %v1053 = vunpack.c.0.s8 %v1052
  %v1054 = vlaneseq
  %v1055 = vshrl.u32 %v1054, 7
  %v1056 = vsub.s32 %v1053, %v1055
  %v1057 = vrot.slane %v1029, %v1056
  %v1058 = vcombine.high %v1036, %v1036
  %v1059 = vcombine.high %v1043, %v1043
  %v1060 = vcombine.high %v1050, %v1050
  %v1061 = vcombine.high %v1057, %v1057
  %v1062 = vcombine.high %v502, %v502
  %v1064 = vunpack.c.l.s4 1966171168
  %v1065 = vunpack.c.0.s8 %v1064
  %v1066 = vlaneseq
  %v1067 = vshrl.u32 %v1066, 7
  %v1068 = vsub.s32 %v1065, %v1067
  %v1069 = vrot.slane %v502, %v1068
  %v1071 = vunpack.c.l.s4 1966171168
  %v1072 = vunpack.c.0.s8 %v1071
  %v1073 = vlaneseq
  %v1074 = vshrl.u32 %v1073, 7
  %v1075 = vsub.s32 %v1072, %v1074
  %v1076 = vrot.slane %v1062, %v1075
  %v1077 = vcombine.high %v1069, %v1069
  %v1078 = vcombine.high %v1076, %v1076
  %v1080 = vunpack.c.l.s4 1966171168
  %v1081 = vunpack.c.0.s8 %v1080
  %v1082 = vlaneseq
  %v1083 = vshrl.u32 %v1082, 7
  %v1084 = vsub.s32 %v1081, %v1083
  %v1085 = vrot.slane %v1069, %v1084
  %v1087 = vunpack.c.l.s4 1966171168
  %v1088 = vunpack.c.0.s8 %v1087
  %v1089 = vlaneseq
  %v1090 = vshrl.u32 %v1089, 7
  %v1091 = vsub.s32 %v1088, %v1090
  %v1092 = vrot.slane %v1076, %v1091
  %v1094 = vunpack.c.l.s4 1966171168
  %v1095 = vunpack.c.0.s8 %v1094
  %v1096 = vlaneseq
  %v1097 = vshrl.u32 %v1096, 7
  %v1098 = vsub.s32 %v1095, %v1097
  %v1099 = vrot.slane %v1077, %v1098
  %v1101 = vunpack.c.l.s4 1966171168
  %v1102 = vunpack.c.0.s8 %v1101
  %v1103 = vlaneseq
  %v1104 = vshrl.u32 %v1103, 7
  %v1105 = vsub.s32 %v1102, %v1104
  %v1106 = vrot.slane %v1078, %v1105
  %v1107 = vcombine.high %v1085, %v1085
  %v1108 = vcombine.high %v1092, %v1092
  %v1109 = vcombine.high %v1099, %v1099
  %v1110 = vcombine.high %v1106, %v1106
  %v1111 = vcombine.high %v507, %v507
  %v1113 = vunpack.c.l.s4 1966171168
  %v1114 = vunpack.c.0.s8 %v1113
  %v1115 = vlaneseq
  %v1116 = vshrl.u32 %v1115, 7
  %v1117 = vsub.s32 %v1114, %v1116
  %v1118 = vrot.slane %v507, %v1117
  %v1120 = vunpack.c.l.s4 1966171168
  %v1121 = vunpack.c.0.s8 %v1120
  %v1122 = vlaneseq
  %v1123 = vshrl.u32 %v1122, 7
  %v1124 = vsub.s32 %v1121, %v1123
  %v1125 = vrot.slane %v1111, %v1124
  %v1126 = vcombine.high %v1118, %v1118
  %v1127 = vcombine.high %v1125, %v1125
  %v1129 = vunpack.c.l.s4 1966171168
  %v1130 = vunpack.c.0.s8 %v1129
  %v1131 = vlaneseq
  %v1132 = vshrl.u32 %v1131, 7
  %v1133 = vsub.s32 %v1130, %v1132
  %v1134 = vrot.slane %v1118, %v1133
  %v1136 = vunpack.c.l.s4 1966171168
  %v1137 = vunpack.c.0.s8 %v1136
  %v1138 = vlaneseq
  %v1139 = vshrl.u32 %v1138, 7
  %v1140 = vsub.s32 %v1137, %v1139
  %v1141 = vrot.slane %v1125, %v1140
  %v1143 = vunpack.c.l.s4 1966171168
  %v1144 = vunpack.c.0.s8 %v1143
  %v1145 = vlaneseq
  %v1146 = vshrl.u32 %v1145, 7
  %v1147 = vsub.s32 %v1144, %v1146
  %v1148 = vrot.slane %v1126, %v1147
  %v1150 = vunpack.c.l.s4 1966171168
  %v1151 = vunpack.c.0.s8 %v1150
  %v1152 = vlaneseq
  %v1153 = vshrl.u32 %v1152, 7
  %v1154 = vsub.s32 %v1151, %v1153
  %v1155 = vrot.slane %v1127, %v1154
  %v1156 = vcombine.high %v1134, %v1134
  %v1157 = vcombine.high %v1141, %v1141
  %v1158 = vcombine.high %v1148, %v1148
  %v1159 = vcombine.high %v1155, %v1155
  %1248 = vrot.lane.b32.xlu0 %v560, 96
  %v1249 = vpop.permute.xlu0 %1248
  %1250 = vrot.lane.b32.xlu0 %v568, 96
  %v1251 = vpop.permute.xlu0 %1250
  %1252 = vrot.lane.b32.xlu0 %v570, 96
  %v1253 = vpop.permute.xlu0 %1252
  %1254 = vrot.lane.b32.xlu0 %v553, 96
  %v1255 = vpop.permute.xlu0 %1254
  %1256 = vrot.lane.b32.xlu0 %v567, 96
  %v1257 = vpop.permute.xlu0 %1256
  %1258 = vrot.lane.b32.xlu0 %v569, 96
  %v1259 = vpop.permute.xlu0 %1258
  %1260 = vrot.lane.b32.xlu0 %v571, 96
  %v1261 = vpop.permute.xlu0 %1260
  %1262 = vrot.lane.b32.xlu0 %v595, 96
  %v1263 = vpop.permute.xlu0 %1262
  %1264 = vrot.lane.b32.xlu0 %v609, 96
  %v1265 = vpop.permute.xlu0 %1264
  %1266 = vrot.lane.b32.xlu0 %v617, 96
  %v1267 = vpop.permute.xlu0 %1266
  %1268 = vrot.lane.b32.xlu0 %v619, 96
  %v1269 = vpop.permute.xlu0 %1268
  %1270 = vrot.lane.b32.xlu0 %v618, 96
  %v1271 = vpop.permute.xlu0 %1270
  %1272 = vrot.lane.b32.xlu0 %v620, 96
  %v1273 = vpop.permute.xlu0 %1272
  %1274 = vrot.lane.b32.xlu0 %v644, 96
  %v1275 = vpop.permute.xlu0 %1274
  %1276 = vrot.lane.b32.xlu0 %v658, 96
  %v1277 = vpop.permute.xlu0 %1276
  %1278 = vrot.lane.b32.xlu0 %v666, 96
  %v1279 = vpop.permute.xlu0 %1278
  %1280 = vrot.lane.b32.xlu0 %v668, 96
  %v1281 = vpop.permute.xlu0 %1280
  %1282 = vrot.lane.b32.xlu0 %v651, 96
  %v1283 = vpop.permute.xlu0 %1282
  %1284 = vrot.lane.b32.xlu0 %v665, 96
  %v1285 = vpop.permute.xlu0 %1284
  %1286 = vrot.lane.b32.xlu0 %v667, 96
  %v1287 = vpop.permute.xlu0 %1286
  %1288 = vrot.lane.b32.xlu0 %v669, 96
  %v1289 = vpop.permute.xlu0 %1288
  %1290 = vrot.lane.b32.xlu0 %v693, 96
  %v1291 = vpop.permute.xlu0 %1290
  %1292 = vrot.lane.b32.xlu0 %v717, 96
  %v1293 = vpop.permute.xlu0 %1292
  %1294 = vrot.lane.b32.xlu0 %v700, 96
  %v1295 = vpop.permute.xlu0 %1294
  %1296 = vrot.lane.b32.xlu0 %v714, 96
  %v1297 = vpop.permute.xlu0 %1296
  %1298 = vrot.lane.b32.xlu0 %v716, 96
  %v1299 = vpop.permute.xlu0 %1298
  %1300 = vrot.lane.b32.xlu0 %v718, 96
  %v1301 = vpop.permute.xlu0 %1300
  %1302 = vrot.lane.b32.xlu0 %v742, 96
  %v1303 = vpop.permute.xlu0 %1302
  %1304 = vrot.lane.b32.xlu0 %v756, 96
  %v1305 = vpop.permute.xlu0 %1304
  %1306 = vrot.lane.b32.xlu0 %v764, 96
  %v1307 = vpop.permute.xlu0 %1306
  %1308 = vrot.lane.b32.xlu0 %v766, 96
  %v1309 = vpop.permute.xlu0 %1308
  %1310 = vrot.lane.b32.xlu0 %v749, 96
  %v1311 = vpop.permute.xlu0 %1310
  %1312 = vrot.lane.b32.xlu0 %v763, 96
  %v1313 = vpop.permute.xlu0 %1312
  %1314 = vrot.lane.b32.xlu0 %v791, 96
  %v1315 = vpop.permute.xlu0 %1314
  %1316 = vrot.lane.b32.xlu0 %v805, 96
  %v1317 = vpop.permute.xlu0 %1316
  %1318 = vrot.lane.b32.xlu0 %v813, 96
  %v1319 = vpop.permute.xlu0 %1318
  %1320 = vrot.lane.b32.xlu0 %v815, 96
  %v1321 = vpop.permute.xlu0 %1320
  %1322 = vrot.lane.b32.xlu0 %v798, 96
  %v1323 = vpop.permute.xlu0 %1322
  %1324 = vrot.lane.b32.xlu0 %v812, 96
  %v1325 = vpop.permute.xlu0 %1324
  %1326 = vrot.lane.b32.xlu0 %v814, 96
  %v1327 = vpop.permute.xlu0 %1326
  %1328 = vrot.lane.b32.xlu0 %v816, 96
  %v1329 = vpop.permute.xlu0 %1328
  %1330 = vrot.lane.b32.xlu0 %v840, 96
  %v1331 = vpop.permute.xlu0 %1330
  %1332 = vrot.lane.b32.xlu0 %v854, 96
  %v1333 = vpop.permute.xlu0 %1332
  %1334 = vrot.lane.b32.xlu0 %v862, 96
  %v1335 = vpop.permute.xlu0 %1334
  %1336 = vrot.lane.b32.xlu0 %v861, 96
  %v1337 = vpop.permute.xlu0 %1336
  %1338 = vrot.lane.b32.xlu0 %v863, 96
  %v1339 = vpop.permute.xlu0 %1338
  %1340 = vrot.lane.b32.xlu0 %v865, 96
  %v1341 = vpop.permute.xlu0 %1340
  %1342 = vrot.lane.b32.xlu0 %v889, 96
  %v1343 = vpop.permute.xlu0 %1342
  %1344 = vrot.lane.b32.xlu0 %v903, 96
  %v1345 = vpop.permute.xlu0 %1344
  %1346 = vrot.lane.b32.xlu0 %v911, 96
  %v1347 = vpop.permute.xlu0 %1346
  %1348 = vrot.lane.b32.xlu0 %v913, 96
  %v1349 = vpop.permute.xlu0 %1348
  %1350 = vrot.lane.b32.xlu0 %v896, 96
  %v1351 = vpop.permute.xlu0 %1350
  %1352 = vrot.lane.b32.xlu0 %v910, 96
  %v1353 = vpop.permute.xlu0 %1352
  %1354 = vrot.lane.b32.xlu0 %v912, 96
  %v1355 = vpop.permute.xlu0 %1354
  %1356 = vrot.lane.b32.xlu0 %v914, 96
  %v1357 = vpop.permute.xlu0 %1356
  %1358 = vrot.lane.b32.xlu0 %v960, 96
  %v1359 = vpop.permute.xlu0 %1358
  %1360 = vrot.lane.b32.xlu0 %v962, 96
  %v1361 = vpop.permute.xlu0 %1360
  %1362 = vrot.lane.b32.xlu0 %v945, 96
  %v1363 = vpop.permute.xlu0 %1362
  %1364 = vrot.lane.b32.xlu0 %v959, 96
  %v1365 = vpop.permute.xlu0 %1364
  %1366 = vrot.lane.b32.xlu0 %v961, 96
  %v1367 = vpop.permute.xlu0 %1366
  %1368 = vrot.lane.b32.xlu0 %v963, 96
  %v1369 = vpop.permute.xlu0 %1368
  %1370 = vrot.lane.b32.xlu0 %v987, 96
  %v1371 = vpop.permute.xlu0 %1370
  %1372 = vrot.lane.b32.xlu0 %v1001, 96
  %v1373 = vpop.permute.xlu0 %1372
  %1374 = vrot.lane.b32.xlu0 %v1009, 96
  %v1375 = vpop.permute.xlu0 %1374
  %1376 = vrot.lane.b32.xlu0 %v1011, 96
  %v1377 = vpop.permute.xlu0 %1376
  %1378 = vrot.lane.b32.xlu0 %v994, 96
  %v1379 = vpop.permute.xlu0 %1378
  %1380 = vrot.lane.b32.xlu0 %v1012, 96
  %v1381 = vpop.permute.xlu0 %1380
  %1382 = vrot.lane.b32.xlu0 %v1036, 96
  %v1383 = vpop.permute.xlu0 %1382
  %1384 = vrot.lane.b32.xlu0 %v1050, 96
  %v1385 = vpop.permute.xlu0 %1384
  %1386 = vrot.lane.b32.xlu0 %v1058, 96
  %v1387 = vpop.permute.xlu0 %1386
  %1388 = vrot.lane.b32.xlu0 %v1060, 96
  %v1389 = vpop.permute.xlu0 %1388
  %1390 = vrot.lane.b32.xlu0 %v1043, 96
  %v1391 = vpop.permute.xlu0 %1390
  %1392 = vrot.lane.b32.xlu0 %v1057, 96
  %v1393 = vpop.permute.xlu0 %1392
  %1394 = vrot.lane.b32.xlu0 %v1059, 96
  %v1395 = vpop.permute.xlu0 %1394
  %1396 = vrot.lane.b32.xlu0 %v1061, 96
  %v1397 = vpop.permute.xlu0 %1396
  %1398 = vrot.lane.b32.xlu0 %v1085, 96
  %v1399 = vpop.permute.xlu0 %1398
  %1400 = vrot.lane.b32.xlu0 %v1099, 96
  %v1401 = vpop.permute.xlu0 %1400
  %1402 = vrot.lane.b32.xlu0 %v1092, 96
  %v1403 = vpop.permute.xlu0 %1402
  %1404 = vrot.lane.b32.xlu0 %v1106, 96
  %v1405 = vpop.permute.xlu0 %1404
  %1406 = vrot.lane.b32.xlu0 %v1108, 96
  %v1407 = vpop.permute.xlu0 %1406
  %1408 = vrot.lane.b32.xlu0 %v1110, 96
  %v1409 = vpop.permute.xlu0 %1408
  %1410 = vrot.lane.b32.xlu0 %v1134, 96
  %v1411 = vpop.permute.xlu0 %1410
  %1412 = vrot.lane.b32.xlu0 %v1148, 96
  %v1413 = vpop.permute.xlu0 %1412
  %1414 = vrot.lane.b32.xlu0 %v1156, 96
  %v1415 = vpop.permute.xlu0 %1414
  %1416 = vrot.lane.b32.xlu0 %v1158, 96
  %v1417 = vpop.permute.xlu0 %1416
  %1418 = vrot.lane.b32.xlu0 %v1141, 96
  %v1419 = vpop.permute.xlu0 %1418
  %1420 = vrot.lane.b32.xlu0 %v1155, 96
  %v1421 = vpop.permute.xlu0 %1420
  %1422 = vrot.lane.b32.xlu0 %v1157, 96
  %v1423 = vpop.permute.xlu0 %1422
  %v1512 = vadd.f32 %v546, %v1249
  %v1513 = vadd.f32 %v560, %v1251
  %v1514 = vadd.f32 %v568, %v1253
  %v1515 = vadd.f32 %v570, %v1255
  %v1516 = vadd.f32 %v553, %v1257
  %v1517 = vadd.f32 %v567, %v1259
  %v1518 = vadd.f32 %v569, %v1261
  %v1519 = vadd.f32 %v571, %v1263
  %v1520 = vadd.f32 %v595, %v1265
  %v1521 = vadd.f32 %v609, %v1267
  %v1522 = vadd.f32 %v617, %v1269
  %v1523 = vadd.f32 %v616, %v1271
  %v1524 = vadd.f32 %v618, %v1273
  %v1525 = vadd.f32 %v620, %v1275
  %v1526 = vadd.f32 %v644, %v1277
  %v1527 = vadd.f32 %v658, %v1279
  %v1528 = vadd.f32 %v666, %v1281
  %v1529 = vadd.f32 %v668, %v1283
  %v1530 = vadd.f32 %v651, %v1285
  %v1531 = vadd.f32 %v665, %v1287
  %v1532 = vadd.f32 %v667, %v1289
  %v1533 = vadd.f32 %v669, %v1291
  %v1534 = vadd.f32 %v715, %v1293
  %v1535 = vadd.f32 %v717, %v1295
  %v1536 = vadd.f32 %v700, %v1297
  %v1537 = vadd.f32 %v714, %v1299
  %v1538 = vadd.f32 %v716, %v1301
  %v1539 = vadd.f32 %v718, %v1303
  %v1540 = vadd.f32 %v742, %v1305
  %v1541 = vadd.f32 %v756, %v1307
  %v1542 = vadd.f32 %v764, %v1309
  %v1543 = vadd.f32 %v766, %v1311
  %v1544 = vadd.f32 %v749, %v1313
  %v1545 = vadd.f32 %v767, %v1315
  %v1546 = vadd.f32 %v791, %v1317
  %v1547 = vadd.f32 %v805, %v1319
  %v1548 = vadd.f32 %v813, %v1321
  %v1549 = vadd.f32 %v815, %v1323
  %v1550 = vadd.f32 %v798, %v1325
  %v1551 = vadd.f32 %v812, %v1327
  %v1552 = vadd.f32 %v814, %v1329
  %v1553 = vadd.f32 %v816, %v1331
  %v1554 = vadd.f32 %v840, %v1333
  %v1555 = vadd.f32 %v854, %v1335
  %v1556 = vadd.f32 %v847, %v1337
  %v1557 = vadd.f32 %v861, %v1339
  %v1558 = vadd.f32 %v863, %v1341
  %v1559 = vadd.f32 %v865, %v1343
  %v1560 = vadd.f32 %v889, %v1345
  %v1561 = vadd.f32 %v903, %v1347
  %v1562 = vadd.f32 %v911, %v1349
  %v1563 = vadd.f32 %v913, %v1351
  %v1564 = vadd.f32 %v896, %v1353
  %v1565 = vadd.f32 %v910, %v1355
  %v1566 = vadd.f32 %v912, %v1357
  %v1567 = vadd.f32 %v952, %v1359
  %v1568 = vadd.f32 %v960, %v1361
  %v1569 = vadd.f32 %v962, %v1363
  %v1570 = vadd.f32 %v945, %v1365
  %v1571 = vadd.f32 %v959, %v1367
  %v1572 = vadd.f32 %v961, %v1369
  %v1573 = vadd.f32 %v963, %v1371
  %v1574 = vadd.f32 %v987, %v1373
  %v1575 = vadd.f32 %v1001, %v1375
  %v1576 = vadd.f32 %v1009, %v1377
  %v1577 = vadd.f32 %v1011, %v1379
  %v1578 = vadd.f32 %v1010, %v1381
  %v1579 = vadd.f32 %v1012, %v1383
  %v1580 = vadd.f32 %v1036, %v1385
  %v1581 = vadd.f32 %v1050, %v1387
  %v1582 = vadd.f32 %v1058, %v1389
  %v1583 = vadd.f32 %v1060, %v1391
  %v1584 = vadd.f32 %v1043, %v1393
  %v1585 = vadd.f32 %v1057, %v1395
  %v1586 = vadd.f32 %v1059, %v1397
  %v1587 = vadd.f32 %v1061, %v1399
  %v1588 = vadd.f32 %v1085, %v1401
  %v1589 = vadd.f32 %v1109, %v1403
  %v1590 = vadd.f32 %v1092, %v1405
  %v1591 = vadd.f32 %v1106, %v1407
  %v1592 = vadd.f32 %v1108, %v1409
  %v1593 = vadd.f32 %v1110, %v1411
  %v1594 = vadd.f32 %v1134, %v1413
  %v1595 = vadd.f32 %v1148, %v1415
  %v1596 = vadd.f32 %v1156, %v1417
  %v1597 = vadd.f32 %v1158, %v1419
  %v1598 = vadd.f32 %v1141, %v1421
  %v1599 = vadd.f32 %v1155, %v1423
  %1600 = vrot.lane.b32.xlu0 %v568, 64
  %v1601 = vpop.permute.xlu0 %1600
  %1602 = vrot.lane.b32.xlu0 %v570, 64
  %v1603 = vpop.permute.xlu0 %1602
  %1604 = vrot.lane.b32.xlu0 %v553, 64
  %v1605 = vpop.permute.xlu0 %1604
  %1606 = vrot.lane.b32.xlu0 %v567, 64
  %v1607 = vpop.permute.xlu0 %1606
  %1608 = vrot.lane.b32.xlu0 %v569, 64
  %v1609 = vpop.permute.xlu0 %1608
  %1610 = vrot.lane.b32.xlu0 %v571, 64
  %v1611 = vpop.permute.xlu0 %1610
  %1612 = vrot.lane.b32.xlu0 %v595, 64
  %v1613 = vpop.permute.xlu0 %1612
  %1614 = vrot.lane.b32.xlu0 %v609, 64
  %v1615 = vpop.permute.xlu0 %1614
  %1616 = vrot.lane.b32.xlu0 %v617, 64
  %v1617 = vpop.permute.xlu0 %1616
  %1618 = vrot.lane.b32.xlu0 %v619, 64
  %v1619 = vpop.permute.xlu0 %1618
  %1620 = vrot.lane.b32.xlu0 %v602, 64
  %v1621 = vpop.permute.xlu0 %1620
  %1622 = vrot.lane.b32.xlu0 %v620, 64
  %v1623 = vpop.permute.xlu0 %1622
  %1624 = vrot.lane.b32.xlu0 %v644, 64
  %v1625 = vpop.permute.xlu0 %1624
  %1626 = vrot.lane.b32.xlu0 %v658, 64
  %v1627 = vpop.permute.xlu0 %1626
  %1628 = vrot.lane.b32.xlu0 %v666, 64
  %v1629 = vpop.permute.xlu0 %1628
  %1630 = vrot.lane.b32.xlu0 %v668, 64
  %v1631 = vpop.permute.xlu0 %1630
  %1632 = vrot.lane.b32.xlu0 %v651, 64
  %v1633 = vpop.permute.xlu0 %1632
  %1634 = vrot.lane.b32.xlu0 %v665, 64
  %v1635 = vpop.permute.xlu0 %1634
  %1636 = vrot.lane.b32.xlu0 %v667, 64
  %v1637 = vpop.permute.xlu0 %1636
  %1638 = vrot.lane.b32.xlu0 %v669, 64
  %v1639 = vpop.permute.xlu0 %1638
  %1640 = vrot.lane.b32.xlu0 %v693, 64
  %v1641 = vpop.permute.xlu0 %1640
  %1642 = vrot.lane.b32.xlu0 %v707, 64
  %v1643 = vpop.permute.xlu0 %1642
  %1644 = vrot.lane.b32.xlu0 %v700, 64
  %v1645 = vpop.permute.xlu0 %1644
  %1646 = vrot.lane.b32.xlu0 %v714, 64
  %v1647 = vpop.permute.xlu0 %1646
  %1648 = vrot.lane.b32.xlu0 %v716, 64
  %v1649 = vpop.permute.xlu0 %1648
  %1650 = vrot.lane.b32.xlu0 %v718, 64
  %v1651 = vpop.permute.xlu0 %1650
  %1652 = vrot.lane.b32.xlu0 %v742, 64
  %v1653 = vpop.permute.xlu0 %1652
  %1654 = vrot.lane.b32.xlu0 %v756, 64
  %v1655 = vpop.permute.xlu0 %1654
  %1656 = vrot.lane.b32.xlu0 %v764, 64
  %v1657 = vpop.permute.xlu0 %1656
  %1658 = vrot.lane.b32.xlu0 %v766, 64
  %v1659 = vpop.permute.xlu0 %1658
  %1660 = vrot.lane.b32.xlu0 %v749, 64
  %v1661 = vpop.permute.xlu0 %1660
  %1662 = vrot.lane.b32.xlu0 %v763, 64
  %v1663 = vpop.permute.xlu0 %1662
  %1664 = vrot.lane.b32.xlu0 %v765, 64
  %v1665 = vpop.permute.xlu0 %1664
  %1666 = vrot.lane.b32.xlu0 %v805, 64
  %v1667 = vpop.permute.xlu0 %1666
  %1668 = vrot.lane.b32.xlu0 %v813, 64
  %v1669 = vpop.permute.xlu0 %1668
  %1670 = vrot.lane.b32.xlu0 %v815, 64
  %v1671 = vpop.permute.xlu0 %1670
  %1672 = vrot.lane.b32.xlu0 %v798, 64
  %v1673 = vpop.permute.xlu0 %1672
  %1674 = vrot.lane.b32.xlu0 %v812, 64
  %v1675 = vpop.permute.xlu0 %1674
  %1676 = vrot.lane.b32.xlu0 %v814, 64
  %v1677 = vpop.permute.xlu0 %1676
  %1678 = vrot.lane.b32.xlu0 %v816, 64
  %v1679 = vpop.permute.xlu0 %1678
  %1680 = vrot.lane.b32.xlu0 %v840, 64
  %v1681 = vpop.permute.xlu0 %1680
  %1682 = vrot.lane.b32.xlu0 %v854, 64
  %v1683 = vpop.permute.xlu0 %1682
  %1684 = vrot.lane.b32.xlu0 %v862, 64
  %v1685 = vpop.permute.xlu0 %1684
  %1686 = vrot.lane.b32.xlu0 %v864, 64
  %v1687 = vpop.permute.xlu0 %1686
  %1688 = vrot.lane.b32.xlu0 %v863, 64
  %v1689 = vpop.permute.xlu0 %1688
  %1690 = vrot.lane.b32.xlu0 %v865, 64
  %v1691 = vpop.permute.xlu0 %1690
  %1692 = vrot.lane.b32.xlu0 %v889, 64
  %v1693 = vpop.permute.xlu0 %1692
  %1694 = vrot.lane.b32.xlu0 %v903, 64
  %v1695 = vpop.permute.xlu0 %1694
  %1696 = vrot.lane.b32.xlu0 %v911, 64
  %v1697 = vpop.permute.xlu0 %1696
  %1698 = vrot.lane.b32.xlu0 %v913, 64
  %v1699 = vpop.permute.xlu0 %1698
  %1700 = vrot.lane.b32.xlu0 %v896, 64
  %v1701 = vpop.permute.xlu0 %1700
  %1702 = vrot.lane.b32.xlu0 %v910, 64
  %v1703 = vpop.permute.xlu0 %1702
  %1704 = vrot.lane.b32.xlu0 %v912, 64
  %v1705 = vpop.permute.xlu0 %1704
  %1706 = vrot.lane.b32.xlu0 %v914, 64
  %v1707 = vpop.permute.xlu0 %1706
  %1708 = vrot.lane.b32.xlu0 %v938, 64
  %v1709 = vpop.permute.xlu0 %1708
  %1710 = vrot.lane.b32.xlu0 %v962, 64
  %v1711 = vpop.permute.xlu0 %1710
  %1712 = vrot.lane.b32.xlu0 %v945, 64
  %v1713 = vpop.permute.xlu0 %1712
  %1714 = vrot.lane.b32.xlu0 %v959, 64
  %v1715 = vpop.permute.xlu0 %1714
  %1716 = vrot.lane.b32.xlu0 %v961, 64
  %v1717 = vpop.permute.xlu0 %1716
  %1718 = vrot.lane.b32.xlu0 %v963, 64
  %v1719 = vpop.permute.xlu0 %1718
  %1720 = vrot.lane.b32.xlu0 %v987, 64
  %v1721 = vpop.permute.xlu0 %1720
  %1722 = vrot.lane.b32.xlu0 %v1001, 64
  %v1723 = vpop.permute.xlu0 %1722
  %1724 = vrot.lane.b32.xlu0 %v1009, 64
  %v1725 = vpop.permute.xlu0 %1724
  %1726 = vrot.lane.b32.xlu0 %v1011, 64
  %v1727 = vpop.permute.xlu0 %1726
  %1728 = vrot.lane.b32.xlu0 %v994, 64
  %v1729 = vpop.permute.xlu0 %1728
  %1730 = vrot.lane.b32.xlu0 %v1008, 64
  %v1731 = vpop.permute.xlu0 %1730
  %1732 = vrot.lane.b32.xlu0 %v1036, 64
  %v1733 = vpop.permute.xlu0 %1732
  %1734 = vrot.lane.b32.xlu0 %v1050, 64
  %v1735 = vpop.permute.xlu0 %1734
  %1736 = vrot.lane.b32.xlu0 %v1058, 64
  %v1737 = vpop.permute.xlu0 %1736
  %1738 = vrot.lane.b32.xlu0 %v1060, 64
  %v1739 = vpop.permute.xlu0 %1738
  %1740 = vrot.lane.b32.xlu0 %v1043, 64
  %v1741 = vpop.permute.xlu0 %1740
  %1742 = vrot.lane.b32.xlu0 %v1057, 64
  %v1743 = vpop.permute.xlu0 %1742
  %1744 = vrot.lane.b32.xlu0 %v1059, 64
  %v1745 = vpop.permute.xlu0 %1744
  %1746 = vrot.lane.b32.xlu0 %v1061, 64
  %v1747 = vpop.permute.xlu0 %1746
  %1748 = vrot.lane.b32.xlu0 %v1085, 64
  %v1749 = vpop.permute.xlu0 %1748
  %1750 = vrot.lane.b32.xlu0 %v1099, 64
  %v1751 = vpop.permute.xlu0 %1750
  %1752 = vrot.lane.b32.xlu0 %v1107, 64
  %v1753 = vpop.permute.xlu0 %1752
  %1754 = vrot.lane.b32.xlu0 %v1106, 64
  %v1755 = vpop.permute.xlu0 %1754
  %1756 = vrot.lane.b32.xlu0 %v1108, 64
  %v1757 = vpop.permute.xlu0 %1756
  %1758 = vrot.lane.b32.xlu0 %v1110, 64
  %v1759 = vpop.permute.xlu0 %1758
  %1760 = vrot.lane.b32.xlu0 %v1134, 64
  %v1761 = vpop.permute.xlu0 %1760
  %1762 = vrot.lane.b32.xlu0 %v1148, 64
  %v1763 = vpop.permute.xlu0 %1762
  %1764 = vrot.lane.b32.xlu0 %v1156, 64
  %v1765 = vpop.permute.xlu0 %1764
  %1766 = vrot.lane.b32.xlu0 %v1158, 64
  %v1767 = vpop.permute.xlu0 %1766
  %1768 = vrot.lane.b32.xlu0 %v1141, 64
  %v1769 = vpop.permute.xlu0 %1768
  %1770 = vrot.lane.b32.xlu0 %v1155, 64
  %v1771 = vpop.permute.xlu0 %1770
  %1772 = vrot.lane.b32.xlu0 %v1157, 64
  %v1773 = vpop.permute.xlu0 %1772
  %1774 = vrot.lane.b32.xlu0 %v1159, 64
  %v1775 = vpop.permute.xlu0 %1774
  %v1864 = vadd.f32 %v1512, %v1601
  %v1865 = vadd.f32 %v1513, %v1603
  %v1866 = vadd.f32 %v1514, %v1605
  %v1867 = vadd.f32 %v1515, %v1607
  %v1868 = vadd.f32 %v1516, %v1609
  %v1869 = vadd.f32 %v1517, %v1611
  %v1870 = vadd.f32 %v1518, %v1613
  %v1871 = vadd.f32 %v1519, %v1615
  %v1872 = vadd.f32 %v1520, %v1617
  %v1873 = vadd.f32 %v1521, %v1619
  %v1874 = vadd.f32 %v1522, %v1621
  %v1875 = vadd.f32 %v1523, %v1623
  %v1876 = vadd.f32 %v1524, %v1625
  %v1877 = vadd.f32 %v1525, %v1627
  %v1878 = vadd.f32 %v1526, %v1629
  %v1879 = vadd.f32 %v1527, %v1631
  %v1880 = vadd.f32 %v1528, %v1633
  %v1881 = vadd.f32 %v1529, %v1635
  %v1882 = vadd.f32 %v1530, %v1637
  %v1883 = vadd.f32 %v1531, %v1639
  %v1884 = vadd.f32 %v1532, %v1641
  %v1885 = vadd.f32 %v1533, %v1643
  %v1886 = vadd.f32 %v1534, %v1645
  %v1887 = vadd.f32 %v1535, %v1647
  %v1888 = vadd.f32 %v1536, %v1649
  %v1889 = vadd.f32 %v1537, %v1651
  %v1890 = vadd.f32 %v1538, %v1653
  %v1891 = vadd.f32 %v1539, %v1655
  %v1892 = vadd.f32 %v1540, %v1657
  %v1893 = vadd.f32 %v1541, %v1659
  %v1894 = vadd.f32 %v1542, %v1661
  %v1895 = vadd.f32 %v1543, %v1663
  %v1896 = vadd.f32 %v1544, %v1665
  %v1897 = vadd.f32 %v1545, %v1667
  %v1898 = vadd.f32 %v1546, %v1669
  %v1899 = vadd.f32 %v1547, %v1671
  %v1900 = vadd.f32 %v1548, %v1673
  %v1901 = vadd.f32 %v1549, %v1675
  %v1902 = vadd.f32 %v1550, %v1677
  %v1903 = vadd.f32 %v1551, %v1679
  %v1904 = vadd.f32 %v1552, %v1681
  %v1905 = vadd.f32 %v1553, %v1683
  %v1906 = vadd.f32 %v1554, %v1685
  %v1907 = vadd.f32 %v1555, %v1687
  %v1908 = vadd.f32 %v1556, %v1689
  %v1909 = vadd.f32 %v1557, %v1691
  %v1910 = vadd.f32 %v1558, %v1693
  %v1911 = vadd.f32 %v1559, %v1695
  %v1912 = vadd.f32 %v1560, %v1697
  %v1913 = vadd.f32 %v1561, %v1699
  %v1914 = vadd.f32 %v1562, %v1701
  %v1915 = vadd.f32 %v1563, %v1703
  %v1916 = vadd.f32 %v1564, %v1705
  %v1917 = vadd.f32 %v1565, %v1707
  %v1918 = vadd.f32 %v1566, %v1709
  %v1919 = vadd.f32 %v1567, %v1711
  %v1920 = vadd.f32 %v1568, %v1713
  %v1921 = vadd.f32 %v1569, %v1715
  %v1922 = vadd.f32 %v1570, %v1717
  %v1923 = vadd.f32 %v1571, %v1719
  %v1924 = vadd.f32 %v1572, %v1721
  %v1925 = vadd.f32 %v1573, %v1723
  %v1926 = vadd.f32 %v1574, %v1725
  %v1927 = vadd.f32 %v1575, %v1727
  %v1928 = vadd.f32 %v1576, %v1729
  %v1929 = vadd.f32 %v1577, %v1731
  %v1930 = vadd.f32 %v1578, %v1733
  %v1931 = vadd.f32 %v1579, %v1735
  %v1932 = vadd.f32 %v1580, %v1737
  %v1933 = vadd.f32 %v1581, %v1739
  %v1934 = vadd.f32 %v1582, %v1741
  %v1935 = vadd.f32 %v1583, %v1743
  %v1936 = vadd.f32 %v1584, %v1745
  %v1937 = vadd.f32 %v1585, %v1747
  %v1938 = vadd.f32 %v1586, %v1749
  %v1939 = vadd.f32 %v1587, %v1751
  %v1940 = vadd.f32 %v1588, %v1753
  %v1941 = vadd.f32 %v1589, %v1755
  %v1942 = vadd.f32 %v1590, %v1757
  %v1943 = vadd.f32 %v1591, %v1759
  %v1944 = vadd.f32 %v1592, %v1761
  %v1945 = vadd.f32 %v1593, %v1763
  %v1946 = vadd.f32 %v1594, %v1765
  %v1947 = vadd.f32 %v1595, %v1767
  %v1948 = vadd.f32 %v1596, %v1769
  %v1949 = vadd.f32 %v1597, %v1771
  %v1950 = vadd.f32 %v1598, %v1773
  %v1951 = vadd.f32 %v1599, %v1775
  %v1952 = vld [vmem:[%s5] sm:$0x1]
  %v1954 = vlaneseq
  %v1955 = vshrl.u32 %v1954, 7
  %v1956 = vsub.s32 0, %v1955
  %v1957 = vrot.slane %v1952, %v1956
  %v1958 = vcombine.high %v1957, %v1957
  %v1960 = vunpack.c.l.s4 1966171168
  %v1961 = vunpack.c.0.s8 %v1960
  %v1962 = vlaneseq
  %v1963 = vshrl.u32 %v1962, 7
  %v1964 = vsub.s32 %v1961, %v1963
  %v1965 = vrot.slane %v1957, %v1964
  %v1967 = vunpack.c.l.s4 1966171168
  %v1968 = vunpack.c.0.s8 %v1967
  %v1969 = vlaneseq
  %v1970 = vshrl.u32 %v1969, 7
  %v1971 = vsub.s32 %v1968, %v1970
  %v1972 = vrot.slane %v1958, %v1971
  %v1973 = vcombine.high %v1965, %v1965
  %v1974 = vcombine.high %v1972, %v1972
  %v1976 = vunpack.c.l.s4 1966171168
  %v1977 = vunpack.c.0.s8 %v1976
  %v1978 = vlaneseq
  %v1979 = vshrl.u32 %v1978, 7
  %v1980 = vsub.s32 %v1977, %v1979
  %v1981 = vrot.slane %v1965, %v1980
  %v1983 = vunpack.c.l.s4 1966171168
  %v1984 = vunpack.c.0.s8 %v1983
  %v1985 = vlaneseq
  %v1986 = vshrl.u32 %v1985, 7
  %v1987 = vsub.s32 %v1984, %v1986
  %v1988 = vrot.slane %v1972, %v1987
  %v1990 = vunpack.c.l.s4 1966171168
  %v1991 = vunpack.c.0.s8 %v1990
  %v1992 = vlaneseq
  %v1993 = vshrl.u32 %v1992, 7
  %v1994 = vsub.s32 %v1991, %v1993
  %v1995 = vrot.slane %v1973, %v1994
  %v1997 = vunpack.c.l.s4 1966171168
  %v1998 = vunpack.c.0.s8 %v1997
  %v1999 = vlaneseq
  %v2000 = vshrl.u32 %v1999, 7
  %v2001 = vsub.s32 %v1998, %v2000
  %v2002 = vrot.slane %v1974, %v2001
  %v2003 = vcombine.high %v1981, %v1981
  %v2004 = vcombine.high %v1988, %v1988
  %v2005 = vcombine.high %v1995, %v1995
  %v2006 = vcombine.high %v2002, %v2002
  %v2015 = vmul.f32 %v1864, %v1981
  %v2016 = vmul.f32 %v1865, %v1995
  %v2017 = vmul.f32 %v1866, %v2003
  %v2018 = vmul.f32 %v1867, %v2005
  %v2019 = vmul.f32 %v1868, %v1988
  %v2020 = vmul.f32 %v1869, %v2002
  %v2021 = vmul.f32 %v1870, %v2004
  %v2022 = vmul.f32 %v1871, %v2006
  %v2023 = vmul.f32 %v1872, %v1981
  %v2024 = vmul.f32 %v1873, %v1995
  %v2025 = vmul.f32 %v1874, %v2003
  %v2026 = vmul.f32 %v1875, %v1981
  %v2027 = vmul.f32 %v1876, %v1995
  %v2028 = vmul.f32 %v1877, %v2003
  %v2029 = vmul.f32 %v1878, %v2005
  %v2030 = vmul.f32 %v1879, %v1988
  %v2031 = vmul.f32 %v1880, %v2002
  %v2032 = vmul.f32 %v1881, %v2004
  %v2033 = vmul.f32 %v1882, %v2006
  %v2034 = vmul.f32 %v1883, %v1981
  %v2035 = vmul.f32 %v1884, %v1995
  %v2036 = vmul.f32 %v1885, %v2003
  %v2037 = vmul.f32 %v1886, %v1981
  %v2038 = vmul.f32 %v1887, %v1995
  %v2039 = vmul.f32 %v1888, %v2003
  %v2040 = vmul.f32 %v1889, %v2005
  %v2041 = vmul.f32 %v1890, %v1988
  %v2042 = vmul.f32 %v1891, %v2002
  %v2043 = vmul.f32 %v1892, %v2004
  %v2044 = vmul.f32 %v1893, %v2006
  %v2045 = vmul.f32 %v1894, %v1981
  %v2046 = vmul.f32 %v1895, %v1995
  %v2047 = vmul.f32 %v1896, %v2003
  %v2048 = vmul.f32 %v1897, %v1981
  %v2049 = vmul.f32 %v1898, %v1995
  %v2050 = vmul.f32 %v1899, %v2003
  %v2051 = vmul.f32 %v1900, %v2005
  %v2052 = vmul.f32 %v1901, %v1988
  %v2053 = vmul.f32 %v1902, %v2002
  %v2054 = vmul.f32 %v1903, %v2004
  %v2055 = vmul.f32 %v1904, %v2006
  %v2056 = vmul.f32 %v1905, %v1981
  %v2057 = vmul.f32 %v1906, %v1995
  %v2058 = vmul.f32 %v1907, %v2003
  %v2059 = vmul.f32 %v1908, %v1981
  %v2060 = vmul.f32 %v1909, %v1995
  %v2061 = vmul.f32 %v1910, %v2003
  %v2062 = vmul.f32 %v1911, %v2005
  %v2063 = vmul.f32 %v1912, %v1988
  %v2064 = vmul.f32 %v1913, %v2002
  %v2065 = vmul.f32 %v1914, %v2004
  %v2066 = vmul.f32 %v1915, %v2006
  %v2067 = vmul.f32 %v1916, %v1981
  %v2068 = vmul.f32 %v1917, %v1995
  %v2069 = vmul.f32 %v1918, %v2003
  %v2070 = vmul.f32 %v1919, %v1981
  %v2071 = vmul.f32 %v1920, %v1995
  %v2072 = vmul.f32 %v1921, %v2003
  %v2073 = vmul.f32 %v1922, %v2005
  %v2074 = vmul.f32 %v1923, %v1988
  %v2075 = vmul.f32 %v1924, %v2002
  %v2076 = vmul.f32 %v1925, %v2004
  %v2077 = vmul.f32 %v1926, %v2006
  %v2078 = vmul.f32 %v1927, %v1981
  %v2079 = vmul.f32 %v1928, %v1995
  %v2080 = vmul.f32 %v1929, %v2003
  %v2081 = vmul.f32 %v1930, %v1981
  %v2082 = vmul.f32 %v1931, %v1995
  %v2083 = vmul.f32 %v1932, %v2003
  %v2084 = vmul.f32 %v1933, %v2005
  %v2085 = vmul.f32 %v1934, %v1988
  %v2086 = vmul.f32 %v1935, %v2002
  %v2087 = vmul.f32 %v1936, %v2004
  %v2088 = vmul.f32 %v1937, %v2006
  %v2089 = vmul.f32 %v1938, %v1981
  %v2090 = vmul.f32 %v1939, %v1995
  %v2091 = vmul.f32 %v1940, %v2003
  %v2092 = vmul.f32 %v1941, %v1981
  %v2093 = vmul.f32 %v1942, %v1995
  %v2094 = vmul.f32 %v1943, %v2003
  %v2095 = vmul.f32 %v1944, %v2005
  %v2096 = vmul.f32 %v1945, %v1988
  %v2097 = vmul.f32 %v1946, %v2002
  %v2098 = vmul.f32 %v1947, %v2004
  %v2099 = vmul.f32 %v1948, %v2006
  %v2100 = vmul.f32 %v1949, %v1981
  %v2101 = vmul.f32 %v1950, %v1995
  %v2102 = vmul.f32 %v1951, %v2003
  %v2103 = vld [vmem:[%s6] sm:$0x1]
  %v2105 = vlaneseq
  %v2106 = vshrl.u32 %v2105, 7
  %v2107 = vsub.s32 0, %v2106
  %v2108 = vrot.slane %v2103, %v2107
  %v2109 = vcombine.high %v2108, %v2108
  %v2111 = vunpack.c.l.s4 1966171168
  %v2112 = vunpack.c.0.s8 %v2111
  %v2113 = vlaneseq
  %v2114 = vshrl.u32 %v2113, 7
  %v2115 = vsub.s32 %v2112, %v2114
  %v2116 = vrot.slane %v2108, %v2115
  %v2118 = vunpack.c.l.s4 1966171168
  %v2119 = vunpack.c.0.s8 %v2118
  %v2120 = vlaneseq
  %v2121 = vshrl.u32 %v2120, 7
  %v2122 = vsub.s32 %v2119, %v2121
  %v2123 = vrot.slane %v2109, %v2122
  %v2124 = vcombine.high %v2116, %v2116
  %v2125 = vcombine.high %v2123, %v2123
  %v2127 = vunpack.c.l.s4 1966171168
  %v2128 = vunpack.c.0.s8 %v2127
  %v2129 = vlaneseq
  %v2130 = vshrl.u32 %v2129, 7
  %v2131 = vsub.s32 %v2128, %v2130
  %v2132 = vrot.slane %v2116, %v2131
  %v2134 = vunpack.c.l.s4 1966171168
  %v2135 = vunpack.c.0.s8 %v2134
  %v2136 = vlaneseq
  %v2137 = vshrl.u32 %v2136, 7
  %v2138 = vsub.s32 %v2135, %v2137
  %v2139 = vrot.slane %v2123, %v2138
  %v2141 = vunpack.c.l.s4 1966171168
  %v2142 = vunpack.c.0.s8 %v2141
  %v2143 = vlaneseq
  %v2144 = vshrl.u32 %v2143, 7
  %v2145 = vsub.s32 %v2142, %v2144
  %v2146 = vrot.slane %v2124, %v2145
  %v2148 = vunpack.c.l.s4 1966171168
  %v2149 = vunpack.c.0.s8 %v2148
  %v2150 = vlaneseq
  %v2151 = vshrl.u32 %v2150, 7
  %v2152 = vsub.s32 %v2149, %v2151
  %v2153 = vrot.slane %v2125, %v2152
  %v2154 = vcombine.high %v2132, %v2132
  %v2155 = vcombine.high %v2139, %v2139
  %v2156 = vcombine.high %v2146, %v2146
  %v2157 = vcombine.high %v2153, %v2153
  %v2166 = vadd.f32 %v2015, %v2132
  %v2167 = vadd.f32 %v2016, %v2146
  %v2168 = vadd.f32 %v2017, %v2154
  %v2169 = vadd.f32 %v2018, %v2156
  %v2170 = vadd.f32 %v2019, %v2139
  %v2171 = vadd.f32 %v2020, %v2153
  %v2172 = vadd.f32 %v2021, %v2155
  %v2173 = vadd.f32 %v2022, %v2157
  %v2174 = vadd.f32 %v2023, %v2132
  %v2175 = vadd.f32 %v2024, %v2146
  %v2176 = vadd.f32 %v2025, %v2154
  %v2177 = vadd.f32 %v2026, %v2132
  %v2178 = vadd.f32 %v2027, %v2146
  %v2179 = vadd.f32 %v2028, %v2154
  %v2180 = vadd.f32 %v2029, %v2156
  %v2181 = vadd.f32 %v2030, %v2139
  %v2182 = vadd.f32 %v2031, %v2153
  %v2183 = vadd.f32 %v2032, %v2155
  %v2184 = vadd.f32 %v2033, %v2157
  %v2185 = vadd.f32 %v2034, %v2132
  %v2186 = vadd.f32 %v2035, %v2146
  %v2187 = vadd.f32 %v2036, %v2154
  %v2188 = vadd.f32 %v2037, %v2132
  %v2189 = vadd.f32 %v2038, %v2146
  %v2190 = vadd.f32 %v2039, %v2154
  %v2191 = vadd.f32 %v2040, %v2156
  %v2192 = vadd.f32 %v2041, %v2139
  %v2193 = vadd.f32 %v2042, %v2153
  %v2194 = vadd.f32 %v2043, %v2155
  %v2195 = vadd.f32 %v2044, %v2157
  %v2196 = vadd.f32 %v2045, %v2132
  %v2197 = vadd.f32 %v2046, %v2146
  %v2198 = vadd.f32 %v2047, %v2154
  %v2199 = vadd.f32 %v2048, %v2132
  %v2200 = vadd.f32 %v2049, %v2146
  %v2201 = vadd.f32 %v2050, %v2154
  %v2202 = vadd.f32 %v2051, %v2156
  %v2203 = vadd.f32 %v2052, %v2139
  %v2204 = vadd.f32 %v2053, %v2153
  %v2205 = vadd.f32 %v2054, %v2155
  %v2206 = vadd.f32 %v2055, %v2157
  %v2207 = vadd.f32 %v2056, %v2132
  %v2208 = vadd.f32 %v2057, %v2146
  %v2209 = vadd.f32 %v2058, %v2154
  %v2210 = vadd.f32 %v2059, %v2132
  %v2211 = vadd.f32 %v2060, %v2146
  %v2212 = vadd.f32 %v2061, %v2154
  %v2213 = vadd.f32 %v2062, %v2156
  %v2214 = vadd.f32 %v2063, %v2139
  %v2215 = vadd.f32 %v2064, %v2153
  %v2216 = vadd.f32 %v2065, %v2155
  %v2217 = vadd.f32 %v2066, %v2157
  %v2218 = vadd.f32 %v2067, %v2132
  %v2219 = vadd.f32 %v2068, %v2146
  %v2220 = vadd.f32 %v2069, %v2154
  %v2221 = vadd.f32 %v2070, %v2132
  %v2222 = vadd.f32 %v2071, %v2146
  %v2223 = vadd.f32 %v2072, %v2154
  %v2224 = vadd.f32 %v2073, %v2156
  %v2225 = vadd.f32 %v2074, %v2139
  %v2226 = vadd.f32 %v2075, %v2153
  %v2227 = vadd.f32 %v2076, %v2155
  %v2228 = vadd.f32 %v2077, %v2157
  %v2229 = vadd.f32 %v2078, %v2132
  %v2230 = vadd.f32 %v2079, %v2146
  %v2231 = vadd.f32 %v2080, %v2154
  %v2232 = vadd.f32 %v2081, %v2132
  %v2233 = vadd.f32 %v2082, %v2146
  %v2234 = vadd.f32 %v2083, %v2154
  %v2235 = vadd.f32 %v2084, %v2156
  %v2236 = vadd.f32 %v2085, %v2139
  %v2237 = vadd.f32 %v2086, %v2153
  %v2238 = vadd.f32 %v2087, %v2155
  %v2239 = vadd.f32 %v2088, %v2157
  %v2240 = vadd.f32 %v2089, %v2132
  %v2241 = vadd.f32 %v2090, %v2146
  %v2242 = vadd.f32 %v2091, %v2154
  %v2243 = vadd.f32 %v2092, %v2132
  %v2244 = vadd.f32 %v2093, %v2146
  %v2245 = vadd.f32 %v2094, %v2154
  %v2246 = vadd.f32 %v2095, %v2156
  %v2247 = vadd.f32 %v2096, %v2139
  %v2248 = vadd.f32 %v2097, %v2153
  %v2249 = vadd.f32 %v2098, %v2155
  %v2250 = vadd.f32 %v2099, %v2157
  %v2251 = vadd.f32 %v2100, %v2132
  %v2252 = vadd.f32 %v2101, %v2146
  %v2253 = vadd.f32 %v2102, %v2154
  %v2254 = vmax.f32 %v2166, 0.0
  %v2255 = vmax.f32 %v2167, 0.0
  %v2256 = vmax.f32 %v2168, 0.0
  %v2257 = vmax.f32 %v2169, 0.0
  %v2258 = vmax.f32 %v2170, 0.0
  %v2259 = vmax.f32 %v2171, 0.0
  %v2260 = vmax.f32 %v2172, 0.0
  %v2261 = vmax.f32 %v2173, 0.0
  %v2262 = vmax.f32 %v2174, 0.0
  %v2263 = vmax.f32 %v2175, 0.0
  %v2264 = vmax.f32 %v2176, 0.0
  %v2265 = vmax.f32 %v2177, 0.0
  %v2266 = vmax.f32 %v2178, 0.0
  %v2267 = vmax.f32 %v2179, 0.0
  %v2268 = vmax.f32 %v2180, 0.0
  %v2269 = vmax.f32 %v2181, 0.0
  %v2270 = vmax.f32 %v2182, 0.0
  %v2271 = vmax.f32 %v2183, 0.0
  %v2272 = vmax.f32 %v2184, 0.0
  %v2273 = vmax.f32 %v2185, 0.0
  %v2274 = vmax.f32 %v2186, 0.0
  %v2275 = vmax.f32 %v2187, 0.0
  %v2276 = vmax.f32 %v2188, 0.0
  %v2277 = vmax.f32 %v2189, 0.0
  %v2278 = vmax.f32 %v2190, 0.0
  %v2279 = vmax.f32 %v2191, 0.0
  %v2280 = vmax.f32 %v2192, 0.0
  %v2281 = vmax.f32 %v2193, 0.0
  %v2282 = vmax.f32 %v2194, 0.0
  %v2283 = vmax.f32 %v2195, 0.0
  %v2284 = vmax.f32 %v2196, 0.0
  %v2285 = vmax.f32 %v2197, 0.0
  %v2286 = vmax.f32 %v2198, 0.0
  %v2287 = vmax.f32 %v2199, 0.0
  %v2288 = vmax.f32 %v2200, 0.0
  %v2289 = vmax.f32 %v2201, 0.0
  %v2290 = vmax.f32 %v2202, 0.0
  %v2291 = vmax.f32 %v2203, 0.0
  %v2292 = vmax.f32 %v2204, 0.0
  %v2293 = vmax.f32 %v2205, 0.0
  %v2294 = vmax.f32 %v2206, 0.0
  %v2295 = vmax.f32 %v2207, 0.0
  %v2296 = vmax.f32 %v2208, 0.0
  %v2297 = vmax.f32 %v2209, 0.0
  %v2298 = vmax.f32 %v2210, 0.0
  %v2299 = vmax.f32 %v2211, 0.0
  %v2300 = vmax.f32 %v2212, 0.0
  %v2301 = vmax.f32 %v2213, 0.0
  %v2302 = vmax.f32 %v2214, 0.0
  %v2303 = vmax.f32 %v2215, 0.0
  %v2304 = vmax.f32 %v2216, 0.0
  %v2305 = vmax.f32 %v2217, 0.0
  %v2306 = vmax.f32 %v2218, 0.0
  %v2307 = vmax.f32 %v2219, 0.0
  %v2308 = vmax.f32 %v2220, 0.0
  %v2309 = vmax.f32 %v2221, 0.0
  %v2310 = vmax.f32 %v2222, 0.0
  %v2311 = vmax.f32 %v2223, 0.0
  %v2312 = vmax.f32 %v2224, 0.0
  %v2313 = vmax.f32 %v2225, 0.0
  %v2314 = vmax.f32 %v2226, 0.0
  %v2315 = vmax.f32 %v2227, 0.0
  %v2316 = vmax.f32 %v2228, 0.0
  %v2317 = vmax.f32 %v2229, 0.0
  %v2318 = vmax.f32 %v2230, 0.0
  %v2319 = vmax.f32 %v2231, 0.0
  %v2320 = vmax.f32 %v2232, 0.0
  %v2321 = vmax.f32 %v2233, 0.0
  %v2322 = vmax.f32 %v2234, 0.0
  %v2323 = vmax.f32 %v2235, 0.0
  %v2324 = vmax.f32 %v2236, 0.0
  %v2325 = vmax.f32 %v2237, 0.0
  %v2326 = vmax.f32 %v2238, 0.0
  %v2327 = vmax.f32 %v2239, 0.0
  %v2328 = vmax.f32 %v2240, 0.0
  %v2329 = vmax.f32 %v2241, 0.0
  %v2330 = vmax.f32 %v2242, 0.0
  %v2331 = vmax.f32 %v2243, 0.0
  %v2332 = vmax.f32 %v2244, 0.0
  %v2333 = vmax.f32 %v2245, 0.0
  %v2334 = vmax.f32 %v2246, 0.0
  %v2335 = vmax.f32 %v2247, 0.0
  %v2336 = vmax.f32 %v2248, 0.0
  %v2337 = vmax.f32 %v2249, 0.0
  %v2338 = vmax.f32 %v2250, 0.0
  %v2339 = vmax.f32 %v2251, 0.0
  %v2340 = vmax.f32 %v2252, 0.0
  %v2341 = vmax.f32 %v2253, 0.0
  %v2430 = vcombine.low %v2254, %v2255
  %v2431 = vcombine.low %v2256, %v2257
  %v2432 = vcombine.low %v2258, %v2259
  %v2433 = vcombine.low %v2260, %v2261
  %v2435 = vunpack.c.l.s4 1966171168
  %v2436 = vunpack.c.0.s8 %v2435
  %v2437 = vlaneseq
  %v2438 = vshrl.u32 %v2437, 7
  %v2439 = vsub.s32 %v2436, %v2438
  %v2440 = vrot.slane %v2430, %v2439
  %v2442 = vunpack.c.l.s4 1966171168
  %v2443 = vunpack.c.0.s8 %v2442
  %v2444 = vlaneseq
  %v2445 = vshrl.u32 %v2444, 7
  %v2446 = vsub.s32 %v2443, %v2445
  %v2447 = vrot.slane %v2431, %v2446
  %v2449 = vunpack.c.l.s4 1966171168
  %v2450 = vunpack.c.0.s8 %v2449
  %v2451 = vlaneseq
  %v2452 = vshrl.u32 %v2451, 7
  %v2453 = vsub.s32 %v2450, %v2452
  %v2454 = vrot.slane %v2432, %v2453
  %v2456 = vunpack.c.l.s4 1966171168
  %v2457 = vunpack.c.0.s8 %v2456
  %v2458 = vlaneseq
  %v2459 = vshrl.u32 %v2458, 7
  %v2460 = vsub.s32 %v2457, %v2459
  %v2461 = vrot.slane %v2433, %v2460
  %v2462 = vcombine.low %v2440, %v2447
  %v2463 = vcombine.low %v2454, %v2461
  %v2465 = vunpack.c.l.s4 1966171168
  %v2466 = vunpack.c.0.s8 %v2465
  %v2467 = vlaneseq
  %v2468 = vshrl.u32 %v2467, 7
  %v2469 = vsub.s32 %v2466, %v2468
  %v2470 = vrot.slane %v2462, %v2469
  %v2472 = vunpack.c.l.s4 1966171168
  %v2473 = vunpack.c.0.s8 %v2472
  %v2474 = vlaneseq
  %v2475 = vshrl.u32 %v2474, 7
  %v2476 = vsub.s32 %v2473, %v2475
  %v2477 = vrot.slane %v2463, %v2476
  %v2478 = vcombine.low %v2470, %v2477
  %v2479 = vcombine.low %v2262, %v2263
  %v2481 = vunpack.c.l.s4 1966171168
  %v2482 = vunpack.c.0.s8 %v2481
  %v2483 = vlaneseq
  %v2484 = vshrl.u32 %v2483, 7
  %v2485 = vsub.s32 %v2482, %v2484
  %v2486 = vrot.slane %v2479, %v2485
  %v2488 = vunpack.c.l.s4 1966171168
  %v2489 = vunpack.c.0.s8 %v2488
  %v2490 = vlaneseq
  %v2491 = vshrl.u32 %v2490, 7
  %v2492 = vsub.s32 %v2489, %v2491
  %v2493 = vrot.slane %v2264, %v2492
  %v2494 = vcombine.low %v2486, %v2493
  %v2496 = vunpack.c.l.s4 1966171168
  %v2497 = vunpack.c.0.s8 %v2496
  %v2498 = vlaneseq
  %v2499 = vshrl.u32 %v2498, 7
  %v2500 = vsub.s32 %v2497, %v2499
  %v2501 = vrot.slane %v2494, %v2500
  %v2502 = vcombine.low %v2265, %v2266
  %v2503 = vcombine.low %v2267, %v2268
  %v2504 = vcombine.low %v2269, %v2270
  %v2505 = vcombine.low %v2271, %v2272
  %v2507 = vunpack.c.l.s4 1966171168
  %v2508 = vunpack.c.0.s8 %v2507
  %v2509 = vlaneseq
  %v2510 = vshrl.u32 %v2509, 7
  %v2511 = vsub.s32 %v2508, %v2510
  %v2512 = vrot.slane %v2502, %v2511
  %v2514 = vunpack.c.l.s4 1966171168
  %v2515 = vunpack.c.0.s8 %v2514
  %v2516 = vlaneseq
  %v2517 = vshrl.u32 %v2516, 7
  %v2518 = vsub.s32 %v2515, %v2517
  %v2519 = vrot.slane %v2503, %v2518
  %v2521 = vunpack.c.l.s4 1966171168
  %v2522 = vunpack.c.0.s8 %v2521
  %v2523 = vlaneseq
  %v2524 = vshrl.u32 %v2523, 7
  %v2525 = vsub.s32 %v2522, %v2524
  %v2526 = vrot.slane %v2504, %v2525
  %v2528 = vunpack.c.l.s4 1966171168
  %v2529 = vunpack.c.0.s8 %v2528
  %v2530 = vlaneseq
  %v2531 = vshrl.u32 %v2530, 7
  %v2532 = vsub.s32 %v2529, %v2531
  %v2533 = vrot.slane %v2505, %v2532
  %v2534 = vcombine.low %v2512, %v2519
  %v2535 = vcombine.low %v2526, %v2533
  %v2537 = vunpack.c.l.s4 1966171168
  %v2538 = vunpack.c.0.s8 %v2537
  %v2539 = vlaneseq
  %v2540 = vshrl.u32 %v2539, 7
  %v2541 = vsub.s32 %v2538, %v2540
  %v2542 = vrot.slane %v2534, %v2541
  %v2544 = vunpack.c.l.s4 1966171168
  %v2545 = vunpack.c.0.s8 %v2544
  %v2546 = vlaneseq
  %v2547 = vshrl.u32 %v2546, 7
  %v2548 = vsub.s32 %v2545, %v2547
  %v2549 = vrot.slane %v2535, %v2548
  %v2550 = vcombine.low %v2542, %v2549
  %v2551 = vcombine.low %v2273, %v2274
  %v2553 = vunpack.c.l.s4 1966171168
  %v2554 = vunpack.c.0.s8 %v2553
  %v2555 = vlaneseq
  %v2556 = vshrl.u32 %v2555, 7
  %v2557 = vsub.s32 %v2554, %v2556
  %v2558 = vrot.slane %v2551, %v2557
  %v2560 = vunpack.c.l.s4 1966171168
  %v2561 = vunpack.c.0.s8 %v2560
  %v2562 = vlaneseq
  %v2563 = vshrl.u32 %v2562, 7
  %v2564 = vsub.s32 %v2561, %v2563
  %v2565 = vrot.slane %v2275, %v2564
  %v2566 = vcombine.low %v2558, %v2565
  %v2568 = vunpack.c.l.s4 1966171168
  %v2569 = vunpack.c.0.s8 %v2568
  %v2570 = vlaneseq
  %v2571 = vshrl.u32 %v2570, 7
  %v2572 = vsub.s32 %v2569, %v2571
  %v2573 = vrot.slane %v2566, %v2572
  %v2574 = vcombine.low %v2276, %v2277
  %v2575 = vcombine.low %v2278, %v2279
  %v2576 = vcombine.low %v2280, %v2281
  %v2577 = vcombine.low %v2282, %v2283
  %v2579 = vunpack.c.l.s4 1966171168
  %v2580 = vunpack.c.0.s8 %v2579
  %v2581 = vlaneseq
  %v2582 = vshrl.u32 %v2581, 7
  %v2583 = vsub.s32 %v2580, %v2582
  %v2584 = vrot.slane %v2574, %v2583
  %v2586 = vunpack.c.l.s4 1966171168
  %v2587 = vunpack.c.0.s8 %v2586
  %v2588 = vlaneseq
  %v2589 = vshrl.u32 %v2588, 7
  %v2590 = vsub.s32 %v2587, %v2589
  %v2591 = vrot.slane %v2575, %v2590
  %v2593 = vunpack.c.l.s4 1966171168
  %v2594 = vunpack.c.0.s8 %v2593
  %v2595 = vlaneseq
  %v2596 = vshrl.u32 %v2595, 7
  %v2597 = vsub.s32 %v2594, %v2596
  %v2598 = vrot.slane %v2576, %v2597
  %v2600 = vunpack.c.l.s4 1966171168
  %v2601 = vunpack.c.0.s8 %v2600
  %v2602 = vlaneseq
  %v2603 = vshrl.u32 %v2602, 7
  %v2604 = vsub.s32 %v2601, %v2603
  %v2605 = vrot.slane %v2577, %v2604
  %v2606 = vcombine.low %v2584, %v2591
  %v2607 = vcombine.low %v2598, %v2605
  %v2609 = vunpack.c.l.s4 1966171168
  %v2610 = vunpack.c.0.s8 %v2609
  %v2611 = vlaneseq
  %v2612 = vshrl.u32 %v2611, 7
  %v2613 = vsub.s32 %v2610, %v2612
  %v2614 = vrot.slane %v2606, %v2613
  %v2616 = vunpack.c.l.s4 1966171168
  %v2617 = vunpack.c.0.s8 %v2616
  %v2618 = vlaneseq
  %v2619 = vshrl.u32 %v2618, 7
  %v2620 = vsub.s32 %v2617, %v2619
  %v2621 = vrot.slane %v2607, %v2620
  %v2622 = vcombine.low %v2614, %v2621
  %v2623 = vcombine.low %v2284, %v2285
  %v2625 = vunpack.c.l.s4 1966171168
  %v2626 = vunpack.c.0.s8 %v2625
  %v2627 = vlaneseq
  %v2628 = vshrl.u32 %v2627, 7
  %v2629 = vsub.s32 %v2626, %v2628
  %v2630 = vrot.slane %v2623, %v2629
  %v2632 = vunpack.c.l.s4 1966171168
  %v2633 = vunpack.c.0.s8 %v2632
  %v2634 = vlaneseq
  %v2635 = vshrl.u32 %v2634, 7
  %v2636 = vsub.s32 %v2633, %v2635
  %v2637 = vrot.slane %v2286, %v2636
  %v2638 = vcombine.low %v2630, %v2637
  %v2640 = vunpack.c.l.s4 1966171168
  %v2641 = vunpack.c.0.s8 %v2640
  %v2642 = vlaneseq
  %v2643 = vshrl.u32 %v2642, 7
  %v2644 = vsub.s32 %v2641, %v2643
  %v2645 = vrot.slane %v2638, %v2644
  %v2646 = vcombine.low %v2287, %v2288
  %v2647 = vcombine.low %v2289, %v2290
  %v2648 = vcombine.low %v2291, %v2292
  %v2649 = vcombine.low %v2293, %v2294
  %v2651 = vunpack.c.l.s4 1966171168
  %v2652 = vunpack.c.0.s8 %v2651
  %v2653 = vlaneseq
  %v2654 = vshrl.u32 %v2653, 7
  %v2655 = vsub.s32 %v2652, %v2654
  %v2656 = vrot.slane %v2646, %v2655
  %v2658 = vunpack.c.l.s4 1966171168
  %v2659 = vunpack.c.0.s8 %v2658
  %v2660 = vlaneseq
  %v2661 = vshrl.u32 %v2660, 7
  %v2662 = vsub.s32 %v2659, %v2661
  %v2663 = vrot.slane %v2647, %v2662
  %v2665 = vunpack.c.l.s4 1966171168
  %v2666 = vunpack.c.0.s8 %v2665
  %v2667 = vlaneseq
  %v2668 = vshrl.u32 %v2667, 7
  %v2669 = vsub.s32 %v2666, %v2668
  %v2670 = vrot.slane %v2648, %v2669
  %v2672 = vunpack.c.l.s4 1966171168
  %v2673 = vunpack.c.0.s8 %v2672
  %v2674 = vlaneseq
  %v2675 = vshrl.u32 %v2674, 7
  %v2676 = vsub.s32 %v2673, %v2675
  %v2677 = vrot.slane %v2649, %v2676
  %v2678 = vcombine.low %v2656, %v2663
  %v2679 = vcombine.low %v2670, %v2677
  %v2681 = vunpack.c.l.s4 1966171168
  %v2682 = vunpack.c.0.s8 %v2681
  %v2683 = vlaneseq
  %v2684 = vshrl.u32 %v2683, 7
  %v2685 = vsub.s32 %v2682, %v2684
  %v2686 = vrot.slane %v2678, %v2685
  %v2688 = vunpack.c.l.s4 1966171168
  %v2689 = vunpack.c.0.s8 %v2688
  %v2690 = vlaneseq
  %v2691 = vshrl.u32 %v2690, 7
  %v2692 = vsub.s32 %v2689, %v2691
  %v2693 = vrot.slane %v2679, %v2692
  %v2694 = vcombine.low %v2686, %v2693
  %v2695 = vcombine.low %v2295, %v2296
  %v2697 = vunpack.c.l.s4 1966171168
  %v2698 = vunpack.c.0.s8 %v2697
  %v2699 = vlaneseq
  %v2700 = vshrl.u32 %v2699, 7
  %v2701 = vsub.s32 %v2698, %v2700
  %v2702 = vrot.slane %v2695, %v2701
  %v2704 = vunpack.c.l.s4 1966171168
  %v2705 = vunpack.c.0.s8 %v2704
  %v2706 = vlaneseq
  %v2707 = vshrl.u32 %v2706, 7
  %v2708 = vsub.s32 %v2705, %v2707
  %v2709 = vrot.slane %v2297, %v2708
  %v2710 = vcombine.low %v2702, %v2709
  %v2712 = vunpack.c.l.s4 1966171168
  %v2713 = vunpack.c.0.s8 %v2712
  %v2714 = vlaneseq
  %v2715 = vshrl.u32 %v2714, 7
  %v2716 = vsub.s32 %v2713, %v2715
  %v2717 = vrot.slane %v2710, %v2716
  %v2718 = vcombine.low %v2298, %v2299
  %v2719 = vcombine.low %v2300, %v2301
  %v2720 = vcombine.low %v2302, %v2303
  %v2721 = vcombine.low %v2304, %v2305
  %v2723 = vunpack.c.l.s4 1966171168
  %v2724 = vunpack.c.0.s8 %v2723
  %v2725 = vlaneseq
  %v2726 = vshrl.u32 %v2725, 7
  %v2727 = vsub.s32 %v2724, %v2726
  %v2728 = vrot.slane %v2718, %v2727
  %v2730 = vunpack.c.l.s4 1966171168
  %v2731 = vunpack.c.0.s8 %v2730
  %v2732 = vlaneseq
  %v2733 = vshrl.u32 %v2732, 7
  %v2734 = vsub.s32 %v2731, %v2733
  %v2735 = vrot.slane %v2719, %v2734
  %v2737 = vunpack.c.l.s4 1966171168
  %v2738 = vunpack.c.0.s8 %v2737
  %v2739 = vlaneseq
  %v2740 = vshrl.u32 %v2739, 7
  %v2741 = vsub.s32 %v2738, %v2740
  %v2742 = vrot.slane %v2720, %v2741
  %v2744 = vunpack.c.l.s4 1966171168
  %v2745 = vunpack.c.0.s8 %v2744
  %v2746 = vlaneseq
  %v2747 = vshrl.u32 %v2746, 7
  %v2748 = vsub.s32 %v2745, %v2747
  %v2749 = vrot.slane %v2721, %v2748
  %v2750 = vcombine.low %v2728, %v2735
  %v2751 = vcombine.low %v2742, %v2749
  %v2753 = vunpack.c.l.s4 1966171168
  %v2754 = vunpack.c.0.s8 %v2753
  %v2755 = vlaneseq
  %v2756 = vshrl.u32 %v2755, 7
  %v2757 = vsub.s32 %v2754, %v2756
  %v2758 = vrot.slane %v2750, %v2757
  %v2760 = vunpack.c.l.s4 1966171168
  %v2761 = vunpack.c.0.s8 %v2760
  %v2762 = vlaneseq
  %v2763 = vshrl.u32 %v2762, 7
  %v2764 = vsub.s32 %v2761, %v2763
  %v2765 = vrot.slane %v2751, %v2764
  %v2766 = vcombine.low %v2758, %v2765
  %v2767 = vcombine.low %v2306, %v2307
  %v2769 = vunpack.c.l.s4 1966171168
  %v2770 = vunpack.c.0.s8 %v2769
  %v2771 = vlaneseq
  %v2772 = vshrl.u32 %v2771, 7
  %v2773 = vsub.s32 %v2770, %v2772
  %v2774 = vrot.slane %v2767, %v2773
  %v2776 = vunpack.c.l.s4 1966171168
  %v2777 = vunpack.c.0.s8 %v2776
  %v2778 = vlaneseq
  %v2779 = vshrl.u32 %v2778, 7
  %v2780 = vsub.s32 %v2777, %v2779
  %v2781 = vrot.slane %v2308, %v2780
  %v2782 = vcombine.low %v2774, %v2781
  %v2784 = vunpack.c.l.s4 1966171168
  %v2785 = vunpack.c.0.s8 %v2784
  %v2786 = vlaneseq
  %v2787 = vshrl.u32 %v2786, 7
  %v2788 = vsub.s32 %v2785, %v2787
  %v2789 = vrot.slane %v2782, %v2788
  %v2790 = vcombine.low %v2309, %v2310
  %v2791 = vcombine.low %v2311, %v2312
  %v2792 = vcombine.low %v2313, %v2314
  %v2793 = vcombine.low %v2315, %v2316
  %v2795 = vunpack.c.l.s4 1966171168
  %v2796 = vunpack.c.0.s8 %v2795
  %v2797 = vlaneseq
  %v2798 = vshrl.u32 %v2797, 7
  %v2799 = vsub.s32 %v2796, %v2798
  %v2800 = vrot.slane %v2790, %v2799
  %v2802 = vunpack.c.l.s4 1966171168
  %v2803 = vunpack.c.0.s8 %v2802
  %v2804 = vlaneseq
  %v2805 = vshrl.u32 %v2804, 7
  %v2806 = vsub.s32 %v2803, %v2805
  %v2807 = vrot.slane %v2791, %v2806
  %v2809 = vunpack.c.l.s4 1966171168
  %v2810 = vunpack.c.0.s8 %v2809
  %v2811 = vlaneseq
  %v2812 = vshrl.u32 %v2811, 7
  %v2813 = vsub.s32 %v2810, %v2812
  %v2814 = vrot.slane %v2792, %v2813
  %v2816 = vunpack.c.l.s4 1966171168
  %v2817 = vunpack.c.0.s8 %v2816
  %v2818 = vlaneseq
  %v2819 = vshrl.u32 %v2818, 7
  %v2820 = vsub.s32 %v2817, %v2819
  %v2821 = vrot.slane %v2793, %v2820
  %v2822 = vcombine.low %v2800, %v2807
  %v2823 = vcombine.low %v2814, %v2821
  %v2825 = vunpack.c.l.s4 1966171168
  %v2826 = vunpack.c.0.s8 %v2825
  %v2827 = vlaneseq
  %v2828 = vshrl.u32 %v2827, 7
  %v2829 = vsub.s32 %v2826, %v2828
  %v2830 = vrot.slane %v2822, %v2829
  %v2832 = vunpack.c.l.s4 1966171168
  %v2833 = vunpack.c.0.s8 %v2832
  %v2834 = vlaneseq
  %v2835 = vshrl.u32 %v2834, 7
  %v2836 = vsub.s32 %v2833, %v2835
  %v2837 = vrot.slane %v2823, %v2836
  %v2838 = vcombine.low %v2830, %v2837
  %v2839 = vcombine.low %v2317, %v2318
  %v2841 = vunpack.c.l.s4 1966171168
  %v2842 = vunpack.c.0.s8 %v2841
  %v2843 = vlaneseq
  %v2844 = vshrl.u32 %v2843, 7
  %v2845 = vsub.s32 %v2842, %v2844
  %v2846 = vrot.slane %v2839, %v2845
  %v2848 = vunpack.c.l.s4 1966171168
  %v2849 = vunpack.c.0.s8 %v2848
  %v2850 = vlaneseq
  %v2851 = vshrl.u32 %v2850, 7
  %v2852 = vsub.s32 %v2849, %v2851
  %v2853 = vrot.slane %v2319, %v2852
  %v2854 = vcombine.low %v2846, %v2853
  %v2856 = vunpack.c.l.s4 1966171168
  %v2857 = vunpack.c.0.s8 %v2856
  %v2858 = vlaneseq
  %v2859 = vshrl.u32 %v2858, 7
  %v2860 = vsub.s32 %v2857, %v2859
  %v2861 = vrot.slane %v2854, %v2860
  %v2862 = vcombine.low %v2320, %v2321
  %v2863 = vcombine.low %v2322, %v2323
  %v2864 = vcombine.low %v2324, %v2325
  %v2865 = vcombine.low %v2326, %v2327
  %v2867 = vunpack.c.l.s4 1966171168
  %v2868 = vunpack.c.0.s8 %v2867
  %v2869 = vlaneseq
  %v2870 = vshrl.u32 %v2869, 7
  %v2871 = vsub.s32 %v2868, %v2870
  %v2872 = vrot.slane %v2862, %v2871
  %v2874 = vunpack.c.l.s4 1966171168
  %v2875 = vunpack.c.0.s8 %v2874
  %v2876 = vlaneseq
  %v2877 = vshrl.u32 %v2876, 7
  %v2878 = vsub.s32 %v2875, %v2877
  %v2879 = vrot.slane %v2863, %v2878
  %v2881 = vunpack.c.l.s4 1966171168
  %v2882 = vunpack.c.0.s8 %v2881
  %v2883 = vlaneseq
  %v2884 = vshrl.u32 %v2883, 7
  %v2885 = vsub.s32 %v2882, %v2884
  %v2886 = vrot.slane %v2864, %v2885
  %v2888 = vunpack.c.l.s4 1966171168
  %v2889 = vunpack.c.0.s8 %v2888
  %v2890 = vlaneseq
  %v2891 = vshrl.u32 %v2890, 7
  %v2892 = vsub.s32 %v2889, %v2891
  %v2893 = vrot.slane %v2865, %v2892
  %v2894 = vcombine.low %v2872, %v2879
  %v2895 = vcombine.low %v2886, %v2893
  %v2897 = vunpack.c.l.s4 1966171168
  %v2898 = vunpack.c.0.s8 %v2897
  %v2899 = vlaneseq
  %v2900 = vshrl.u32 %v2899, 7
  %v2901 = vsub.s32 %v2898, %v2900
  %v2902 = vrot.slane %v2894, %v2901
  %v2904 = vunpack.c.l.s4 1966171168
  %v2905 = vunpack.c.0.s8 %v2904
  %v2906 = vlaneseq
  %v2907 = vshrl.u32 %v2906, 7
  %v2908 = vsub.s32 %v2905, %v2907
  %v2909 = vrot.slane %v2895, %v2908
  %v2910 = vcombine.low %v2902, %v2909
  %v2911 = vcombine.low %v2328, %v2329
  %v2913 = vunpack.c.l.s4 1966171168
  %v2914 = vunpack.c.0.s8 %v2913
  %v2915 = vlaneseq
  %v2916 = vshrl.u32 %v2915, 7
  %v2917 = vsub.s32 %v2914, %v2916
  %v2918 = vrot.slane %v2911, %v2917
  %v2920 = vunpack.c.l.s4 1966171168
  %v2921 = vunpack.c.0.s8 %v2920
  %v2922 = vlaneseq
  %v2923 = vshrl.u32 %v2922, 7
  %v2924 = vsub.s32 %v2921, %v2923
  %v2925 = vrot.slane %v2330, %v2924
  %v2926 = vcombine.low %v2918, %v2925
  %v2928 = vunpack.c.l.s4 1966171168
  %v2929 = vunpack.c.0.s8 %v2928
  %v2930 = vlaneseq
  %v2931 = vshrl.u32 %v2930, 7
  %v2932 = vsub.s32 %v2929, %v2931
  %v2933 = vrot.slane %v2926, %v2932
  %v2934 = vcombine.low %v2331, %v2332
  %v2935 = vcombine.low %v2333, %v2334
  %v2936 = vcombine.low %v2335, %v2336
  %v2937 = vcombine.low %v2337, %v2338
  %v2939 = vunpack.c.l.s4 1966171168
  %v2940 = vunpack.c.0.s8 %v2939
  %v2941 = vlaneseq
  %v2942 = vshrl.u32 %v2941, 7
  %v2943 = vsub.s32 %v2940, %v2942
  %v2944 = vrot.slane %v2934, %v2943
  %v2946 = vunpack.c.l.s4 1966171168
  %v2947 = vunpack.c.0.s8 %v2946
  %v2948 = vlaneseq
  %v2949 = vshrl.u32 %v2948, 7
  %v2950 = vsub.s32 %v2947, %v2949
  %v2951 = vrot.slane %v2935, %v2950
  %v2953 = vunpack.c.l.s4 1966171168
  %v2954 = vunpack.c.0.s8 %v2953
  %v2955 = vlaneseq
  %v2956 = vshrl.u32 %v2955, 7
  %v2957 = vsub.s32 %v2954, %v2956
  %v2958 = vrot.slane %v2936, %v2957
  %v2960 = vunpack.c.l.s4 1966171168
  %v2961 = vunpack.c.0.s8 %v2960
  %v2962 = vlaneseq
  %v2963 = vshrl.u32 %v2962, 7
  %v2964 = vsub.s32 %v2961, %v2963
  %v2965 = vrot.slane %v2937, %v2964
  %v2966 = vcombine.low %v2944, %v2951
  %v2967 = vcombine.low %v2958, %v2965
  %v2969 = vunpack.c.l.s4 1966171168
  %v2970 = vunpack.c.0.s8 %v2969
  %v2971 = vlaneseq
  %v2972 = vshrl.u32 %v2971, 7
  %v2973 = vsub.s32 %v2970, %v2972
  %v2974 = vrot.slane %v2966, %v2973
  %v2976 = vunpack.c.l.s4 1966171168
  %v2977 = vunpack.c.0.s8 %v2976
  %v2978 = vlaneseq
  %v2979 = vshrl.u32 %v2978, 7
  %v2980 = vsub.s32 %v2977, %v2979
  %v2981 = vrot.slane %v2967, %v2980
  %v2982 = vcombine.low %v2974, %v2981
  %v2983 = vcombine.low %v2339, %v2340
  %v2985 = vunpack.c.l.s4 1966171168
  %v2986 = vunpack.c.0.s8 %v2985
  %v2987 = vlaneseq
  %v2988 = vshrl.u32 %v2987, 7
  %v2989 = vsub.s32 %v2986, %v2988
  %v2990 = vrot.slane %v2983, %v2989
  %v2992 = vunpack.c.l.s4 1966171168
  %v2993 = vunpack.c.0.s8 %v2992
  %v2994 = vlaneseq
  %v2995 = vshrl.u32 %v2994, 7
  %v2996 = vsub.s32 %v2993, %v2995
  %v2997 = vrot.slane %v2341, %v2996
  %v2998 = vcombine.low %v2990, %v2997
  %v3000 = vunpack.c.l.s4 1966171168
  %v3001 = vunpack.c.0.s8 %v3000
  %v3002 = vlaneseq
  %v3003 = vshrl.u32 %v3002, 7
  %v3004 = vsub.s32 %v3001, %v3003
  %v3005 = vrot.slane %v2998, %v3004
  %vm3022 = vcmask 261120
  %v3023 = vsel %vm3022, %v2478, -inf
  %vm3024 = vcmask 256000
  %v3025 = vsel %vm3024, %v2501, -inf
  %v3026 = vmax.f32 %v3023, %v3025
  %v3027 = vrot.slane %v3026, 4
  %v3028 = vmax.f32 %v3026, %v3027
  %v3029 = vrot.slane %v3028, 2
  %v3030 = vmax.f32 %v3028, %v3029
  %v3031 = vrot.slane %v3030, 1
  %v3032 = vmax.f32 %v3030, %v3031
  %v3033 = vsel %vm3022, %v2550, -inf
  %v3034 = vsel %vm3024, %v2573, -inf
  %v3035 = vmax.f32 %v3033, %v3034
  %v3036 = vrot.slane %v3035, 4
  %v3037 = vmax.f32 %v3035, %v3036
  %v3038 = vrot.slane %v3037, 2
  %v3039 = vmax.f32 %v3037, %v3038
  %v3040 = vrot.slane %v3039, 1
  %v3041 = vmax.f32 %v3039, %v3040
  %v3042 = vsel %vm3022, %v2622, -inf
  %v3043 = vsel %vm3024, %v2645, -inf
  %v3044 = vmax.f32 %v3042, %v3043
  %v3045 = vrot.slane %v3044, 4
  %v3046 = vmax.f32 %v3044, %v3045
  %v3047 = vrot.slane %v3046, 2
  %v3048 = vmax.f32 %v3046, %v3047
  %v3049 = vrot.slane %v3048, 1
  %v3050 = vmax.f32 %v3048, %v3049
  %v3051 = vsel %vm3022, %v2694, -inf
  %v3052 = vsel %vm3024, %v2717, -inf
  %v3053 = vmax.f32 %v3051, %v3052
  %v3054 = vrot.slane %v3053, 4
  %v3055 = vmax.f32 %v3053, %v3054
  %v3056 = vrot.slane %v3055, 2
  %v3057 = vmax.f32 %v3055, %v3056
  %v3058 = vrot.slane %v3057, 1
  %v3059 = vmax.f32 %v3057, %v3058
  %v3060 = vsel %vm3022, %v2766, -inf
  %v3061 = vsel %vm3024, %v2789, -inf
  %v3062 = vmax.f32 %v3060, %v3061
  %v3063 = vrot.slane %v3062, 4
  %v3064 = vmax.f32 %v3062, %v3063
  %v3065 = vrot.slane %v3064, 2
  %v3066 = vmax.f32 %v3064, %v3065
  %v3067 = vrot.slane %v3066, 1
  %v3068 = vmax.f32 %v3066, %v3067
  %v3069 = vsel %vm3022, %v2838, -inf
  %v3070 = vsel %vm3024, %v2861, -inf
  %v3071 = vmax.f32 %v3069, %v3070
  %v3072 = vrot.slane %v3071, 4
  %v3073 = vmax.f32 %v3071, %v3072
  %v3074 = vrot.slane %v3073, 2
  %v3075 = vmax.f32 %v3073, %v3074
  %v3076 = vrot.slane %v3075, 1
  %v3077 = vmax.f32 %v3075, %v3076
  %v3078 = vsel %vm3022, %v2910, -inf
  %v3079 = vsel %vm3024, %v2933, -inf
  %v3080 = vmax.f32 %v3078, %v3079
  %v3081 = vrot.slane %v3080, 4
  %v3082 = vmax.f32 %v3080, %v3081
  %v3083 = vrot.slane %v3082, 2
  %v3084 = vmax.f32 %v3082, %v3083
  %v3085 = vrot.slane %v3084, 1
  %v3086 = vmax.f32 %v3084, %v3085
  %v3087 = vsel %vm3022, %v2982, -inf
  %v3088 = vsel %vm3024, %v3005, -inf
  %v3089 = vmax.f32 %v3087, %v3088
  %v3090 = vrot.slane %v3089, 4
  %v3091 = vmax.f32 %v3089, %v3090
  %v3092 = vrot.slane %v3091, 2
  %v3093 = vmax.f32 %v3091, %v3092
  %v3094 = vrot.slane %v3093, 1
  %v3095 = vmax.f32 %v3093, %v3094
  %v3096 = vld [vmem:[%s7] sm:$0xff]
  %v3097 = vld [vmem:[%s7 + $0x8] sm:$0xff]
  %v3098 = vld [vmem:[%s7 + $0x10] sm:$0xff]
  %v3099 = vld [vmem:[%s7 + $0x18] sm:$0xff]
  %v3100 = vcombine.low %v2264, %v2265
  %v3101 = vcombine.low %v2266, %v2267
  %v3102 = vcombine.low %v2268, %v2269
  %v3104 = vunpack.c.l.s4 1966171168
  %v3105 = vunpack.c.0.s8 %v3104
  %v3106 = vlaneseq
  %v3107 = vshrl.u32 %v3106, 7
  %v3108 = vsub.s32 %v3105, %v3107
  %v3109 = vrot.slane %v3100, %v3108
  %v3111 = vunpack.c.l.s4 1966171168
  %v3112 = vunpack.c.0.s8 %v3111
  %v3113 = vlaneseq
  %v3114 = vshrl.u32 %v3113, 7
  %v3115 = vsub.s32 %v3112, %v3114
  %v3116 = vrot.slane %v3101, %v3115
  %v3118 = vunpack.c.l.s4 1966171168
  %v3119 = vunpack.c.0.s8 %v3118
  %v3120 = vlaneseq
  %v3121 = vshrl.u32 %v3120, 7
  %v3122 = vsub.s32 %v3119, %v3121
  %v3123 = vrot.slane %v3102, %v3122
  %v3124 = vcombine.low %v2486, %v3109
  %v3125 = vcombine.low %v3116, %v3123
  %v3127 = vunpack.c.l.s4 1966171168
  %v3128 = vunpack.c.0.s8 %v3127
  %v3129 = vlaneseq
  %v3130 = vshrl.u32 %v3129, 7
  %v3131 = vsub.s32 %v3128, %v3130
  %v3132 = vrot.slane %v3124, %v3131
  %v3134 = vunpack.c.l.s4 1966171168
  %v3135 = vunpack.c.0.s8 %v3134
  %v3136 = vlaneseq
  %v3137 = vshrl.u32 %v3136, 7
  %v3138 = vsub.s32 %v3135, %v3137
  %v3139 = vrot.slane %v3125, %v3138
  %v3140 = vcombine.low %v3132, %v3139
  %v3141 = vcombine.low %v2270, %v2271
  %v3142 = vcombine.low %v2272, %v2273
  %v3143 = vcombine.low %v2274, %v2275
  %v3145 = vunpack.c.l.s4 1966171168
  %v3146 = vunpack.c.0.s8 %v3145
  %v3147 = vlaneseq
  %v3148 = vshrl.u32 %v3147, 7
  %v3149 = vsub.s32 %v3146, %v3148
  %v3150 = vrot.slane %v3141, %v3149
  %v3152 = vunpack.c.l.s4 1966171168
  %v3153 = vunpack.c.0.s8 %v3152
  %v3154 = vlaneseq
  %v3155 = vshrl.u32 %v3154, 7
  %v3156 = vsub.s32 %v3153, %v3155
  %v3157 = vrot.slane %v3142, %v3156
  %v3159 = vunpack.c.l.s4 1966171168
  %v3160 = vunpack.c.0.s8 %v3159
  %v3161 = vlaneseq
  %v3162 = vshrl.u32 %v3161, 7
  %v3163 = vsub.s32 %v3160, %v3162
  %v3164 = vrot.slane %v3143, %v3163
  %v3165 = vcombine.low %v3150, %v3157
  %v3166 = vcombine.low %v3164, %v2584
  %v3168 = vunpack.c.l.s4 1966171168
  %v3169 = vunpack.c.0.s8 %v3168
  %v3170 = vlaneseq
  %v3171 = vshrl.u32 %v3170, 7
  %v3172 = vsub.s32 %v3169, %v3171
  %v3173 = vrot.slane %v3165, %v3172
  %v3175 = vunpack.c.l.s4 1966171168
  %v3176 = vunpack.c.0.s8 %v3175
  %v3177 = vlaneseq
  %v3178 = vshrl.u32 %v3177, 7
  %v3179 = vsub.s32 %v3176, %v3178
  %v3180 = vrot.slane %v3166, %v3179
  %v3181 = vcombine.low %v3173, %v3180
  %v3182 = vcombine.low %v2591, %v2598
  %v3183 = vcombine.low %v2605, %v2630
  %v3185 = vunpack.c.l.s4 1966171168
  %v3186 = vunpack.c.0.s8 %v3185
  %v3187 = vlaneseq
  %v3188 = vshrl.u32 %v3187, 7
  %v3189 = vsub.s32 %v3186, %v3188
  %v3190 = vrot.slane %v3182, %v3189
  %v3192 = vunpack.c.l.s4 1966171168
  %v3193 = vunpack.c.0.s8 %v3192
  %v3194 = vlaneseq
  %v3195 = vshrl.u32 %v3194, 7
  %v3196 = vsub.s32 %v3193, %v3195
  %v3197 = vrot.slane %v3183, %v3196
  %v3198 = vcombine.low %v3190, %v3197
  %v3199 = vcombine.low %v2286, %v2287
  %v3200 = vcombine.low %v2288, %v2289
  %v3201 = vcombine.low %v2290, %v2291
  %v3202 = vcombine.low %v2292, %v2293
  %v3204 = vunpack.c.l.s4 1966171168
  %v3205 = vunpack.c.0.s8 %v3204
  %v3206 = vlaneseq
  %v3207 = vshrl.u32 %v3206, 7
  %v3208 = vsub.s32 %v3205, %v3207
  %v3209 = vrot.slane %v3199, %v3208
  %v3211 = vunpack.c.l.s4 1966171168
  %v3212 = vunpack.c.0.s8 %v3211
  %v3213 = vlaneseq
  %v3214 = vshrl.u32 %v3213, 7
  %v3215 = vsub.s32 %v3212, %v3214
  %v3216 = vrot.slane %v3200, %v3215
  %v3218 = vunpack.c.l.s4 1966171168
  %v3219 = vunpack.c.0.s8 %v3218
  %v3220 = vlaneseq
  %v3221 = vshrl.u32 %v3220, 7
  %v3222 = vsub.s32 %v3219, %v3221
  %v3223 = vrot.slane %v3201, %v3222
  %v3225 = vunpack.c.l.s4 1966171168
  %v3226 = vunpack.c.0.s8 %v3225
  %v3227 = vlaneseq
  %v3228 = vshrl.u32 %v3227, 7
  %v3229 = vsub.s32 %v3226, %v3228
  %v3230 = vrot.slane %v3202, %v3229
  %v3231 = vcombine.low %v3209, %v3216
  %v3232 = vcombine.low %v3223, %v3230
  %v3234 = vunpack.c.l.s4 1966171168
  %v3235 = vunpack.c.0.s8 %v3234
  %v3236 = vlaneseq
  %v3237 = vshrl.u32 %v3236, 7
  %v3238 = vsub.s32 %v3235, %v3237
  %v3239 = vrot.slane %v3231, %v3238
  %v3241 = vunpack.c.l.s4 1966171168
  %v3242 = vunpack.c.0.s8 %v3241
  %v3243 = vlaneseq
  %v3244 = vshrl.u32 %v3243, 7
  %v3245 = vsub.s32 %v3242, %v3244
  %v3246 = vrot.slane %v3232, %v3245
  %v3247 = vcombine.low %v3239, %v3246
  %v3248 = vcombine.low %v2294, %v2295
  %v3249 = vcombine.low %v2296, %v2297
  %v3251 = vunpack.c.l.s4 1966171168
  %v3252 = vunpack.c.0.s8 %v3251
  %v3253 = vlaneseq
  %v3254 = vshrl.u32 %v3253, 7
  %v3255 = vsub.s32 %v3252, %v3254
  %v3256 = vrot.slane %v3248, %v3255
  %v3258 = vunpack.c.l.s4 1966171168
  %v3259 = vunpack.c.0.s8 %v3258
  %v3260 = vlaneseq
  %v3261 = vshrl.u32 %v3260, 7
  %v3262 = vsub.s32 %v3259, %v3261
  %v3263 = vrot.slane %v3249, %v3262
  %v3264 = vcombine.low %v3256, %v3263
  %v3266 = vunpack.c.l.s4 1966171168
  %v3267 = vunpack.c.0.s8 %v3266
  %v3268 = vlaneseq
  %v3269 = vshrl.u32 %v3268, 7
  %v3270 = vsub.s32 %v3267, %v3269
  %v3271 = vrot.slane %v3264, %v3270
  %v3272 = vcombine.low %v3271, %v2758
  %v3273 = vcombine.low %v2308, %v2309
  %v3275 = vunpack.c.l.s4 1966171168
  %v3276 = vunpack.c.0.s8 %v3275
  %v3277 = vlaneseq
  %v3278 = vshrl.u32 %v3277, 7
  %v3279 = vsub.s32 %v3276, %v3278
  %v3280 = vrot.slane %v3273, %v3279
  %v3281 = vcombine.low %v2774, %v3280
  %v3283 = vunpack.c.l.s4 1966171168
  %v3284 = vunpack.c.0.s8 %v3283
  %v3285 = vlaneseq
  %v3286 = vshrl.u32 %v3285, 7
  %v3287 = vsub.s32 %v3284, %v3286
  %v3288 = vrot.slane %v3281, %v3287
  %v3289 = vcombine.low %v2765, %v3288
  %v3290 = vcombine.low %v2310, %v2311
  %v3291 = vcombine.low %v2312, %v2313
  %v3292 = vcombine.low %v2314, %v2315
  %v3293 = vcombine.low %v2316, %v2317
  %v3295 = vunpack.c.l.s4 1966171168
  %v3296 = vunpack.c.0.s8 %v3295
  %v3297 = vlaneseq
  %v3298 = vshrl.u32 %v3297, 7
  %v3299 = vsub.s32 %v3296, %v3298
  %v3300 = vrot.slane %v3290, %v3299
  %v3302 = vunpack.c.l.s4 1966171168
  %v3303 = vunpack.c.0.s8 %v3302
  %v3304 = vlaneseq
  %v3305 = vshrl.u32 %v3304, 7
  %v3306 = vsub.s32 %v3303, %v3305
  %v3307 = vrot.slane %v3291, %v3306
  %v3309 = vunpack.c.l.s4 1966171168
  %v3310 = vunpack.c.0.s8 %v3309
  %v3311 = vlaneseq
  %v3312 = vshrl.u32 %v3311, 7
  %v3313 = vsub.s32 %v3310, %v3312
  %v3314 = vrot.slane %v3292, %v3313
  %v3316 = vunpack.c.l.s4 1966171168
  %v3317 = vunpack.c.0.s8 %v3316
  %v3318 = vlaneseq
  %v3319 = vshrl.u32 %v3318, 7
  %v3320 = vsub.s32 %v3317, %v3319
  %v3321 = vrot.slane %v3293, %v3320
  %v3322 = vcombine.low %v3300, %v3307
  %v3323 = vcombine.low %v3314, %v3321
  %v3325 = vunpack.c.l.s4 1966171168
  %v3326 = vunpack.c.0.s8 %v3325
  %v3327 = vlaneseq
  %v3328 = vshrl.u32 %v3327, 7
  %v3329 = vsub.s32 %v3326, %v3328
  %v3330 = vrot.slane %v3322, %v3329
  %v3332 = vunpack.c.l.s4 1966171168
  %v3333 = vunpack.c.0.s8 %v3332
  %v3334 = vlaneseq
  %v3335 = vshrl.u32 %v3334, 7
  %v3336 = vsub.s32 %v3333, %v3335
  %v3337 = vrot.slane %v3323, %v3336
  %v3338 = vcombine.low %v3330, %v3337
  %v3339 = vcombine.low %v2318, %v2319
  %v3341 = vunpack.c.l.s4 1966171168
  %v3342 = vunpack.c.0.s8 %v3341
  %v3343 = vlaneseq
  %v3344 = vshrl.u32 %v3343, 7
  %v3345 = vsub.s32 %v3342, %v3344
  %v3346 = vrot.slane %v3339, %v3345
  %v3347 = vcombine.low %v3346, %v2872
  %v3348 = vcombine.low %v2879, %v2886
  %v3350 = vunpack.c.l.s4 1966171168
  %v3351 = vunpack.c.0.s8 %v3350
  %v3352 = vlaneseq
  %v3353 = vshrl.u32 %v3352, 7
  %v3354 = vsub.s32 %v3351, %v3353
  %v3355 = vrot.slane %v3347, %v3354
  %v3357 = vunpack.c.l.s4 1966171168
  %v3358 = vunpack.c.0.s8 %v3357
  %v3359 = vlaneseq
  %v3360 = vshrl.u32 %v3359, 7
  %v3361 = vsub.s32 %v3358, %v3360
  %v3362 = vrot.slane %v3348, %v3361
  %v3363 = vcombine.low %v3355, %v3362
  %v3364 = vcombine.low %v2330, %v2331
  %v3365 = vcombine.low %v2332, %v2333
  %v3367 = vunpack.c.l.s4 1966171168
  %v3368 = vunpack.c.0.s8 %v3367
  %v3369 = vlaneseq
  %v3370 = vshrl.u32 %v3369, 7
  %v3371 = vsub.s32 %v3368, %v3370
  %v3372 = vrot.slane %v3364, %v3371
  %v3374 = vunpack.c.l.s4 1966171168
  %v3375 = vunpack.c.0.s8 %v3374
  %v3376 = vlaneseq
  %v3377 = vshrl.u32 %v3376, 7
  %v3378 = vsub.s32 %v3375, %v3377
  %v3379 = vrot.slane %v3365, %v3378
  %v3380 = vcombine.low %v2893, %v2918
  %v3381 = vcombine.low %v3372, %v3379
  %v3383 = vunpack.c.l.s4 1966171168
  %v3384 = vunpack.c.0.s8 %v3383
  %v3385 = vlaneseq
  %v3386 = vshrl.u32 %v3385, 7
  %v3387 = vsub.s32 %v3384, %v3386
  %v3388 = vrot.slane %v3380, %v3387
  %v3390 = vunpack.c.l.s4 1966171168
  %v3391 = vunpack.c.0.s8 %v3390
  %v3392 = vlaneseq
  %v3393 = vshrl.u32 %v3392, 7
  %v3394 = vsub.s32 %v3391, %v3393
  %v3395 = vrot.slane %v3381, %v3394
  %v3396 = vcombine.low %v3388, %v3395
  %v3397 = vcombine.low %v2334, %v2335
  %v3398 = vcombine.low %v2336, %v2337
  %v3399 = vcombine.low %v2338, %v2339
  %v3400 = vcombine.low %v2340, %v2341
  %v3402 = vunpack.c.l.s4 1966171168
  %v3403 = vunpack.c.0.s8 %v3402
  %v3404 = vlaneseq
  %v3405 = vshrl.u32 %v3404, 7
  %v3406 = vsub.s32 %v3403, %v3405
  %v3407 = vrot.slane %v3397, %v3406
  %v3409 = vunpack.c.l.s4 1966171168
  %v3410 = vunpack.c.0.s8 %v3409
  %v3411 = vlaneseq
  %v3412 = vshrl.u32 %v3411, 7
  %v3413 = vsub.s32 %v3410, %v3412
  %v3414 = vrot.slane %v3398, %v3413
  %v3416 = vunpack.c.l.s4 1966171168
  %v3417 = vunpack.c.0.s8 %v3416
  %v3418 = vlaneseq
  %v3419 = vshrl.u32 %v3418, 7
  %v3420 = vsub.s32 %v3417, %v3419
  %v3421 = vrot.slane %v3399, %v3420
  %v3423 = vunpack.c.l.s4 1966171168
  %v3424 = vunpack.c.0.s8 %v3423
  %v3425 = vlaneseq
  %v3426 = vshrl.u32 %v3425, 7
  %v3427 = vsub.s32 %v3424, %v3426
  %v3428 = vrot.slane %v3400, %v3427
  %v3429 = vcombine.low %v3407, %v3414
  %v3430 = vcombine.low %v3421, %v3428
  %v3432 = vunpack.c.l.s4 1966171168
  %v3433 = vunpack.c.0.s8 %v3432
  %v3434 = vlaneseq
  %v3435 = vshrl.u32 %v3434, 7
  %v3436 = vsub.s32 %v3433, %v3435
  %v3437 = vrot.slane %v3429, %v3436
  %v3439 = vunpack.c.l.s4 1966171168
  %v3440 = vunpack.c.0.s8 %v3439
  %v3441 = vlaneseq
  %v3442 = vshrl.u32 %v3441, 7
  %v3443 = vsub.s32 %v3440, %v3442
  %v3444 = vrot.slane %v3430, %v3443
  %v3445 = vcombine.low %v3437, %v3444
  %v3446 = vsel %vm3022, %v2478, 0
  %v3448 = vsel %vm3022, %v3140, 0
  %v3450 = vsel %vm3022, %v3181, 0
  %v3452 = vsel %vm3022, %v3198, 0
  %v3454 = vsel %vm3022, %v3247, 0
  %v3456 = vsel %vm3022, %v3272, 0
  %v3458 = vsel %vm3022, %v3289, 0
  %v3460 = vsel %vm3022, %v3338, 0
  %v3462 = vsel %vm3022, %v3363, 0
  %v3464 = vsel %vm3022, %v3396, 0
  %v3466 = vsel %vm3022, %v3445, 0
  %3468 = vmatprep.subr.mxu0 0.0
  %3469 = vmatpush1.msra.mxu0 0.0
  %3470 = vmatprep.subr.mxu0 0.0
  %3471 = vmatpush1.msra.mxu0 0.0
  %3472 = vmatprep.subr.mxu0 0.0
  %3473 = vmatpush1.msra.mxu0 0.0
  %3474 = vmatprep.subr.mxu0 0.0
  %3475 = vmatpush1.msra.mxu0 0.0
  %3476 = vmatprep.subr.mxu0 0.0
  %3477 = vmatpush1.msra.mxu0 0.0
  %3478 = vmatprep.subr.mxu0 0.0
  %3479 = vmatpush1.msra.mxu0 0.0
  %3480 = vmatprep.subr.mxu0 0.0
  %3481 = vmatpush1.msra.mxu0 0.0
  %3482 = vmatprep.subr.mxu0 0.0
  %3483 = vmatpush1.msra.mxu0 0.0
  %3484 = vmatprep.subr.mxu0 0.0
  %3485 = vmatpush1.msra.mxu0 0.0
  %3486 = vmatprep.subr.mxu0 0.0
  %3487 = vmatpush1.msra.mxu0 0.0
  %3488 = vmatprep.subr.mxu0 0.0
  %3489 = vmatpush1.msra.mxu0 0.0
  %3490 = vmatprep.subr.mxu0 0.0
  %3491 = vmatpush1.msra.mxu0 0.0
  %3492 = vmatprep.subr.mxu0 0.0
  %3493 = vmatpush1.msra.mxu0 %v3099
  %3494 = vmatprep.subr.mxu0 0.0
  %3495 = vmatpush1.msra.mxu0 %v3098
  %3496 = vmatprep.subr.mxu0 0.0
  %3497 = vmatpush1.msra.mxu0 %v3097
  %3498 = vmatprep.subr.mxu0 0.0
  %3499 = vmatpush1.msra.mxu0 %v3096
  %3500 = vmatprep.subr.mxu0 0.0
  %3501 = vmatpush2.msra.mxu0 0.0
  %3502 = vmatprep.subr.mxu0 0.0
  %3503 = vmatpush2.msra.mxu0 0.0
  %3504 = vmatprep.subr.mxu0 0.0
  %3505 = vmatpush2.msra.mxu0 0.0
  %3506 = vmatprep.subr.mxu0 0.0
  %3507 = vmatpush2.msra.mxu0 0.0
  %3508 = vmatprep.subr.mxu0 0.0
  %3509 = vmatpush2.msra.mxu0 0.0
  %3510 = vmatprep.subr.mxu0 0.0
  %3511 = vmatpush2.msra.mxu0 0.0
  %3512 = vmatprep.subr.mxu0 0.0
  %3513 = vmatpush2.msra.mxu0 0.0
  %3514 = vmatprep.subr.mxu0 0.0
  %3515 = vmatpush2.msra.mxu0 0.0
  %3516 = vmatprep.subr.mxu0 0.0
  %3517 = vmatpush2.msra.mxu0 0.0
  %3518 = vmatprep.subr.mxu0 0.0
  %3519 = vmatpush2.msra.mxu0 0.0
  %3520 = vmatprep.subr.mxu0 0.0
  %3521 = vmatpush2.msra.mxu0 0.0
  %3522 = vmatprep.subr.mxu0 0.0
  %3523 = vmatpush2.msra.mxu0 0.0
  %3524 = vmatprep.subr.mxu0 0.0
  %3525 = vmatpush2.msra.mxu0 0.0
  %3526 = vmatprep.subr.mxu0 0.0
  %3527 = vmatpush2.msra.mxu0 0.0
  %3528 = vmatprep.subr.mxu0 0.0
  %3529 = vmatpush2.msra.mxu0 0.0
  %3530 = vmatprep.subr.mxu0 0.0
  %3531 = vmatpush2.msra.mxu0 0.0
  %3532 = vmatprep.mubr.f32.mxu0 0.0
  %3533 = vmatmul.mubr.f32.gmra.mxu0 %v3446
  %v3534 = vpop.f32.mrf.mxu0
  %v3535 = vadd.f32 0.0, %v3534
  %v3536 = vpop.f32.mrf.mxu0
  %3537 = vmatprep.mubr.f32.mxu0 0.0
  %3538 = vmatmul.mubr.f32.gmra.mxu0 %v3448
  %v3539 = vpop.f32.mrf.mxu0
  %v3540 = vadd.f32 0.0, %v3539
  %v3541 = vpop.f32.mrf.mxu0
  %3542 = vmatprep.mubr.f32.mxu0 0.0
  %3543 = vmatmul.mubr.f32.gmra.mxu0 %v3450
  %v3544 = vpop.f32.mrf.mxu0
  %v3545 = vadd.f32 0.0, %v3544
  %v3546 = vpop.f32.mrf.mxu0
  %3547 = vmatprep.mubr.f32.mxu0 0.0
  %3548 = vmatmul.mubr.f32.gmra.mxu0 %v3452
  %v3549 = vpop.f32.mrf.mxu0
  %v3550 = vadd.f32 0.0, %v3549
  %v3551 = vpop.f32.mrf.mxu0
  %3552 = vmatprep.mubr.f32.mxu0 0.0
  %3553 = vmatmul.mubr.f32.gmra.mxu0 %v3454
  %v3554 = vpop.f32.mrf.mxu0
  %v3555 = vadd.f32 0.0, %v3554
  %v3556 = vpop.f32.mrf.mxu0
  %3557 = vmatprep.mubr.f32.mxu0 0.0
  %3558 = vmatmul.mubr.f32.gmra.mxu0 %v3456
  %v3559 = vpop.f32.mrf.mxu0
  %v3560 = vadd.f32 0.0, %v3559
  %v3561 = vpop.f32.mrf.mxu0
  %3562 = vmatprep.mubr.f32.mxu0 0.0
  %3563 = vmatmul.mubr.f32.gmra.mxu0 %v3458
  %v3564 = vpop.f32.mrf.mxu0
  %v3565 = vadd.f32 0.0, %v3564
  %v3566 = vpop.f32.mrf.mxu0
  %3567 = vmatprep.mubr.f32.mxu0 0.0
  %3568 = vmatmul.mubr.f32.gmra.mxu0 %v3460
  %v3569 = vpop.f32.mrf.mxu0
  %v3570 = vadd.f32 0.0, %v3569
  %v3571 = vpop.f32.mrf.mxu0
  %3572 = vmatprep.mubr.f32.mxu0 0.0
  %3573 = vmatmul.mubr.f32.gmra.mxu0 %v3462
  %v3574 = vpop.f32.mrf.mxu0
  %v3575 = vadd.f32 0.0, %v3574
  %v3576 = vpop.f32.mrf.mxu0
  %3577 = vmatprep.mubr.f32.mxu0 0.0
  %3578 = vmatmul.mubr.f32.gmra.mxu0 %v3464
  %v3579 = vpop.f32.mrf.mxu0
  %v3580 = vadd.f32 0.0, %v3579
  %v3581 = vpop.f32.mrf.mxu0
  %3582 = vmatprep.mubr.f32.mxu0 0.0
  %3583 = vmatmul.mubr.f32.gmra.mxu0 %v3466
  %v3584 = vpop.f32.mrf.mxu0
  %v3585 = vadd.f32 0.0, %v3584
  %v3586 = vpop.f32.mrf.mxu0
  %3587 = vdwg.mxu0
  %v3599 = vcombine.high %v3535, %v3535
  %v3601 = vunpack.c.l.s4 1966171168
  %v3602 = vunpack.c.0.s8 %v3601
  %v3603 = vlaneseq
  %v3604 = vshrl.u32 %v3603, 7
  %v3605 = vsub.s32 %v3602, %v3604
  %v3606 = vrot.slane %v3535, %v3605
  %v3608 = vunpack.c.l.s4 1966171168
  %v3609 = vunpack.c.0.s8 %v3608
  %v3610 = vlaneseq
  %v3611 = vshrl.u32 %v3610, 7
  %v3612 = vsub.s32 %v3609, %v3611
  %v3613 = vrot.slane %v3599, %v3612
  %v3614 = vcombine.high %v3606, %v3606
  %v3615 = vcombine.high %v3613, %v3613
  %v3617 = vunpack.c.l.s4 1966171168
  %v3618 = vunpack.c.0.s8 %v3617
  %v3619 = vlaneseq
  %v3620 = vshrl.u32 %v3619, 7
  %v3621 = vsub.s32 %v3618, %v3620
  %v3622 = vrot.slane %v3606, %v3621
  %v3624 = vunpack.c.l.s4 1966171168
  %v3625 = vunpack.c.0.s8 %v3624
  %v3626 = vlaneseq
  %v3627 = vshrl.u32 %v3626, 7
  %v3628 = vsub.s32 %v3625, %v3627
  %v3629 = vrot.slane %v3613, %v3628
  %v3631 = vunpack.c.l.s4 1966171168
  %v3632 = vunpack.c.0.s8 %v3631
  %v3633 = vlaneseq
  %v3634 = vshrl.u32 %v3633, 7
  %v3635 = vsub.s32 %v3632, %v3634
  %v3636 = vrot.slane %v3614, %v3635
  %v3638 = vunpack.c.l.s4 1966171168
  %v3639 = vunpack.c.0.s8 %v3638
  %v3640 = vlaneseq
  %v3641 = vshrl.u32 %v3640, 7
  %v3642 = vsub.s32 %v3639, %v3641
  %v3643 = vrot.slane %v3615, %v3642
  %v3644 = vcombine.high %v3622, %v3622
  %v3645 = vcombine.high %v3629, %v3629
  %v3646 = vcombine.high %v3636, %v3636
  %v3647 = vcombine.high %v3643, %v3643
  %v3648 = vcombine.high %v3540, %v3540
  %v3650 = vunpack.c.l.s4 1966171168
  %v3651 = vunpack.c.0.s8 %v3650
  %v3652 = vlaneseq
  %v3653 = vshrl.u32 %v3652, 7
  %v3654 = vsub.s32 %v3651, %v3653
  %v3655 = vrot.slane %v3540, %v3654
  %v3657 = vunpack.c.l.s4 1966171168
  %v3658 = vunpack.c.0.s8 %v3657
  %v3659 = vlaneseq
  %v3660 = vshrl.u32 %v3659, 7
  %v3661 = vsub.s32 %v3658, %v3660
  %v3662 = vrot.slane %v3648, %v3661
  %v3663 = vcombine.high %v3655, %v3655
  %v3664 = vcombine.high %v3662, %v3662
  %v3666 = vunpack.c.l.s4 1966171168
  %v3667 = vunpack.c.0.s8 %v3666
  %v3668 = vlaneseq
  %v3669 = vshrl.u32 %v3668, 7
  %v3670 = vsub.s32 %v3667, %v3669
  %v3671 = vrot.slane %v3655, %v3670
  %v3673 = vunpack.c.l.s4 1966171168
  %v3674 = vunpack.c.0.s8 %v3673
  %v3675 = vlaneseq
  %v3676 = vshrl.u32 %v3675, 7
  %v3677 = vsub.s32 %v3674, %v3676
  %v3678 = vrot.slane %v3662, %v3677
  %v3680 = vunpack.c.l.s4 1966171168
  %v3681 = vunpack.c.0.s8 %v3680
  %v3682 = vlaneseq
  %v3683 = vshrl.u32 %v3682, 7
  %v3684 = vsub.s32 %v3681, %v3683
  %v3685 = vrot.slane %v3663, %v3684
  %v3687 = vunpack.c.l.s4 1966171168
  %v3688 = vunpack.c.0.s8 %v3687
  %v3689 = vlaneseq
  %v3690 = vshrl.u32 %v3689, 7
  %v3691 = vsub.s32 %v3688, %v3690
  %v3692 = vrot.slane %v3664, %v3691
  %v3693 = vcombine.high %v3671, %v3671
  %v3694 = vcombine.high %v3678, %v3678
  %v3695 = vcombine.high %v3685, %v3685
  %v3696 = vcombine.high %v3692, %v3692
  %v3697 = vcombine.high %v3545, %v3545
  %v3699 = vunpack.c.l.s4 1966171168
  %v3700 = vunpack.c.0.s8 %v3699
  %v3701 = vlaneseq
  %v3702 = vshrl.u32 %v3701, 7
  %v3703 = vsub.s32 %v3700, %v3702
  %v3704 = vrot.slane %v3545, %v3703
  %v3706 = vunpack.c.l.s4 1966171168
  %v3707 = vunpack.c.0.s8 %v3706
  %v3708 = vlaneseq
  %v3709 = vshrl.u32 %v3708, 7
  %v3710 = vsub.s32 %v3707, %v3709
  %v3711 = vrot.slane %v3697, %v3710
  %v3712 = vcombine.high %v3704, %v3704
  %v3713 = vcombine.high %v3711, %v3711
  %v3715 = vunpack.c.l.s4 1966171168
  %v3716 = vunpack.c.0.s8 %v3715
  %v3717 = vlaneseq
  %v3718 = vshrl.u32 %v3717, 7
  %v3719 = vsub.s32 %v3716, %v3718
  %v3720 = vrot.slane %v3704, %v3719
  %v3722 = vunpack.c.l.s4 1966171168
  %v3723 = vunpack.c.0.s8 %v3722
  %v3724 = vlaneseq
  %v3725 = vshrl.u32 %v3724, 7
  %v3726 = vsub.s32 %v3723, %v3725
  %v3727 = vrot.slane %v3711, %v3726
  %v3729 = vunpack.c.l.s4 1966171168
  %v3730 = vunpack.c.0.s8 %v3729
  %v3731 = vlaneseq
  %v3732 = vshrl.u32 %v3731, 7
  %v3733 = vsub.s32 %v3730, %v3732
  %v3734 = vrot.slane %v3712, %v3733
  %v3736 = vunpack.c.l.s4 1966171168
  %v3737 = vunpack.c.0.s8 %v3736
  %v3738 = vlaneseq
  %v3739 = vshrl.u32 %v3738, 7
  %v3740 = vsub.s32 %v3737, %v3739
  %v3741 = vrot.slane %v3713, %v3740
  %v3742 = vcombine.high %v3720, %v3720
  %v3743 = vcombine.high %v3727, %v3727
  %v3744 = vcombine.high %v3734, %v3734
  %v3745 = vcombine.high %v3741, %v3741
  %v3746 = vcombine.high %v3550, %v3550
  %v3748 = vunpack.c.l.s4 1966171168
  %v3749 = vunpack.c.0.s8 %v3748
  %v3750 = vlaneseq
  %v3751 = vshrl.u32 %v3750, 7
  %v3752 = vsub.s32 %v3749, %v3751
  %v3753 = vrot.slane %v3550, %v3752
  %v3755 = vunpack.c.l.s4 1966171168
  %v3756 = vunpack.c.0.s8 %v3755
  %v3757 = vlaneseq
  %v3758 = vshrl.u32 %v3757, 7
  %v3759 = vsub.s32 %v3756, %v3758
  %v3760 = vrot.slane %v3746, %v3759
  %v3761 = vcombine.high %v3753, %v3753
  %v3762 = vcombine.high %v3760, %v3760
  %v3764 = vunpack.c.l.s4 1966171168
  %v3765 = vunpack.c.0.s8 %v3764
  %v3766 = vlaneseq
  %v3767 = vshrl.u32 %v3766, 7
  %v3768 = vsub.s32 %v3765, %v3767
  %v3769 = vrot.slane %v3753, %v3768
  %v3771 = vunpack.c.l.s4 1966171168
  %v3772 = vunpack.c.0.s8 %v3771
  %v3773 = vlaneseq
  %v3774 = vshrl.u32 %v3773, 7
  %v3775 = vsub.s32 %v3772, %v3774
  %v3776 = vrot.slane %v3760, %v3775
  %v3778 = vunpack.c.l.s4 1966171168
  %v3779 = vunpack.c.0.s8 %v3778
  %v3780 = vlaneseq
  %v3781 = vshrl.u32 %v3780, 7
  %v3782 = vsub.s32 %v3779, %v3781
  %v3783 = vrot.slane %v3761, %v3782
  %v3785 = vunpack.c.l.s4 1966171168
  %v3786 = vunpack.c.0.s8 %v3785
  %v3787 = vlaneseq
  %v3788 = vshrl.u32 %v3787, 7
  %v3789 = vsub.s32 %v3786, %v3788
  %v3790 = vrot.slane %v3762, %v3789
  %v3791 = vcombine.high %v3769, %v3769
  %v3792 = vcombine.high %v3776, %v3776
  %v3793 = vcombine.high %v3783, %v3783
  %v3794 = vcombine.high %v3790, %v3790
  %v3795 = vcombine.high %v3555, %v3555
  %v3797 = vunpack.c.l.s4 1966171168
  %v3798 = vunpack.c.0.s8 %v3797
  %v3799 = vlaneseq
  %v3800 = vshrl.u32 %v3799, 7
  %v3801 = vsub.s32 %v3798, %v3800
  %v3802 = vrot.slane %v3555, %v3801
  %v3804 = vunpack.c.l.s4 1966171168
  %v3805 = vunpack.c.0.s8 %v3804
  %v3806 = vlaneseq
  %v3807 = vshrl.u32 %v3806, 7
  %v3808 = vsub.s32 %v3805, %v3807
  %v3809 = vrot.slane %v3795, %v3808
  %v3810 = vcombine.high %v3802, %v3802
  %v3811 = vcombine.high %v3809, %v3809
  %v3813 = vunpack.c.l.s4 1966171168
  %v3814 = vunpack.c.0.s8 %v3813
  %v3815 = vlaneseq
  %v3816 = vshrl.u32 %v3815, 7
  %v3817 = vsub.s32 %v3814, %v3816
  %v3818 = vrot.slane %v3802, %v3817
  %v3820 = vunpack.c.l.s4 1966171168
  %v3821 = vunpack.c.0.s8 %v3820
  %v3822 = vlaneseq
  %v3823 = vshrl.u32 %v3822, 7
  %v3824 = vsub.s32 %v3821, %v3823
  %v3825 = vrot.slane %v3809, %v3824
  %v3827 = vunpack.c.l.s4 1966171168
  %v3828 = vunpack.c.0.s8 %v3827
  %v3829 = vlaneseq
  %v3830 = vshrl.u32 %v3829, 7
  %v3831 = vsub.s32 %v3828, %v3830
  %v3832 = vrot.slane %v3810, %v3831
  %v3834 = vunpack.c.l.s4 1966171168
  %v3835 = vunpack.c.0.s8 %v3834
  %v3836 = vlaneseq
  %v3837 = vshrl.u32 %v3836, 7
  %v3838 = vsub.s32 %v3835, %v3837
  %v3839 = vrot.slane %v3811, %v3838
  %v3840 = vcombine.high %v3818, %v3818
  %v3841 = vcombine.high %v3825, %v3825
  %v3842 = vcombine.high %v3832, %v3832
  %v3843 = vcombine.high %v3839, %v3839
  %v3844 = vcombine.high %v3560, %v3560
  %v3846 = vunpack.c.l.s4 1966171168
  %v3847 = vunpack.c.0.s8 %v3846
  %v3848 = vlaneseq
  %v3849 = vshrl.u32 %v3848, 7
  %v3850 = vsub.s32 %v3847, %v3849
  %v3851 = vrot.slane %v3560, %v3850
  %v3853 = vunpack.c.l.s4 1966171168
  %v3854 = vunpack.c.0.s8 %v3853
  %v3855 = vlaneseq
  %v3856 = vshrl.u32 %v3855, 7
  %v3857 = vsub.s32 %v3854, %v3856
  %v3858 = vrot.slane %v3844, %v3857
  %v3859 = vcombine.high %v3851, %v3851
  %v3860 = vcombine.high %v3858, %v3858
  %v3862 = vunpack.c.l.s4 1966171168
  %v3863 = vunpack.c.0.s8 %v3862
  %v3864 = vlaneseq
  %v3865 = vshrl.u32 %v3864, 7
  %v3866 = vsub.s32 %v3863, %v3865
  %v3867 = vrot.slane %v3851, %v3866
  %v3869 = vunpack.c.l.s4 1966171168
  %v3870 = vunpack.c.0.s8 %v3869
  %v3871 = vlaneseq
  %v3872 = vshrl.u32 %v3871, 7
  %v3873 = vsub.s32 %v3870, %v3872
  %v3874 = vrot.slane %v3858, %v3873
  %v3876 = vunpack.c.l.s4 1966171168
  %v3877 = vunpack.c.0.s8 %v3876
  %v3878 = vlaneseq
  %v3879 = vshrl.u32 %v3878, 7
  %v3880 = vsub.s32 %v3877, %v3879
  %v3881 = vrot.slane %v3859, %v3880
  %v3883 = vunpack.c.l.s4 1966171168
  %v3884 = vunpack.c.0.s8 %v3883
  %v3885 = vlaneseq
  %v3886 = vshrl.u32 %v3885, 7
  %v3887 = vsub.s32 %v3884, %v3886
  %v3888 = vrot.slane %v3860, %v3887
  %v3889 = vcombine.high %v3867, %v3867
  %v3890 = vcombine.high %v3874, %v3874
  %v3891 = vcombine.high %v3881, %v3881
  %v3892 = vcombine.high %v3888, %v3888
  %v3893 = vcombine.high %v3565, %v3565
  %v3895 = vunpack.c.l.s4 1966171168
  %v3896 = vunpack.c.0.s8 %v3895
  %v3897 = vlaneseq
  %v3898 = vshrl.u32 %v3897, 7
  %v3899 = vsub.s32 %v3896, %v3898
  %v3900 = vrot.slane %v3565, %v3899
  %v3902 = vunpack.c.l.s4 1966171168
  %v3903 = vunpack.c.0.s8 %v3902
  %v3904 = vlaneseq
  %v3905 = vshrl.u32 %v3904, 7
  %v3906 = vsub.s32 %v3903, %v3905
  %v3907 = vrot.slane %v3893, %v3906
  %v3908 = vcombine.high %v3900, %v3900
  %v3909 = vcombine.high %v3907, %v3907
  %v3911 = vunpack.c.l.s4 1966171168
  %v3912 = vunpack.c.0.s8 %v3911
  %v3913 = vlaneseq
  %v3914 = vshrl.u32 %v3913, 7
  %v3915 = vsub.s32 %v3912, %v3914
  %v3916 = vrot.slane %v3900, %v3915
  %v3918 = vunpack.c.l.s4 1966171168
  %v3919 = vunpack.c.0.s8 %v3918
  %v3920 = vlaneseq
  %v3921 = vshrl.u32 %v3920, 7
  %v3922 = vsub.s32 %v3919, %v3921
  %v3923 = vrot.slane %v3907, %v3922
  %v3925 = vunpack.c.l.s4 1966171168
  %v3926 = vunpack.c.0.s8 %v3925
  %v3927 = vlaneseq
  %v3928 = vshrl.u32 %v3927, 7
  %v3929 = vsub.s32 %v3926, %v3928
  %v3930 = vrot.slane %v3908, %v3929
  %v3932 = vunpack.c.l.s4 1966171168
  %v3933 = vunpack.c.0.s8 %v3932
  %v3934 = vlaneseq
  %v3935 = vshrl.u32 %v3934, 7
  %v3936 = vsub.s32 %v3933, %v3935
  %v3937 = vrot.slane %v3909, %v3936
  %v3938 = vcombine.high %v3916, %v3916
  %v3939 = vcombine.high %v3923, %v3923
  %v3940 = vcombine.high %v3930, %v3930
  %v3941 = vcombine.high %v3937, %v3937
  %v3942 = vcombine.high %v3570, %v3570
  %v3944 = vunpack.c.l.s4 1966171168
  %v3945 = vunpack.c.0.s8 %v3944
  %v3946 = vlaneseq
  %v3947 = vshrl.u32 %v3946, 7
  %v3948 = vsub.s32 %v3945, %v3947
  %v3949 = vrot.slane %v3570, %v3948
  %v3951 = vunpack.c.l.s4 1966171168
  %v3952 = vunpack.c.0.s8 %v3951
  %v3953 = vlaneseq
  %v3954 = vshrl.u32 %v3953, 7
  %v3955 = vsub.s32 %v3952, %v3954
  %v3956 = vrot.slane %v3942, %v3955
  %v3957 = vcombine.high %v3949, %v3949
  %v3958 = vcombine.high %v3956, %v3956
  %v3960 = vunpack.c.l.s4 1966171168
  %v3961 = vunpack.c.0.s8 %v3960
  %v3962 = vlaneseq
  %v3963 = vshrl.u32 %v3962, 7
  %v3964 = vsub.s32 %v3961, %v3963
  %v3965 = vrot.slane %v3949, %v3964
  %v3967 = vunpack.c.l.s4 1966171168
  %v3968 = vunpack.c.0.s8 %v3967
  %v3969 = vlaneseq
  %v3970 = vshrl.u32 %v3969, 7
  %v3971 = vsub.s32 %v3968, %v3970
  %v3972 = vrot.slane %v3956, %v3971
  %v3974 = vunpack.c.l.s4 1966171168
  %v3975 = vunpack.c.0.s8 %v3974
  %v3976 = vlaneseq
  %v3977 = vshrl.u32 %v3976, 7
  %v3978 = vsub.s32 %v3975, %v3977
  %v3979 = vrot.slane %v3957, %v3978
  %v3981 = vunpack.c.l.s4 1966171168
  %v3982 = vunpack.c.0.s8 %v3981
  %v3983 = vlaneseq
  %v3984 = vshrl.u32 %v3983, 7
  %v3985 = vsub.s32 %v3982, %v3984
  %v3986 = vrot.slane %v3958, %v3985
  %v3987 = vcombine.high %v3965, %v3965
  %v3988 = vcombine.high %v3972, %v3972
  %v3989 = vcombine.high %v3979, %v3979
  %v3990 = vcombine.high %v3986, %v3986
  %v3991 = vcombine.high %v3575, %v3575
  %v3993 = vunpack.c.l.s4 1966171168
  %v3994 = vunpack.c.0.s8 %v3993
  %v3995 = vlaneseq
  %v3996 = vshrl.u32 %v3995, 7
  %v3997 = vsub.s32 %v3994, %v3996
  %v3998 = vrot.slane %v3575, %v3997
  %v4000 = vunpack.c.l.s4 1966171168
  %v4001 = vunpack.c.0.s8 %v4000
  %v4002 = vlaneseq
  %v4003 = vshrl.u32 %v4002, 7
  %v4004 = vsub.s32 %v4001, %v4003
  %v4005 = vrot.slane %v3991, %v4004
  %v4006 = vcombine.high %v3998, %v3998
  %v4007 = vcombine.high %v4005, %v4005
  %v4009 = vunpack.c.l.s4 1966171168
  %v4010 = vunpack.c.0.s8 %v4009
  %v4011 = vlaneseq
  %v4012 = vshrl.u32 %v4011, 7
  %v4013 = vsub.s32 %v4010, %v4012
  %v4014 = vrot.slane %v3998, %v4013
  %v4016 = vunpack.c.l.s4 1966171168
  %v4017 = vunpack.c.0.s8 %v4016
  %v4018 = vlaneseq
  %v4019 = vshrl.u32 %v4018, 7
  %v4020 = vsub.s32 %v4017, %v4019
  %v4021 = vrot.slane %v4005, %v4020
  %v4023 = vunpack.c.l.s4 1966171168
  %v4024 = vunpack.c.0.s8 %v4023
  %v4025 = vlaneseq
  %v4026 = vshrl.u32 %v4025, 7
  %v4027 = vsub.s32 %v4024, %v4026
  %v4028 = vrot.slane %v4006, %v4027
  %v4030 = vunpack.c.l.s4 1966171168
  %v4031 = vunpack.c.0.s8 %v4030
  %v4032 = vlaneseq
  %v4033 = vshrl.u32 %v4032, 7
  %v4034 = vsub.s32 %v4031, %v4033
  %v4035 = vrot.slane %v4007, %v4034
  %v4036 = vcombine.high %v4014, %v4014
  %v4037 = vcombine.high %v4021, %v4021
  %v4038 = vcombine.high %v4028, %v4028
  %v4039 = vcombine.high %v4035, %v4035
  %v4040 = vcombine.high %v3580, %v3580
  %v4042 = vunpack.c.l.s4 1966171168
  %v4043 = vunpack.c.0.s8 %v4042
  %v4044 = vlaneseq
  %v4045 = vshrl.u32 %v4044, 7
  %v4046 = vsub.s32 %v4043, %v4045
  %v4047 = vrot.slane %v3580, %v4046
  %v4049 = vunpack.c.l.s4 1966171168
  %v4050 = vunpack.c.0.s8 %v4049
  %v4051 = vlaneseq
  %v4052 = vshrl.u32 %v4051, 7
  %v4053 = vsub.s32 %v4050, %v4052
  %v4054 = vrot.slane %v4040, %v4053
  %v4055 = vcombine.high %v4047, %v4047
  %v4056 = vcombine.high %v4054, %v4054
  %v4058 = vunpack.c.l.s4 1966171168
  %v4059 = vunpack.c.0.s8 %v4058
  %v4060 = vlaneseq
  %v4061 = vshrl.u32 %v4060, 7
  %v4062 = vsub.s32 %v4059, %v4061
  %v4063 = vrot.slane %v4047, %v4062
  %v4065 = vunpack.c.l.s4 1966171168
  %v4066 = vunpack.c.0.s8 %v4065
  %v4067 = vlaneseq
  %v4068 = vshrl.u32 %v4067, 7
  %v4069 = vsub.s32 %v4066, %v4068
  %v4070 = vrot.slane %v4054, %v4069
  %v4072 = vunpack.c.l.s4 1966171168
  %v4073 = vunpack.c.0.s8 %v4072
  %v4074 = vlaneseq
  %v4075 = vshrl.u32 %v4074, 7
  %v4076 = vsub.s32 %v4073, %v4075
  %v4077 = vrot.slane %v4055, %v4076
  %v4079 = vunpack.c.l.s4 1966171168
  %v4080 = vunpack.c.0.s8 %v4079
  %v4081 = vlaneseq
  %v4082 = vshrl.u32 %v4081, 7
  %v4083 = vsub.s32 %v4080, %v4082
  %v4084 = vrot.slane %v4056, %v4083
  %v4085 = vcombine.high %v4063, %v4063
  %v4086 = vcombine.high %v4070, %v4070
  %v4087 = vcombine.high %v4077, %v4077
  %v4088 = vcombine.high %v4084, %v4084
  %v4089 = vcombine.high %v3585, %v3585
  %v4091 = vunpack.c.l.s4 1966171168
  %v4092 = vunpack.c.0.s8 %v4091
  %v4093 = vlaneseq
  %v4094 = vshrl.u32 %v4093, 7
  %v4095 = vsub.s32 %v4092, %v4094
  %v4096 = vrot.slane %v3585, %v4095
  %v4098 = vunpack.c.l.s4 1966171168
  %v4099 = vunpack.c.0.s8 %v4098
  %v4100 = vlaneseq
  %v4101 = vshrl.u32 %v4100, 7
  %v4102 = vsub.s32 %v4099, %v4101
  %v4103 = vrot.slane %v4089, %v4102
  %v4104 = vcombine.high %v4096, %v4096
  %v4105 = vcombine.high %v4103, %v4103
  %v4107 = vunpack.c.l.s4 1966171168
  %v4108 = vunpack.c.0.s8 %v4107
  %v4109 = vlaneseq
  %v4110 = vshrl.u32 %v4109, 7
  %v4111 = vsub.s32 %v4108, %v4110
  %v4112 = vrot.slane %v4096, %v4111
  %v4114 = vunpack.c.l.s4 1966171168
  %v4115 = vunpack.c.0.s8 %v4114
  %v4116 = vlaneseq
  %v4117 = vshrl.u32 %v4116, 7
  %v4118 = vsub.s32 %v4115, %v4117
  %v4119 = vrot.slane %v4103, %v4118
  %v4121 = vunpack.c.l.s4 1966171168
  %v4122 = vunpack.c.0.s8 %v4121
  %v4123 = vlaneseq
  %v4124 = vshrl.u32 %v4123, 7
  %v4125 = vsub.s32 %v4122, %v4124
  %v4126 = vrot.slane %v4104, %v4125
  %v4128 = vunpack.c.l.s4 1966171168
  %v4129 = vunpack.c.0.s8 %v4128
  %v4130 = vlaneseq
  %v4131 = vshrl.u32 %v4130, 7
  %v4132 = vsub.s32 %v4129, %v4131
  %v4133 = vrot.slane %v4105, %v4132
  %v4134 = vcombine.high %v4112, %v4112
  %v4135 = vcombine.high %v4119, %v4119
  %v4136 = vcombine.high %v4126, %v4126
  %v4137 = vcombine.high %v4133, %v4133
  %4210 = vrot.lane.b32.xlu0 %v3636, 112
  %v4211 = vpop.permute.xlu0 %4210
  %4212 = vrot.lane.b32.xlu0 %v3644, 112
  %v4213 = vpop.permute.xlu0 %4212
  %4214 = vrot.lane.b32.xlu0 %v3646, 112
  %v4215 = vpop.permute.xlu0 %4214
  %4216 = vrot.lane.b32.xlu0 %v3629, 112
  %v4217 = vpop.permute.xlu0 %4216
  %4218 = vrot.lane.b32.xlu0 %v3643, 112
  %v4219 = vpop.permute.xlu0 %4218
  %4220 = vrot.lane.b32.xlu0 %v3645, 112
  %v4221 = vpop.permute.xlu0 %4220
  %4222 = vrot.lane.b32.xlu0 %v3647, 112
  %v4223 = vpop.permute.xlu0 %4222
  %4224 = vrot.lane.b32.xlu0 %v3671, 112
  %v4225 = vpop.permute.xlu0 %4224
  %4226 = vrot.lane.b32.xlu0 %v3685, 112
  %v4227 = vpop.permute.xlu0 %4226
  %4228 = vrot.lane.b32.xlu0 %v3678, 112
  %v4229 = vpop.permute.xlu0 %4228
  %4230 = vrot.lane.b32.xlu0 %v3692, 112
  %v4231 = vpop.permute.xlu0 %4230
  %4232 = vrot.lane.b32.xlu0 %v3694, 112
  %v4233 = vpop.permute.xlu0 %4232
  %4234 = vrot.lane.b32.xlu0 %v3696, 112
  %v4235 = vpop.permute.xlu0 %4234
  %4236 = vrot.lane.b32.xlu0 %v3720, 112
  %v4237 = vpop.permute.xlu0 %4236
  %4238 = vrot.lane.b32.xlu0 %v3734, 112
  %v4239 = vpop.permute.xlu0 %4238
  %4240 = vrot.lane.b32.xlu0 %v3742, 112
  %v4241 = vpop.permute.xlu0 %4240
  %4242 = vrot.lane.b32.xlu0 %v3744, 112
  %v4243 = vpop.permute.xlu0 %4242
  %4244 = vrot.lane.b32.xlu0 %v3727, 112
  %v4245 = vpop.permute.xlu0 %4244
  %4246 = vrot.lane.b32.xlu0 %v3745, 112
  %v4247 = vpop.permute.xlu0 %4246
  %4248 = vrot.lane.b32.xlu0 %v3769, 112
  %v4249 = vpop.permute.xlu0 %4248
  %4250 = vrot.lane.b32.xlu0 %v3783, 112
  %v4251 = vpop.permute.xlu0 %4250
  %4252 = vrot.lane.b32.xlu0 %v3791, 112
  %v4253 = vpop.permute.xlu0 %4252
  %4254 = vrot.lane.b32.xlu0 %v3793, 112
  %v4255 = vpop.permute.xlu0 %4254
  %4256 = vrot.lane.b32.xlu0 %v3776, 112
  %v4257 = vpop.permute.xlu0 %4256
  %4258 = vrot.lane.b32.xlu0 %v3790, 112
  %v4259 = vpop.permute.xlu0 %4258
  %4260 = vrot.lane.b32.xlu0 %v3792, 112
  %v4261 = vpop.permute.xlu0 %4260
  %4262 = vrot.lane.b32.xlu0 %v3794, 112
  %v4263 = vpop.permute.xlu0 %4262
  %4264 = vrot.lane.b32.xlu0 %v3840, 112
  %v4265 = vpop.permute.xlu0 %4264
  %4266 = vrot.lane.b32.xlu0 %v3842, 112
  %v4267 = vpop.permute.xlu0 %4266
  %4268 = vrot.lane.b32.xlu0 %v3825, 112
  %v4269 = vpop.permute.xlu0 %4268
  %4270 = vrot.lane.b32.xlu0 %v3839, 112
  %v4271 = vpop.permute.xlu0 %4270
  %4272 = vrot.lane.b32.xlu0 %v3841, 112
  %v4273 = vpop.permute.xlu0 %4272
  %4274 = vrot.lane.b32.xlu0 %v3843, 112
  %v4275 = vpop.permute.xlu0 %4274
  %4276 = vrot.lane.b32.xlu0 %v3867, 112
  %v4277 = vpop.permute.xlu0 %4276
  %4278 = vrot.lane.b32.xlu0 %v3881, 112
  %v4279 = vpop.permute.xlu0 %4278
  %4280 = vrot.lane.b32.xlu0 %v3889, 112
  %v4281 = vpop.permute.xlu0 %4280
  %4282 = vrot.lane.b32.xlu0 %v3888, 112
  %v4283 = vpop.permute.xlu0 %4282
  %4284 = vrot.lane.b32.xlu0 %v3890, 112
  %v4285 = vpop.permute.xlu0 %4284
  %4286 = vrot.lane.b32.xlu0 %v3892, 112
  %v4287 = vpop.permute.xlu0 %4286
  %4288 = vrot.lane.b32.xlu0 %v3916, 112
  %v4289 = vpop.permute.xlu0 %4288
  %4290 = vrot.lane.b32.xlu0 %v3930, 112
  %v4291 = vpop.permute.xlu0 %4290
  %4292 = vrot.lane.b32.xlu0 %v3938, 112
  %v4293 = vpop.permute.xlu0 %4292
  %4294 = vrot.lane.b32.xlu0 %v3940, 112
  %v4295 = vpop.permute.xlu0 %4294
  %4296 = vrot.lane.b32.xlu0 %v3923, 112
  %v4297 = vpop.permute.xlu0 %4296
  %4298 = vrot.lane.b32.xlu0 %v3937, 112
  %v4299 = vpop.permute.xlu0 %4298
  %4300 = vrot.lane.b32.xlu0 %v3965, 112
  %v4301 = vpop.permute.xlu0 %4300
  %4302 = vrot.lane.b32.xlu0 %v3979, 112
  %v4303 = vpop.permute.xlu0 %4302
  %4304 = vrot.lane.b32.xlu0 %v3987, 112
  %v4305 = vpop.permute.xlu0 %4304
  %4306 = vrot.lane.b32.xlu0 %v3989, 112
  %v4307 = vpop.permute.xlu0 %4306
  %4308 = vrot.lane.b32.xlu0 %v3972, 112
  %v4309 = vpop.permute.xlu0 %4308
  %4310 = vrot.lane.b32.xlu0 %v3986, 112
  %v4311 = vpop.permute.xlu0 %4310
  %4312 = vrot.lane.b32.xlu0 %v3988, 112
  %v4313 = vpop.permute.xlu0 %4312
  %4314 = vrot.lane.b32.xlu0 %v3990, 112
  %v4315 = vpop.permute.xlu0 %4314
  %4316 = vrot.lane.b32.xlu0 %v4014, 112
  %v4317 = vpop.permute.xlu0 %4316
  %4318 = vrot.lane.b32.xlu0 %v4038, 112
  %v4319 = vpop.permute.xlu0 %4318
  %4320 = vrot.lane.b32.xlu0 %v4021, 112
  %v4321 = vpop.permute.xlu0 %4320
  %4322 = vrot.lane.b32.xlu0 %v4035, 112
  %v4323 = vpop.permute.xlu0 %4322
  %4324 = vrot.lane.b32.xlu0 %v4037, 112
  %v4325 = vpop.permute.xlu0 %4324
  %4326 = vrot.lane.b32.xlu0 %v4039, 112
  %v4327 = vpop.permute.xlu0 %4326
  %4328 = vrot.lane.b32.xlu0 %v4063, 112
  %v4329 = vpop.permute.xlu0 %4328
  %4330 = vrot.lane.b32.xlu0 %v4077, 112
  %v4331 = vpop.permute.xlu0 %4330
  %4332 = vrot.lane.b32.xlu0 %v4085, 112
  %v4333 = vpop.permute.xlu0 %4332
  %4334 = vrot.lane.b32.xlu0 %v4087, 112
  %v4335 = vpop.permute.xlu0 %4334
  %4336 = vrot.lane.b32.xlu0 %v4086, 112
  %v4337 = vpop.permute.xlu0 %4336
  %4338 = vrot.lane.b32.xlu0 %v4088, 112
  %v4339 = vpop.permute.xlu0 %4338
  %4340 = vrot.lane.b32.xlu0 %v4112, 112
  %v4341 = vpop.permute.xlu0 %4340
  %4342 = vrot.lane.b32.xlu0 %v4126, 112
  %v4343 = vpop.permute.xlu0 %4342
  %4344 = vrot.lane.b32.xlu0 %v4134, 112
  %v4345 = vpop.permute.xlu0 %4344
  %4346 = vrot.lane.b32.xlu0 %v4136, 112
  %v4347 = vpop.permute.xlu0 %4346
  %4348 = vrot.lane.b32.xlu0 %v4119, 112
  %v4349 = vpop.permute.xlu0 %4348
  %4350 = vrot.lane.b32.xlu0 %v4133, 112
  %v4351 = vpop.permute.xlu0 %4350
  %4352 = vrot.lane.b32.xlu0 %v4135, 112
  %v4353 = vpop.permute.xlu0 %4352
  %v4426 = vadd.f32 %v3622, %v4211
  %v4427 = vadd.f32 %v3636, %v4213
  %v4428 = vadd.f32 %v3644, %v4215
  %v4429 = vadd.f32 %v3646, %v4217
  %v4430 = vadd.f32 %v3629, %v4219
  %v4431 = vadd.f32 %v3643, %v4221
  %v4432 = vadd.f32 %v3645, %v4223
  %v4433 = vadd.f32 %v3647, %v4225
  %v4434 = vadd.f32 %v3671, %v4227
  %v4435 = vadd.f32 %v3695, %v4229
  %v4436 = vadd.f32 %v3678, %v4231
  %v4437 = vadd.f32 %v3692, %v4233
  %v4438 = vadd.f32 %v3694, %v4235
  %v4439 = vadd.f32 %v3696, %v4237
  %v4440 = vadd.f32 %v3720, %v4239
  %v4441 = vadd.f32 %v3734, %v4241
  %v4442 = vadd.f32 %v3742, %v4243
  %v4443 = vadd.f32 %v3744, %v4245
  %v4444 = vadd.f32 %v3743, %v4247
  %v4445 = vadd.f32 %v3745, %v4249
  %v4446 = vadd.f32 %v3769, %v4251
  %v4447 = vadd.f32 %v3783, %v4253
  %v4448 = vadd.f32 %v3791, %v4255
  %v4449 = vadd.f32 %v3793, %v4257
  %v4450 = vadd.f32 %v3776, %v4259
  %v4451 = vadd.f32 %v3790, %v4261
  %v4452 = vadd.f32 %v3792, %v4263
  %v4453 = vadd.f32 %v3832, %v4265
  %v4454 = vadd.f32 %v3840, %v4267
  %v4455 = vadd.f32 %v3842, %v4269
  %v4456 = vadd.f32 %v3825, %v4271
  %v4457 = vadd.f32 %v3839, %v4273
  %v4458 = vadd.f32 %v3841, %v4275
  %v4459 = vadd.f32 %v3843, %v4277
  %v4460 = vadd.f32 %v3867, %v4279
  %v4461 = vadd.f32 %v3881, %v4281
  %v4462 = vadd.f32 %v3874, %v4283
  %v4463 = vadd.f32 %v3888, %v4285
  %v4464 = vadd.f32 %v3890, %v4287
  %v4465 = vadd.f32 %v3892, %v4289
  %v4466 = vadd.f32 %v3916, %v4291
  %v4467 = vadd.f32 %v3930, %v4293
  %v4468 = vadd.f32 %v3938, %v4295
  %v4469 = vadd.f32 %v3940, %v4297
  %v4470 = vadd.f32 %v3923, %v4299
  %v4471 = vadd.f32 %v3941, %v4301
  %v4472 = vadd.f32 %v3965, %v4303
  %v4473 = vadd.f32 %v3979, %v4305
  %v4474 = vadd.f32 %v3987, %v4307
  %v4475 = vadd.f32 %v3989, %v4309
  %v4476 = vadd.f32 %v3972, %v4311
  %v4477 = vadd.f32 %v3986, %v4313
  %v4478 = vadd.f32 %v3988, %v4315
  %v4479 = vadd.f32 %v3990, %v4317
  %v4480 = vadd.f32 %v4036, %v4319
  %v4481 = vadd.f32 %v4038, %v4321
  %v4482 = vadd.f32 %v4021, %v4323
  %v4483 = vadd.f32 %v4035, %v4325
  %v4484 = vadd.f32 %v4037, %v4327
  %v4485 = vadd.f32 %v4039, %v4329
  %v4486 = vadd.f32 %v4063, %v4331
  %v4487 = vadd.f32 %v4077, %v4333
  %v4488 = vadd.f32 %v4085, %v4335
  %v4489 = vadd.f32 %v4084, %v4337
  %v4490 = vadd.f32 %v4086, %v4339
  %v4491 = vadd.f32 %v4088, %v4341
  %v4492 = vadd.f32 %v4112, %v4343
  %v4493 = vadd.f32 %v4126, %v4345
  %v4494 = vadd.f32 %v4134, %v4347
  %v4495 = vadd.f32 %v4136, %v4349
  %v4496 = vadd.f32 %v4119, %v4351
  %v4497 = vadd.f32 %v4133, %v4353
  %4498 = vrot.lane.b32.xlu0 %v3644, 96
  %v4499 = vpop.permute.xlu0 %4498
  %4500 = vrot.lane.b32.xlu0 %v3646, 96
  %v4501 = vpop.permute.xlu0 %4500
  %4502 = vrot.lane.b32.xlu0 %v3629, 96
  %v4503 = vpop.permute.xlu0 %4502
  %4504 = vrot.lane.b32.xlu0 %v3643, 96
  %v4505 = vpop.permute.xlu0 %4504
  %4506 = vrot.lane.b32.xlu0 %v3645, 96
  %v4507 = vpop.permute.xlu0 %4506
  %4508 = vrot.lane.b32.xlu0 %v3647, 96
  %v4509 = vpop.permute.xlu0 %4508
  %4510 = vrot.lane.b32.xlu0 %v3671, 96
  %v4511 = vpop.permute.xlu0 %4510
  %4512 = vrot.lane.b32.xlu0 %v3685, 96
  %v4513 = vpop.permute.xlu0 %4512
  %4514 = vrot.lane.b32.xlu0 %v3693, 96
  %v4515 = vpop.permute.xlu0 %4514
  %4516 = vrot.lane.b32.xlu0 %v3692, 96
  %v4517 = vpop.permute.xlu0 %4516
  %4518 = vrot.lane.b32.xlu0 %v3694, 96
  %v4519 = vpop.permute.xlu0 %4518
  %4520 = vrot.lane.b32.xlu0 %v3696, 96
  %v4521 = vpop.permute.xlu0 %4520
  %4522 = vrot.lane.b32.xlu0 %v3720, 96
  %v4523 = vpop.permute.xlu0 %4522
  %4524 = vrot.lane.b32.xlu0 %v3734, 96
  %v4525 = vpop.permute.xlu0 %4524
  %4526 = vrot.lane.b32.xlu0 %v3742, 96
  %v4527 = vpop.permute.xlu0 %4526
  %4528 = vrot.lane.b32.xlu0 %v3744, 96
  %v4529 = vpop.permute.xlu0 %4528
  %4530 = vrot.lane.b32.xlu0 %v3727, 96
  %v4531 = vpop.permute.xlu0 %4530
  %4532 = vrot.lane.b32.xlu0 %v3741, 96
  %v4533 = vpop.permute.xlu0 %4532
  %4534 = vrot.lane.b32.xlu0 %v3769, 96
  %v4535 = vpop.permute.xlu0 %4534
  %4536 = vrot.lane.b32.xlu0 %v3783, 96
  %v4537 = vpop.permute.xlu0 %4536
  %4538 = vrot.lane.b32.xlu0 %v3791, 96
  %v4539 = vpop.permute.xlu0 %4538
  %4540 = vrot.lane.b32.xlu0 %v3793, 96
  %v4541 = vpop.permute.xlu0 %4540
  %4542 = vrot.lane.b32.xlu0 %v3776, 96
  %v4543 = vpop.permute.xlu0 %4542
  %4544 = vrot.lane.b32.xlu0 %v3790, 96
  %v4545 = vpop.permute.xlu0 %4544
  %4546 = vrot.lane.b32.xlu0 %v3792, 96
  %v4547 = vpop.permute.xlu0 %4546
  %4548 = vrot.lane.b32.xlu0 %v3794, 96
  %v4549 = vpop.permute.xlu0 %4548
  %4550 = vrot.lane.b32.xlu0 %v3818, 96
  %v4551 = vpop.permute.xlu0 %4550
  %4552 = vrot.lane.b32.xlu0 %v3842, 96
  %v4553 = vpop.permute.xlu0 %4552
  %4554 = vrot.lane.b32.xlu0 %v3825, 96
  %v4555 = vpop.permute.xlu0 %4554
  %4556 = vrot.lane.b32.xlu0 %v3839, 96
  %v4557 = vpop.permute.xlu0 %4556
  %4558 = vrot.lane.b32.xlu0 %v3841, 96
  %v4559 = vpop.permute.xlu0 %4558
  %4560 = vrot.lane.b32.xlu0 %v3843, 96
  %v4561 = vpop.permute.xlu0 %4560
  %4562 = vrot.lane.b32.xlu0 %v3867, 96
  %v4563 = vpop.permute.xlu0 %4562
  %4564 = vrot.lane.b32.xlu0 %v3881, 96
  %v4565 = vpop.permute.xlu0 %4564
  %4566 = vrot.lane.b32.xlu0 %v3889, 96
  %v4567 = vpop.permute.xlu0 %4566
  %4568 = vrot.lane.b32.xlu0 %v3891, 96
  %v4569 = vpop.permute.xlu0 %4568
  %4570 = vrot.lane.b32.xlu0 %v3890, 96
  %v4571 = vpop.permute.xlu0 %4570
  %4572 = vrot.lane.b32.xlu0 %v3892, 96
  %v4573 = vpop.permute.xlu0 %4572
  %4574 = vrot.lane.b32.xlu0 %v3916, 96
  %v4575 = vpop.permute.xlu0 %4574
  %4576 = vrot.lane.b32.xlu0 %v3930, 96
  %v4577 = vpop.permute.xlu0 %4576
  %4578 = vrot.lane.b32.xlu0 %v3938, 96
  %v4579 = vpop.permute.xlu0 %4578
  %4580 = vrot.lane.b32.xlu0 %v3940, 96
  %v4581 = vpop.permute.xlu0 %4580
  %4582 = vrot.lane.b32.xlu0 %v3923, 96
  %v4583 = vpop.permute.xlu0 %4582
  %4584 = vrot.lane.b32.xlu0 %v3937, 96
  %v4585 = vpop.permute.xlu0 %4584
  %4586 = vrot.lane.b32.xlu0 %v3939, 96
  %v4587 = vpop.permute.xlu0 %4586
  %4588 = vrot.lane.b32.xlu0 %v3979, 96
  %v4589 = vpop.permute.xlu0 %4588
  %4590 = vrot.lane.b32.xlu0 %v3987, 96
  %v4591 = vpop.permute.xlu0 %4590
  %4592 = vrot.lane.b32.xlu0 %v3989, 96
  %v4593 = vpop.permute.xlu0 %4592
  %4594 = vrot.lane.b32.xlu0 %v3972, 96
  %v4595 = vpop.permute.xlu0 %4594
  %4596 = vrot.lane.b32.xlu0 %v3986, 96
  %v4597 = vpop.permute.xlu0 %4596
  %4598 = vrot.lane.b32.xlu0 %v3988, 96
  %v4599 = vpop.permute.xlu0 %4598
  %4600 = vrot.lane.b32.xlu0 %v3990, 96
  %v4601 = vpop.permute.xlu0 %4600
  %4602 = vrot.lane.b32.xlu0 %v4014, 96
  %v4603 = vpop.permute.xlu0 %4602
  %4604 = vrot.lane.b32.xlu0 %v4028, 96
  %v4605 = vpop.permute.xlu0 %4604
  %4606 = vrot.lane.b32.xlu0 %v4021, 96
  %v4607 = vpop.permute.xlu0 %4606
  %4608 = vrot.lane.b32.xlu0 %v4035, 96
  %v4609 = vpop.permute.xlu0 %4608
  %4610 = vrot.lane.b32.xlu0 %v4037, 96
  %v4611 = vpop.permute.xlu0 %4610
  %4612 = vrot.lane.b32.xlu0 %v4039, 96
  %v4613 = vpop.permute.xlu0 %4612
  %4614 = vrot.lane.b32.xlu0 %v4063, 96
  %v4615 = vpop.permute.xlu0 %4614
  %4616 = vrot.lane.b32.xlu0 %v4077, 96
  %v4617 = vpop.permute.xlu0 %4616
  %4618 = vrot.lane.b32.xlu0 %v4085, 96
  %v4619 = vpop.permute.xlu0 %4618
  %4620 = vrot.lane.b32.xlu0 %v4087, 96
  %v4621 = vpop.permute.xlu0 %4620
  %4622 = vrot.lane.b32.xlu0 %v4070, 96
  %v4623 = vpop.permute.xlu0 %4622
  %4624 = vrot.lane.b32.xlu0 %v4088, 96
  %v4625 = vpop.permute.xlu0 %4624
  %4626 = vrot.lane.b32.xlu0 %v4112, 96
  %v4627 = vpop.permute.xlu0 %4626
  %4628 = vrot.lane.b32.xlu0 %v4126, 96
  %v4629 = vpop.permute.xlu0 %4628
  %4630 = vrot.lane.b32.xlu0 %v4134, 96
  %v4631 = vpop.permute.xlu0 %4630
  %4632 = vrot.lane.b32.xlu0 %v4136, 96
  %v4633 = vpop.permute.xlu0 %4632
  %4634 = vrot.lane.b32.xlu0 %v4119, 96
  %v4635 = vpop.permute.xlu0 %4634
  %4636 = vrot.lane.b32.xlu0 %v4133, 96
  %v4637 = vpop.permute.xlu0 %4636
  %4638 = vrot.lane.b32.xlu0 %v4135, 96
  %v4639 = vpop.permute.xlu0 %4638
  %4640 = vrot.lane.b32.xlu0 %v4137, 96
  %v4641 = vpop.permute.xlu0 %4640
  %v4714 = vadd.f32 %v4426, %v4499
  %v4715 = vadd.f32 %v4427, %v4501
  %v4716 = vadd.f32 %v4428, %v4503
  %v4717 = vadd.f32 %v4429, %v4505
  %v4718 = vadd.f32 %v4430, %v4507
  %v4719 = vadd.f32 %v4431, %v4509
  %v4720 = vadd.f32 %v4432, %v4511
  %v4721 = vadd.f32 %v4433, %v4513
  %v4722 = vadd.f32 %v4434, %v4515
  %v4723 = vadd.f32 %v4435, %v4517
  %v4724 = vadd.f32 %v4436, %v4519
  %v4725 = vadd.f32 %v4437, %v4521
  %v4726 = vadd.f32 %v4438, %v4523
  %v4727 = vadd.f32 %v4439, %v4525
  %v4728 = vadd.f32 %v4440, %v4527
  %v4729 = vadd.f32 %v4441, %v4529
  %v4730 = vadd.f32 %v4442, %v4531
  %v4731 = vadd.f32 %v4443, %v4533
  %v4732 = vadd.f32 %v4444, %v4535
  %v4733 = vadd.f32 %v4445, %v4537
  %v4734 = vadd.f32 %v4446, %v4539
  %v4735 = vadd.f32 %v4447, %v4541
  %v4736 = vadd.f32 %v4448, %v4543
  %v4737 = vadd.f32 %v4449, %v4545
  %v4738 = vadd.f32 %v4450, %v4547
  %v4739 = vadd.f32 %v4451, %v4549
  %v4740 = vadd.f32 %v4452, %v4551
  %v4741 = vadd.f32 %v4453, %v4553
  %v4742 = vadd.f32 %v4454, %v4555
  %v4743 = vadd.f32 %v4455, %v4557
  %v4744 = vadd.f32 %v4456, %v4559
  %v4745 = vadd.f32 %v4457, %v4561
  %v4746 = vadd.f32 %v4458, %v4563
  %v4747 = vadd.f32 %v4459, %v4565
  %v4748 = vadd.f32 %v4460, %v4567
  %v4749 = vadd.f32 %v4461, %v4569
  %v4750 = vadd.f32 %v4462, %v4571
  %v4751 = vadd.f32 %v4463, %v4573
  %v4752 = vadd.f32 %v4464, %v4575
  %v4753 = vadd.f32 %v4465, %v4577
  %v4754 = vadd.f32 %v4466, %v4579
  %v4755 = vadd.f32 %v4467, %v4581
  %v4756 = vadd.f32 %v4468, %v4583
  %v4757 = vadd.f32 %v4469, %v4585
  %v4758 = vadd.f32 %v4470, %v4587
  %v4759 = vadd.f32 %v4471, %v4589
  %v4760 = vadd.f32 %v4472, %v4591
  %v4761 = vadd.f32 %v4473, %v4593
  %v4762 = vadd.f32 %v4474, %v4595
  %v4763 = vadd.f32 %v4475, %v4597
  %v4764 = vadd.f32 %v4476, %v4599
  %v4765 = vadd.f32 %v4477, %v4601
  %v4766 = vadd.f32 %v4478, %v4603
  %v4767 = vadd.f32 %v4479, %v4605
  %v4768 = vadd.f32 %v4480, %v4607
  %v4769 = vadd.f32 %v4481, %v4609
  %v4770 = vadd.f32 %v4482, %v4611
  %v4771 = vadd.f32 %v4483, %v4613
  %v4772 = vadd.f32 %v4484, %v4615
  %v4773 = vadd.f32 %v4485, %v4617
  %v4774 = vadd.f32 %v4486, %v4619
  %v4775 = vadd.f32 %v4487, %v4621
  %v4776 = vadd.f32 %v4488, %v4623
  %v4777 = vadd.f32 %v4489, %v4625
  %v4778 = vadd.f32 %v4490, %v4627
  %v4779 = vadd.f32 %v4491, %v4629
  %v4780 = vadd.f32 %v4492, %v4631
  %v4781 = vadd.f32 %v4493, %v4633
  %v4782 = vadd.f32 %v4494, %v4635
  %v4783 = vadd.f32 %v4495, %v4637
  %v4784 = vadd.f32 %v4496, %v4639
  %v4785 = vadd.f32 %v4497, %v4641
  %v4786 = vld [vmem:[%s8] sm:$0x1]
  %v4788 = vlaneseq
  %v4789 = vshrl.u32 %v4788, 7
  %v4790 = vsub.s32 0, %v4789
  %v4791 = vrot.slane %v4786, %v4790
  %v4792 = vcombine.high %v4791, %v4791
  %v4794 = vunpack.c.l.s4 1966171168
  %v4795 = vunpack.c.0.s8 %v4794
  %v4796 = vlaneseq
  %v4797 = vshrl.u32 %v4796, 7
  %v4798 = vsub.s32 %v4795, %v4797
  %v4799 = vrot.slane %v4791, %v4798
  %v4801 = vunpack.c.l.s4 1966171168
  %v4802 = vunpack.c.0.s8 %v4801
  %v4803 = vlaneseq
  %v4804 = vshrl.u32 %v4803, 7
  %v4805 = vsub.s32 %v4802, %v4804
  %v4806 = vrot.slane %v4792, %v4805
  %v4807 = vcombine.high %v4799, %v4799
  %v4808 = vcombine.high %v4806, %v4806
  %v4810 = vunpack.c.l.s4 1966171168
  %v4811 = vunpack.c.0.s8 %v4810
  %v4812 = vlaneseq
  %v4813 = vshrl.u32 %v4812, 7
  %v4814 = vsub.s32 %v4811, %v4813
  %v4815 = vrot.slane %v4799, %v4814
  %v4817 = vunpack.c.l.s4 1966171168
  %v4818 = vunpack.c.0.s8 %v4817
  %v4819 = vlaneseq
  %v4820 = vshrl.u32 %v4819, 7
  %v4821 = vsub.s32 %v4818, %v4820
  %v4822 = vrot.slane %v4806, %v4821
  %v4824 = vunpack.c.l.s4 1966171168
  %v4825 = vunpack.c.0.s8 %v4824
  %v4826 = vlaneseq
  %v4827 = vshrl.u32 %v4826, 7
  %v4828 = vsub.s32 %v4825, %v4827
  %v4829 = vrot.slane %v4807, %v4828
  %v4831 = vunpack.c.l.s4 1966171168
  %v4832 = vunpack.c.0.s8 %v4831
  %v4833 = vlaneseq
  %v4834 = vshrl.u32 %v4833, 7
  %v4835 = vsub.s32 %v4832, %v4834
  %v4836 = vrot.slane %v4808, %v4835
  %v4837 = vcombine.high %v4815, %v4815
  %v4838 = vcombine.high %v4822, %v4822
  %v4839 = vcombine.high %v4829, %v4829
  %v4840 = vcombine.high %v4836, %v4836
  %v4849 = vmul.f32 %v4714, %v4815
  %v4850 = vmul.f32 %v4715, %v4829
  %v4851 = vmul.f32 %v4716, %v4837
  %v4852 = vmul.f32 %v4717, %v4839
  %v4853 = vmul.f32 %v4718, %v4822
  %v4854 = vmul.f32 %v4719, %v4836
  %v4855 = vmul.f32 %v4720, %v4838
  %v4856 = vmul.f32 %v4721, %v4840
  %v4857 = vmul.f32 %v4722, %v4815
  %v4858 = vmul.f32 %v4723, %v4815
  %v4859 = vmul.f32 %v4724, %v4829
  %v4860 = vmul.f32 %v4725, %v4837
  %v4861 = vmul.f32 %v4726, %v4839
  %v4862 = vmul.f32 %v4727, %v4822
  %v4863 = vmul.f32 %v4728, %v4836
  %v4864 = vmul.f32 %v4729, %v4838
  %v4865 = vmul.f32 %v4730, %v4840
  %v4866 = vmul.f32 %v4731, %v4815
  %v4867 = vmul.f32 %v4732, %v4815
  %v4868 = vmul.f32 %v4733, %v4829
  %v4869 = vmul.f32 %v4734, %v4837
  %v4870 = vmul.f32 %v4735, %v4839
  %v4871 = vmul.f32 %v4736, %v4822
  %v4872 = vmul.f32 %v4737, %v4836
  %v4873 = vmul.f32 %v4738, %v4838
  %v4874 = vmul.f32 %v4739, %v4840
  %v4875 = vmul.f32 %v4740, %v4815
  %v4876 = vmul.f32 %v4741, %v4815
  %v4877 = vmul.f32 %v4742, %v4829
  %v4878 = vmul.f32 %v4743, %v4837
  %v4879 = vmul.f32 %v4744, %v4839
  %v4880 = vmul.f32 %v4745, %v4822
  %v4881 = vmul.f32 %v4746, %v4836
  %v4882 = vmul.f32 %v4747, %v4838
  %v4883 = vmul.f32 %v4748, %v4840
  %v4884 = vmul.f32 %v4749, %v4815
  %v4885 = vmul.f32 %v4750, %v4815
  %v4886 = vmul.f32 %v4751, %v4829
  %v4887 = vmul.f32 %v4752, %v4837
  %v4888 = vmul.f32 %v4753, %v4839
  %v4889 = vmul.f32 %v4754, %v4822
  %v4890 = vmul.f32 %v4755, %v4836
  %v4891 = vmul.f32 %v4756, %v4838
  %v4892 = vmul.f32 %v4757, %v4840
  %v4893 = vmul.f32 %v4758, %v4815
  %v4894 = vmul.f32 %v4759, %v4815
  %v4895 = vmul.f32 %v4760, %v4829
  %v4896 = vmul.f32 %v4761, %v4837
  %v4897 = vmul.f32 %v4762, %v4839
  %v4898 = vmul.f32 %v4763, %v4822
  %v4899 = vmul.f32 %v4764, %v4836
  %v4900 = vmul.f32 %v4765, %v4838
  %v4901 = vmul.f32 %v4766, %v4840
  %v4902 = vmul.f32 %v4767, %v4815
  %v4903 = vmul.f32 %v4768, %v4815
  %v4904 = vmul.f32 %v4769, %v4829
  %v4905 = vmul.f32 %v4770, %v4837
  %v4906 = vmul.f32 %v4771, %v4839
  %v4907 = vmul.f32 %v4772, %v4822
  %v4908 = vmul.f32 %v4773, %v4836
  %v4909 = vmul.f32 %v4774, %v4838
  %v4910 = vmul.f32 %v4775, %v4840
  %v4911 = vmul.f32 %v4776, %v4815
  %v4912 = vmul.f32 %v4777, %v4815
  %v4913 = vmul.f32 %v4778, %v4829
  %v4914 = vmul.f32 %v4779, %v4837
  %v4915 = vmul.f32 %v4780, %v4839
  %v4916 = vmul.f32 %v4781, %v4822
  %v4917 = vmul.f32 %v4782, %v4836
  %v4918 = vmul.f32 %v4783, %v4838
  %v4919 = vmul.f32 %v4784, %v4840
  %v4920 = vmul.f32 %v4785, %v4815
  %v4921 = vld [vmem:[%s9] sm:$0x1]
  %v4923 = vlaneseq
  %v4924 = vshrl.u32 %v4923, 7
  %v4925 = vsub.s32 0, %v4924
  %v4926 = vrot.slane %v4921, %v4925
  %v4927 = vcombine.high %v4926, %v4926
  %v4929 = vunpack.c.l.s4 1966171168
  %v4930 = vunpack.c.0.s8 %v4929
  %v4931 = vlaneseq
  %v4932 = vshrl.u32 %v4931, 7
  %v4933 = vsub.s32 %v4930, %v4932
  %v4934 = vrot.slane %v4926, %v4933
  %v4936 = vunpack.c.l.s4 1966171168
  %v4937 = vunpack.c.0.s8 %v4936
  %v4938 = vlaneseq
  %v4939 = vshrl.u32 %v4938, 7
  %v4940 = vsub.s32 %v4937, %v4939
  %v4941 = vrot.slane %v4927, %v4940
  %v4942 = vcombine.high %v4934, %v4934
  %v4943 = vcombine.high %v4941, %v4941
  %v4945 = vunpack.c.l.s4 1966171168
  %v4946 = vunpack.c.0.s8 %v4945
  %v4947 = vlaneseq
  %v4948 = vshrl.u32 %v4947, 7
  %v4949 = vsub.s32 %v4946, %v4948
  %v4950 = vrot.slane %v4934, %v4949
  %v4952 = vunpack.c.l.s4 1966171168
  %v4953 = vunpack.c.0.s8 %v4952
  %v4954 = vlaneseq
  %v4955 = vshrl.u32 %v4954, 7
  %v4956 = vsub.s32 %v4953, %v4955
  %v4957 = vrot.slane %v4941, %v4956
  %v4959 = vunpack.c.l.s4 1966171168
  %v4960 = vunpack.c.0.s8 %v4959
  %v4961 = vlaneseq
  %v4962 = vshrl.u32 %v4961, 7
  %v4963 = vsub.s32 %v4960, %v4962
  %v4964 = vrot.slane %v4942, %v4963
  %v4966 = vunpack.c.l.s4 1966171168
  %v4967 = vunpack.c.0.s8 %v4966
  %v4968 = vlaneseq
  %v4969 = vshrl.u32 %v4968, 7
  %v4970 = vsub.s32 %v4967, %v4969
  %v4971 = vrot.slane %v4943, %v4970
  %v4972 = vcombine.high %v4950, %v4950
  %v4973 = vcombine.high %v4957, %v4957
  %v4974 = vcombine.high %v4964, %v4964
  %v4975 = vcombine.high %v4971, %v4971
  %v4984 = vadd.f32 %v4849, %v4950
  %v4985 = vadd.f32 %v4850, %v4964
  %v4986 = vadd.f32 %v4851, %v4972
  %v4987 = vadd.f32 %v4852, %v4974
  %v4988 = vadd.f32 %v4853, %v4957
  %v4989 = vadd.f32 %v4854, %v4971
  %v4990 = vadd.f32 %v4855, %v4973
  %v4991 = vadd.f32 %v4856, %v4975
  %v4992 = vadd.f32 %v4857, %v4950
  %v4993 = vadd.f32 %v4858, %v4950
  %v4994 = vadd.f32 %v4859, %v4964
  %v4995 = vadd.f32 %v4860, %v4972
  %v4996 = vadd.f32 %v4861, %v4974
  %v4997 = vadd.f32 %v4862, %v4957
  %v4998 = vadd.f32 %v4863, %v4971
  %v4999 = vadd.f32 %v4864, %v4973
  %v5000 = vadd.f32 %v4865, %v4975
  %v5001 = vadd.f32 %v4866, %v4950
  %v5002 = vadd.f32 %v4867, %v4950
  %v5003 = vadd.f32 %v4868, %v4964
  %v5004 = vadd.f32 %v4869, %v4972
  %v5005 = vadd.f32 %v4870, %v4974
  %v5006 = vadd.f32 %v4871, %v4957
  %v5007 = vadd.f32 %v4872, %v4971
  %v5008 = vadd.f32 %v4873, %v4973
  %v5009 = vadd.f32 %v4874, %v4975
  %v5010 = vadd.f32 %v4875, %v4950
  %v5011 = vadd.f32 %v4876, %v4950
  %v5012 = vadd.f32 %v4877, %v4964
  %v5013 = vadd.f32 %v4878, %v4972
  %v5014 = vadd.f32 %v4879, %v4974
  %v5015 = vadd.f32 %v4880, %v4957
  %v5016 = vadd.f32 %v4881, %v4971
  %v5017 = vadd.f32 %v4882, %v4973
  %v5018 = vadd.f32 %v4883, %v4975
  %v5019 = vadd.f32 %v4884, %v4950
  %v5020 = vadd.f32 %v4885, %v4950
  %v5021 = vadd.f32 %v4886, %v4964
  %v5022 = vadd.f32 %v4887, %v4972
  %v5023 = vadd.f32 %v4888, %v4974
  %v5024 = vadd.f32 %v4889, %v4957
  %v5025 = vadd.f32 %v4890, %v4971
  %v5026 = vadd.f32 %v4891, %v4973
  %v5027 = vadd.f32 %v4892, %v4975
  %v5028 = vadd.f32 %v4893, %v4950
  %v5029 = vadd.f32 %v4894, %v4950
  %v5030 = vadd.f32 %v4895, %v4964
  %v5031 = vadd.f32 %v4896, %v4972
  %v5032 = vadd.f32 %v4897, %v4974
  %v5033 = vadd.f32 %v4898, %v4957
  %v5034 = vadd.f32 %v4899, %v4971
  %v5035 = vadd.f32 %v4900, %v4973
  %v5036 = vadd.f32 %v4901, %v4975
  %v5037 = vadd.f32 %v4902, %v4950
  %v5038 = vadd.f32 %v4903, %v4950
  %v5039 = vadd.f32 %v4904, %v4964
  %v5040 = vadd.f32 %v4905, %v4972
  %v5041 = vadd.f32 %v4906, %v4974
  %v5042 = vadd.f32 %v4907, %v4957
  %v5043 = vadd.f32 %v4908, %v4971
  %v5044 = vadd.f32 %v4909, %v4973
  %v5045 = vadd.f32 %v4910, %v4975
  %v5046 = vadd.f32 %v4911, %v4950
  %v5047 = vadd.f32 %v4912, %v4950
  %v5048 = vadd.f32 %v4913, %v4964
  %v5049 = vadd.f32 %v4914, %v4972
  %v5050 = vadd.f32 %v4915, %v4974
  %v5051 = vadd.f32 %v4916, %v4957
  %v5052 = vadd.f32 %v4917, %v4971
  %v5053 = vadd.f32 %v4918, %v4973
  %v5054 = vadd.f32 %v4919, %v4975
  %v5055 = vadd.f32 %v4920, %v4950
  %v5056 = vmax.f32 %v4984, 0.0
  %v5057 = vmax.f32 %v4985, 0.0
  %v5058 = vmax.f32 %v4986, 0.0
  %v5059 = vmax.f32 %v4987, 0.0
  %v5060 = vmax.f32 %v4988, 0.0
  %v5061 = vmax.f32 %v4989, 0.0
  %v5062 = vmax.f32 %v4990, 0.0
  %v5063 = vmax.f32 %v4991, 0.0
  %v5064 = vmax.f32 %v4992, 0.0
  %v5065 = vmax.f32 %v4993, 0.0
  %v5066 = vmax.f32 %v4994, 0.0
  %v5067 = vmax.f32 %v4995, 0.0
  %v5068 = vmax.f32 %v4996, 0.0
  %v5069 = vmax.f32 %v4997, 0.0
  %v5070 = vmax.f32 %v4998, 0.0
  %v5071 = vmax.f32 %v4999, 0.0
  %v5072 = vmax.f32 %v5000, 0.0
  %v5073 = vmax.f32 %v5001, 0.0
  %v5074 = vmax.f32 %v5002, 0.0
  %v5075 = vmax.f32 %v5003, 0.0
  %v5076 = vmax.f32 %v5004, 0.0
  %v5077 = vmax.f32 %v5005, 0.0
  %v5078 = vmax.f32 %v5006, 0.0
  %v5079 = vmax.f32 %v5007, 0.0
  %v5080 = vmax.f32 %v5008, 0.0
  %v5081 = vmax.f32 %v5009, 0.0
  %v5082 = vmax.f32 %v5010, 0.0
  %v5083 = vmax.f32 %v5011, 0.0
  %v5084 = vmax.f32 %v5012, 0.0
  %v5085 = vmax.f32 %v5013, 0.0
  %v5086 = vmax.f32 %v5014, 0.0
  %v5087 = vmax.f32 %v5015, 0.0
  %v5088 = vmax.f32 %v5016, 0.0
  %v5089 = vmax.f32 %v5017, 0.0
  %v5090 = vmax.f32 %v5018, 0.0
  %v5091 = vmax.f32 %v5019, 0.0
  %v5092 = vmax.f32 %v5020, 0.0
  %v5093 = vmax.f32 %v5021, 0.0
  %v5094 = vmax.f32 %v5022, 0.0
  %v5095 = vmax.f32 %v5023, 0.0
  %v5096 = vmax.f32 %v5024, 0.0
  %v5097 = vmax.f32 %v5025, 0.0
  %v5098 = vmax.f32 %v5026, 0.0
  %v5099 = vmax.f32 %v5027, 0.0
  %v5100 = vmax.f32 %v5028, 0.0
  %v5101 = vmax.f32 %v5029, 0.0
  %v5102 = vmax.f32 %v5030, 0.0
  %v5103 = vmax.f32 %v5031, 0.0
  %v5104 = vmax.f32 %v5032, 0.0
  %v5105 = vmax.f32 %v5033, 0.0
  %v5106 = vmax.f32 %v5034, 0.0
  %v5107 = vmax.f32 %v5035, 0.0
  %v5108 = vmax.f32 %v5036, 0.0
  %v5109 = vmax.f32 %v5037, 0.0
  %v5110 = vmax.f32 %v5038, 0.0
  %v5111 = vmax.f32 %v5039, 0.0
  %v5112 = vmax.f32 %v5040, 0.0
  %v5113 = vmax.f32 %v5041, 0.0
  %v5114 = vmax.f32 %v5042, 0.0
  %v5115 = vmax.f32 %v5043, 0.0
  %v5116 = vmax.f32 %v5044, 0.0
  %v5117 = vmax.f32 %v5045, 0.0
  %v5118 = vmax.f32 %v5046, 0.0
  %v5119 = vmax.f32 %v5047, 0.0
  %v5120 = vmax.f32 %v5048, 0.0
  %v5121 = vmax.f32 %v5049, 0.0
  %v5122 = vmax.f32 %v5050, 0.0
  %v5123 = vmax.f32 %v5051, 0.0
  %v5124 = vmax.f32 %v5052, 0.0
  %v5125 = vmax.f32 %v5053, 0.0
  %v5126 = vmax.f32 %v5054, 0.0
  %v5127 = vmax.f32 %v5055, 0.0
  %v5200 = vcombine.low %v5056, %v5057
  %v5201 = vcombine.low %v5058, %v5059
  %v5202 = vcombine.low %v5060, %v5061
  %v5203 = vcombine.low %v5062, %v5063
  %v5205 = vunpack.c.l.s4 1966171168
  %v5206 = vunpack.c.0.s8 %v5205
  %v5207 = vlaneseq
  %v5208 = vshrl.u32 %v5207, 7
  %v5209 = vsub.s32 %v5206, %v5208
  %v5210 = vrot.slane %v5200, %v5209
  %v5212 = vunpack.c.l.s4 1966171168
  %v5213 = vunpack.c.0.s8 %v5212
  %v5214 = vlaneseq
  %v5215 = vshrl.u32 %v5214, 7
  %v5216 = vsub.s32 %v5213, %v5215
  %v5217 = vrot.slane %v5201, %v5216
  %v5219 = vunpack.c.l.s4 1966171168
  %v5220 = vunpack.c.0.s8 %v5219
  %v5221 = vlaneseq
  %v5222 = vshrl.u32 %v5221, 7
  %v5223 = vsub.s32 %v5220, %v5222
  %v5224 = vrot.slane %v5202, %v5223
  %v5226 = vunpack.c.l.s4 1966171168
  %v5227 = vunpack.c.0.s8 %v5226
  %v5228 = vlaneseq
  %v5229 = vshrl.u32 %v5228, 7
  %v5230 = vsub.s32 %v5227, %v5229
  %v5231 = vrot.slane %v5203, %v5230
  %v5232 = vcombine.low %v5210, %v5217
  %v5233 = vcombine.low %v5224, %v5231
  %v5235 = vunpack.c.l.s4 1966171168
  %v5236 = vunpack.c.0.s8 %v5235
  %v5237 = vlaneseq
  %v5238 = vshrl.u32 %v5237, 7
  %v5239 = vsub.s32 %v5236, %v5238
  %v5240 = vrot.slane %v5232, %v5239
  %v5242 = vunpack.c.l.s4 1966171168
  %v5243 = vunpack.c.0.s8 %v5242
  %v5244 = vlaneseq
  %v5245 = vshrl.u32 %v5244, 7
  %v5246 = vsub.s32 %v5243, %v5245
  %v5247 = vrot.slane %v5233, %v5246
  %v5248 = vcombine.low %v5240, %v5247
  %v5250 = vunpack.c.l.s4 1966171168
  %v5251 = vunpack.c.0.s8 %v5250
  %v5252 = vlaneseq
  %v5253 = vshrl.u32 %v5252, 7
  %v5254 = vsub.s32 %v5251, %v5253
  %v5255 = vrot.slane %v5064, %v5254
  %v5257 = vunpack.c.l.s4 1966171168
  %v5258 = vunpack.c.0.s8 %v5257
  %v5259 = vlaneseq
  %v5260 = vshrl.u32 %v5259, 7
  %v5261 = vsub.s32 %v5258, %v5260
  %v5262 = vrot.slane %v5255, %v5261
  %v5263 = vcombine.low %v5065, %v5066
  %v5264 = vcombine.low %v5067, %v5068
  %v5265 = vcombine.low %v5069, %v5070
  %v5266 = vcombine.low %v5071, %v5072
  %v5268 = vunpack.c.l.s4 1966171168
  %v5269 = vunpack.c.0.s8 %v5268
  %v5270 = vlaneseq
  %v5271 = vshrl.u32 %v5270, 7
  %v5272 = vsub.s32 %v5269, %v5271
  %v5273 = vrot.slane %v5263, %v5272
  %v5275 = vunpack.c.l.s4 1966171168
  %v5276 = vunpack.c.0.s8 %v5275
  %v5277 = vlaneseq
  %v5278 = vshrl.u32 %v5277, 7
  %v5279 = vsub.s32 %v5276, %v5278
  %v5280 = vrot.slane %v5264, %v5279
  %v5282 = vunpack.c.l.s4 1966171168
  %v5283 = vunpack.c.0.s8 %v5282
  %v5284 = vlaneseq
  %v5285 = vshrl.u32 %v5284, 7
  %v5286 = vsub.s32 %v5283, %v5285
  %v5287 = vrot.slane %v5265, %v5286
  %v5289 = vunpack.c.l.s4 1966171168
  %v5290 = vunpack.c.0.s8 %v5289
  %v5291 = vlaneseq
  %v5292 = vshrl.u32 %v5291, 7
  %v5293 = vsub.s32 %v5290, %v5292
  %v5294 = vrot.slane %v5266, %v5293
  %v5295 = vcombine.low %v5273, %v5280
  %v5296 = vcombine.low %v5287, %v5294
  %v5298 = vunpack.c.l.s4 1966171168
  %v5299 = vunpack.c.0.s8 %v5298
  %v5300 = vlaneseq
  %v5301 = vshrl.u32 %v5300, 7
  %v5302 = vsub.s32 %v5299, %v5301
  %v5303 = vrot.slane %v5295, %v5302
  %v5305 = vunpack.c.l.s4 1966171168
  %v5306 = vunpack.c.0.s8 %v5305
  %v5307 = vlaneseq
  %v5308 = vshrl.u32 %v5307, 7
  %v5309 = vsub.s32 %v5306, %v5308
  %v5310 = vrot.slane %v5296, %v5309
  %v5311 = vcombine.low %v5303, %v5310
  %v5313 = vunpack.c.l.s4 1966171168
  %v5314 = vunpack.c.0.s8 %v5313
  %v5315 = vlaneseq
  %v5316 = vshrl.u32 %v5315, 7
  %v5317 = vsub.s32 %v5314, %v5316
  %v5318 = vrot.slane %v5073, %v5317
  %v5320 = vunpack.c.l.s4 1966171168
  %v5321 = vunpack.c.0.s8 %v5320
  %v5322 = vlaneseq
  %v5323 = vshrl.u32 %v5322, 7
  %v5324 = vsub.s32 %v5321, %v5323
  %v5325 = vrot.slane %v5318, %v5324
  %v5326 = vcombine.low %v5074, %v5075
  %v5327 = vcombine.low %v5076, %v5077
  %v5328 = vcombine.low %v5078, %v5079
  %v5329 = vcombine.low %v5080, %v5081
  %v5331 = vunpack.c.l.s4 1966171168
  %v5332 = vunpack.c.0.s8 %v5331
  %v5333 = vlaneseq
  %v5334 = vshrl.u32 %v5333, 7
  %v5335 = vsub.s32 %v5332, %v5334
  %v5336 = vrot.slane %v5326, %v5335
  %v5338 = vunpack.c.l.s4 1966171168
  %v5339 = vunpack.c.0.s8 %v5338
  %v5340 = vlaneseq
  %v5341 = vshrl.u32 %v5340, 7
  %v5342 = vsub.s32 %v5339, %v5341
  %v5343 = vrot.slane %v5327, %v5342
  %v5345 = vunpack.c.l.s4 1966171168
  %v5346 = vunpack.c.0.s8 %v5345
  %v5347 = vlaneseq
  %v5348 = vshrl.u32 %v5347, 7
  %v5349 = vsub.s32 %v5346, %v5348
  %v5350 = vrot.slane %v5328, %v5349
  %v5352 = vunpack.c.l.s4 1966171168
  %v5353 = vunpack.c.0.s8 %v5352
  %v5354 = vlaneseq
  %v5355 = vshrl.u32 %v5354, 7
  %v5356 = vsub.s32 %v5353, %v5355
  %v5357 = vrot.slane %v5329, %v5356
  %v5358 = vcombine.low %v5336, %v5343
  %v5359 = vcombine.low %v5350, %v5357
  %v5361 = vunpack.c.l.s4 1966171168
  %v5362 = vunpack.c.0.s8 %v5361
  %v5363 = vlaneseq
  %v5364 = vshrl.u32 %v5363, 7
  %v5365 = vsub.s32 %v5362, %v5364
  %v5366 = vrot.slane %v5358, %v5365
  %v5368 = vunpack.c.l.s4 1966171168
  %v5369 = vunpack.c.0.s8 %v5368
  %v5370 = vlaneseq
  %v5371 = vshrl.u32 %v5370, 7
  %v5372 = vsub.s32 %v5369, %v5371
  %v5373 = vrot.slane %v5359, %v5372
  %v5374 = vcombine.low %v5366, %v5373
  %v5376 = vunpack.c.l.s4 1966171168
  %v5377 = vunpack.c.0.s8 %v5376
  %v5378 = vlaneseq
  %v5379 = vshrl.u32 %v5378, 7
  %v5380 = vsub.s32 %v5377, %v5379
  %v5381 = vrot.slane %v5082, %v5380
  %v5383 = vunpack.c.l.s4 1966171168
  %v5384 = vunpack.c.0.s8 %v5383
  %v5385 = vlaneseq
  %v5386 = vshrl.u32 %v5385, 7
  %v5387 = vsub.s32 %v5384, %v5386
  %v5388 = vrot.slane %v5381, %v5387
  %v5389 = vcombine.low %v5083, %v5084
  %v5390 = vcombine.low %v5085, %v5086
  %v5391 = vcombine.low %v5087, %v5088
  %v5392 = vcombine.low %v5089, %v5090
  %v5394 = vunpack.c.l.s4 1966171168
  %v5395 = vunpack.c.0.s8 %v5394
  %v5396 = vlaneseq
  %v5397 = vshrl.u32 %v5396, 7
  %v5398 = vsub.s32 %v5395, %v5397
  %v5399 = vrot.slane %v5389, %v5398
  %v5401 = vunpack.c.l.s4 1966171168
  %v5402 = vunpack.c.0.s8 %v5401
  %v5403 = vlaneseq
  %v5404 = vshrl.u32 %v5403, 7
  %v5405 = vsub.s32 %v5402, %v5404
  %v5406 = vrot.slane %v5390, %v5405
  %v5408 = vunpack.c.l.s4 1966171168
  %v5409 = vunpack.c.0.s8 %v5408
  %v5410 = vlaneseq
  %v5411 = vshrl.u32 %v5410, 7
  %v5412 = vsub.s32 %v5409, %v5411
  %v5413 = vrot.slane %v5391, %v5412
  %v5415 = vunpack.c.l.s4 1966171168
  %v5416 = vunpack.c.0.s8 %v5415
  %v5417 = vlaneseq
  %v5418 = vshrl.u32 %v5417, 7
  %v5419 = vsub.s32 %v5416, %v5418
  %v5420 = vrot.slane %v5392, %v5419
  %v5421 = vcombine.low %v5399, %v5406
  %v5422 = vcombine.low %v5413, %v5420
  %v5424 = vunpack.c.l.s4 1966171168
  %v5425 = vunpack.c.0.s8 %v5424
  %v5426 = vlaneseq
  %v5427 = vshrl.u32 %v5426, 7
  %v5428 = vsub.s32 %v5425, %v5427
  %v5429 = vrot.slane %v5421, %v5428
  %v5431 = vunpack.c.l.s4 1966171168
  %v5432 = vunpack.c.0.s8 %v5431
  %v5433 = vlaneseq
  %v5434 = vshrl.u32 %v5433, 7
  %v5435 = vsub.s32 %v5432, %v5434
  %v5436 = vrot.slane %v5422, %v5435
  %v5437 = vcombine.low %v5429, %v5436
  %v5439 = vunpack.c.l.s4 1966171168
  %v5440 = vunpack.c.0.s8 %v5439
  %v5441 = vlaneseq
  %v5442 = vshrl.u32 %v5441, 7
  %v5443 = vsub.s32 %v5440, %v5442
  %v5444 = vrot.slane %v5091, %v5443
  %v5446 = vunpack.c.l.s4 1966171168
  %v5447 = vunpack.c.0.s8 %v5446
  %v5448 = vlaneseq
  %v5449 = vshrl.u32 %v5448, 7
  %v5450 = vsub.s32 %v5447, %v5449
  %v5451 = vrot.slane %v5444, %v5450
  %v5452 = vcombine.low %v5092, %v5093
  %v5453 = vcombine.low %v5094, %v5095
  %v5454 = vcombine.low %v5096, %v5097
  %v5455 = vcombine.low %v5098, %v5099
  %v5457 = vunpack.c.l.s4 1966171168
  %v5458 = vunpack.c.0.s8 %v5457
  %v5459 = vlaneseq
  %v5460 = vshrl.u32 %v5459, 7
  %v5461 = vsub.s32 %v5458, %v5460
  %v5462 = vrot.slane %v5452, %v5461
  %v5464 = vunpack.c.l.s4 1966171168
  %v5465 = vunpack.c.0.s8 %v5464
  %v5466 = vlaneseq
  %v5467 = vshrl.u32 %v5466, 7
  %v5468 = vsub.s32 %v5465, %v5467
  %v5469 = vrot.slane %v5453, %v5468
  %v5471 = vunpack.c.l.s4 1966171168
  %v5472 = vunpack.c.0.s8 %v5471
  %v5473 = vlaneseq
  %v5474 = vshrl.u32 %v5473, 7
  %v5475 = vsub.s32 %v5472, %v5474
  %v5476 = vrot.slane %v5454, %v5475
  %v5478 = vunpack.c.l.s4 1966171168
  %v5479 = vunpack.c.0.s8 %v5478
  %v5480 = vlaneseq
  %v5481 = vshrl.u32 %v5480, 7
  %v5482 = vsub.s32 %v5479, %v5481
  %v5483 = vrot.slane %v5455, %v5482
  %v5484 = vcombine.low %v5462, %v5469
  %v5485 = vcombine.low %v5476, %v5483
  %v5487 = vunpack.c.l.s4 1966171168
  %v5488 = vunpack.c.0.s8 %v5487
  %v5489 = vlaneseq
  %v5490 = vshrl.u32 %v5489, 7
  %v5491 = vsub.s32 %v5488, %v5490
  %v5492 = vrot.slane %v5484, %v5491
  %v5494 = vunpack.c.l.s4 1966171168
  %v5495 = vunpack.c.0.s8 %v5494
  %v5496 = vlaneseq
  %v5497 = vshrl.u32 %v5496, 7
  %v5498 = vsub.s32 %v5495, %v5497
  %v5499 = vrot.slane %v5485, %v5498
  %v5500 = vcombine.low %v5492, %v5499
  %v5502 = vunpack.c.l.s4 1966171168
  %v5503 = vunpack.c.0.s8 %v5502
  %v5504 = vlaneseq
  %v5505 = vshrl.u32 %v5504, 7
  %v5506 = vsub.s32 %v5503, %v5505
  %v5507 = vrot.slane %v5100, %v5506
  %v5509 = vunpack.c.l.s4 1966171168
  %v5510 = vunpack.c.0.s8 %v5509
  %v5511 = vlaneseq
  %v5512 = vshrl.u32 %v5511, 7
  %v5513 = vsub.s32 %v5510, %v5512
  %v5514 = vrot.slane %v5507, %v5513
  %v5515 = vcombine.low %v5101, %v5102
  %v5516 = vcombine.low %v5103, %v5104
  %v5517 = vcombine.low %v5105, %v5106
  %v5518 = vcombine.low %v5107, %v5108
  %v5520 = vunpack.c.l.s4 1966171168
  %v5521 = vunpack.c.0.s8 %v5520
  %v5522 = vlaneseq
  %v5523 = vshrl.u32 %v5522, 7
  %v5524 = vsub.s32 %v5521, %v5523
  %v5525 = vrot.slane %v5515, %v5524
  %v5527 = vunpack.c.l.s4 1966171168
  %v5528 = vunpack.c.0.s8 %v5527
  %v5529 = vlaneseq
  %v5530 = vshrl.u32 %v5529, 7
  %v5531 = vsub.s32 %v5528, %v5530
  %v5532 = vrot.slane %v5516, %v5531
  %v5534 = vunpack.c.l.s4 1966171168
  %v5535 = vunpack.c.0.s8 %v5534
  %v5536 = vlaneseq
  %v5537 = vshrl.u32 %v5536, 7
  %v5538 = vsub.s32 %v5535, %v5537
  %v5539 = vrot.slane %v5517, %v5538
  %v5541 = vunpack.c.l.s4 1966171168
  %v5542 = vunpack.c.0.s8 %v5541
  %v5543 = vlaneseq
  %v5544 = vshrl.u32 %v5543, 7
  %v5545 = vsub.s32 %v5542, %v5544
  %v5546 = vrot.slane %v5518, %v5545
  %v5547 = vcombine.low %v5525, %v5532
  %v5548 = vcombine.low %v5539, %v5546
  %v5550 = vunpack.c.l.s4 1966171168
  %v5551 = vunpack.c.0.s8 %v5550
  %v5552 = vlaneseq
  %v5553 = vshrl.u32 %v5552, 7
  %v5554 = vsub.s32 %v5551, %v5553
  %v5555 = vrot.slane %v5547, %v5554
  %v5557 = vunpack.c.l.s4 1966171168
  %v5558 = vunpack.c.0.s8 %v5557
  %v5559 = vlaneseq
  %v5560 = vshrl.u32 %v5559, 7
  %v5561 = vsub.s32 %v5558, %v5560
  %v5562 = vrot.slane %v5548, %v5561
  %v5563 = vcombine.low %v5555, %v5562
  %v5565 = vunpack.c.l.s4 1966171168
  %v5566 = vunpack.c.0.s8 %v5565
  %v5567 = vlaneseq
  %v5568 = vshrl.u32 %v5567, 7
  %v5569 = vsub.s32 %v5566, %v5568
  %v5570 = vrot.slane %v5109, %v5569
  %v5572 = vunpack.c.l.s4 1966171168
  %v5573 = vunpack.c.0.s8 %v5572
  %v5574 = vlaneseq
  %v5575 = vshrl.u32 %v5574, 7
  %v5576 = vsub.s32 %v5573, %v5575
  %v5577 = vrot.slane %v5570, %v5576
  %v5578 = vcombine.low %v5110, %v5111
  %v5579 = vcombine.low %v5112, %v5113
  %v5580 = vcombine.low %v5114, %v5115
  %v5581 = vcombine.low %v5116, %v5117
  %v5583 = vunpack.c.l.s4 1966171168
  %v5584 = vunpack.c.0.s8 %v5583
  %v5585 = vlaneseq
  %v5586 = vshrl.u32 %v5585, 7
  %v5587 = vsub.s32 %v5584, %v5586
  %v5588 = vrot.slane %v5578, %v5587
  %v5590 = vunpack.c.l.s4 1966171168
  %v5591 = vunpack.c.0.s8 %v5590
  %v5592 = vlaneseq
  %v5593 = vshrl.u32 %v5592, 7
  %v5594 = vsub.s32 %v5591, %v5593
  %v5595 = vrot.slane %v5579, %v5594
  %v5597 = vunpack.c.l.s4 1966171168
  %v5598 = vunpack.c.0.s8 %v5597
  %v5599 = vlaneseq
  %v5600 = vshrl.u32 %v5599, 7
  %v5601 = vsub.s32 %v5598, %v5600
  %v5602 = vrot.slane %v5580, %v5601
  %v5604 = vunpack.c.l.s4 1966171168
  %v5605 = vunpack.c.0.s8 %v5604
  %v5606 = vlaneseq
  %v5607 = vshrl.u32 %v5606, 7
  %v5608 = vsub.s32 %v5605, %v5607
  %v5609 = vrot.slane %v5581, %v5608
  %v5610 = vcombine.low %v5588, %v5595
  %v5611 = vcombine.low %v5602, %v5609
  %v5613 = vunpack.c.l.s4 1966171168
  %v5614 = vunpack.c.0.s8 %v5613
  %v5615 = vlaneseq
  %v5616 = vshrl.u32 %v5615, 7
  %v5617 = vsub.s32 %v5614, %v5616
  %v5618 = vrot.slane %v5610, %v5617
  %v5620 = vunpack.c.l.s4 1966171168
  %v5621 = vunpack.c.0.s8 %v5620
  %v5622 = vlaneseq
  %v5623 = vshrl.u32 %v5622, 7
  %v5624 = vsub.s32 %v5621, %v5623
  %v5625 = vrot.slane %v5611, %v5624
  %v5626 = vcombine.low %v5618, %v5625
  %v5628 = vunpack.c.l.s4 1966171168
  %v5629 = vunpack.c.0.s8 %v5628
  %v5630 = vlaneseq
  %v5631 = vshrl.u32 %v5630, 7
  %v5632 = vsub.s32 %v5629, %v5631
  %v5633 = vrot.slane %v5118, %v5632
  %v5635 = vunpack.c.l.s4 1966171168
  %v5636 = vunpack.c.0.s8 %v5635
  %v5637 = vlaneseq
  %v5638 = vshrl.u32 %v5637, 7
  %v5639 = vsub.s32 %v5636, %v5638
  %v5640 = vrot.slane %v5633, %v5639
  %v5641 = vcombine.low %v5119, %v5120
  %v5642 = vcombine.low %v5121, %v5122
  %v5643 = vcombine.low %v5123, %v5124
  %v5644 = vcombine.low %v5125, %v5126
  %v5646 = vunpack.c.l.s4 1966171168
  %v5647 = vunpack.c.0.s8 %v5646
  %v5648 = vlaneseq
  %v5649 = vshrl.u32 %v5648, 7
  %v5650 = vsub.s32 %v5647, %v5649
  %v5651 = vrot.slane %v5641, %v5650
  %v5653 = vunpack.c.l.s4 1966171168
  %v5654 = vunpack.c.0.s8 %v5653
  %v5655 = vlaneseq
  %v5656 = vshrl.u32 %v5655, 7
  %v5657 = vsub.s32 %v5654, %v5656
  %v5658 = vrot.slane %v5642, %v5657
  %v5660 = vunpack.c.l.s4 1966171168
  %v5661 = vunpack.c.0.s8 %v5660
  %v5662 = vlaneseq
  %v5663 = vshrl.u32 %v5662, 7
  %v5664 = vsub.s32 %v5661, %v5663
  %v5665 = vrot.slane %v5643, %v5664
  %v5667 = vunpack.c.l.s4 1966171168
  %v5668 = vunpack.c.0.s8 %v5667
  %v5669 = vlaneseq
  %v5670 = vshrl.u32 %v5669, 7
  %v5671 = vsub.s32 %v5668, %v5670
  %v5672 = vrot.slane %v5644, %v5671
  %v5673 = vcombine.low %v5651, %v5658
  %v5674 = vcombine.low %v5665, %v5672
  %v5676 = vunpack.c.l.s4 1966171168
  %v5677 = vunpack.c.0.s8 %v5676
  %v5678 = vlaneseq
  %v5679 = vshrl.u32 %v5678, 7
  %v5680 = vsub.s32 %v5677, %v5679
  %v5681 = vrot.slane %v5673, %v5680
  %v5683 = vunpack.c.l.s4 1966171168
  %v5684 = vunpack.c.0.s8 %v5683
  %v5685 = vlaneseq
  %v5686 = vshrl.u32 %v5685, 7
  %v5687 = vsub.s32 %v5684, %v5686
  %v5688 = vrot.slane %v5674, %v5687
  %v5689 = vcombine.low %v5681, %v5688
  %v5691 = vunpack.c.l.s4 1966171168
  %v5692 = vunpack.c.0.s8 %v5691
  %v5693 = vlaneseq
  %v5694 = vshrl.u32 %v5693, 7
  %v5695 = vsub.s32 %v5692, %v5694
  %v5696 = vrot.slane %v5127, %v5695
  %v5698 = vunpack.c.l.s4 1966171168
  %v5699 = vunpack.c.0.s8 %v5698
  %v5700 = vlaneseq
  %v5701 = vshrl.u32 %v5700, 7
  %v5702 = vsub.s32 %v5699, %v5701
  %v5703 = vrot.slane %v5696, %v5702
  %vm5720 = vcmask 130048
  %v5721 = vsel %vm5720, %v5248, -inf
  %vm5722 = vcmask 122880
  %v5723 = vsel %vm5722, %v5262, -inf
  %v5724 = vmax.f32 %v5721, %v5723
  %v5725 = vrot.slane %v5724, 4
  %v5726 = vmax.f32 %v5724, %v5725
  %v5727 = vrot.slane %v5726, 2
  %v5728 = vmax.f32 %v5726, %v5727
  %v5729 = vrot.slane %v5728, 1
  %v5730 = vmax.f32 %v5728, %v5729
  %v5731 = vsel %vm5720, %v5311, -inf
  %v5732 = vsel %vm5722, %v5325, -inf
  %v5733 = vmax.f32 %v5731, %v5732
  %v5734 = vrot.slane %v5733, 4
  %v5735 = vmax.f32 %v5733, %v5734
  %v5736 = vrot.slane %v5735, 2
  %v5737 = vmax.f32 %v5735, %v5736
  %v5738 = vrot.slane %v5737, 1
  %v5739 = vmax.f32 %v5737, %v5738
  %v5740 = vsel %vm5720, %v5374, -inf
  %v5741 = vsel %vm5722, %v5388, -inf
  %v5742 = vmax.f32 %v5740, %v5741
  %v5743 = vrot.slane %v5742, 4
  %v5744 = vmax.f32 %v5742, %v5743
  %v5745 = vrot.slane %v5744, 2
  %v5746 = vmax.f32 %v5744, %v5745
  %v5747 = vrot.slane %v5746, 1
  %v5748 = vmax.f32 %v5746, %v5747
  %v5749 = vsel %vm5720, %v5437, -inf
  %v5750 = vsel %vm5722, %v5451, -inf
  %v5751 = vmax.f32 %v5749, %v5750
  %v5752 = vrot.slane %v5751, 4
  %v5753 = vmax.f32 %v5751, %v5752
  %v5754 = vrot.slane %v5753, 2
  %v5755 = vmax.f32 %v5753, %v5754
  %v5756 = vrot.slane %v5755, 1
  %v5757 = vmax.f32 %v5755, %v5756
  %v5758 = vsel %vm5720, %v5500, -inf
  %v5759 = vsel %vm5722, %v5514, -inf
  %v5760 = vmax.f32 %v5758, %v5759
  %v5761 = vrot.slane %v5760, 4
  %v5762 = vmax.f32 %v5760, %v5761
  %v5763 = vrot.slane %v5762, 2
  %v5764 = vmax.f32 %v5762, %v5763
  %v5765 = vrot.slane %v5764, 1
  %v5766 = vmax.f32 %v5764, %v5765
  %v5767 = vsel %vm5720, %v5563, -inf
  %v5768 = vsel %vm5722, %v5577, -inf
  %v5769 = vmax.f32 %v5767, %v5768
  %v5770 = vrot.slane %v5769, 4
  %v5771 = vmax.f32 %v5769, %v5770
  %v5772 = vrot.slane %v5771, 2
  %v5773 = vmax.f32 %v5771, %v5772
  %v5774 = vrot.slane %v5773, 1
  %v5775 = vmax.f32 %v5773, %v5774
  %v5776 = vsel %vm5720, %v5626, -inf
  %v5777 = vsel %vm5722, %v5640, -inf
  %v5778 = vmax.f32 %v5776, %v5777
  %v5779 = vrot.slane %v5778, 4
  %v5780 = vmax.f32 %v5778, %v5779
  %v5781 = vrot.slane %v5780, 2
  %v5782 = vmax.f32 %v5780, %v5781
  %v5783 = vrot.slane %v5782, 1
  %v5784 = vmax.f32 %v5782, %v5783
  %v5785 = vsel %vm5720, %v5689, -inf
  %v5786 = vsel %vm5722, %v5703, -inf
  %v5787 = vmax.f32 %v5785, %v5786
  %v5788 = vrot.slane %v5787, 4
  %v5789 = vmax.f32 %v5787, %v5788
  %v5790 = vrot.slane %v5789, 2
  %v5791 = vmax.f32 %v5789, %v5790
  %v5792 = vrot.slane %v5791, 1
  %v5793 = vmax.f32 %v5791, %v5792
  %v5794 = vld [vmem:[%s10] sm:$0xff]
  %v5795 = vld [vmem:[%s10 + $0x8] sm:$0xff]
  %v5796 = vld [vmem:[%s10 + $0x10] sm:$0xff]
  %v5797 = vld [vmem:[%s10 + $0x18] sm:$0xff]
  %v5798 = vld [vmem:[%s11] sm:$0xff]
  %v5799 = vld [vmem:[%s11 + $0x8] sm:$0xff]
  %vm5808 = vcmask 1041409
  %v5809 = vsel %vm5808, %v5739, %v5730
  %vm5810 = vcmask 1042434
  %v5811 = vsel %vm5810, %v5748, %v5809
  %vm5812 = vcmask 1043459
  %v5813 = vsel %vm5812, %v5757, %v5811
  %vm5814 = vcmask 1044484
  %v5815 = vsel %vm5814, %v5766, %v5813
  %vm5816 = vcmask 1045509
  %v5817 = vsel %vm5816, %v5775, %v5815
  %vm5818 = vcmask 1046534
  %v5819 = vsel %vm5818, %v5784, %v5817
  %vm5820 = vcmask 1047559
  %v5821 = vsel %vm5820, %v5793, %v5819
  %v5822 = vsel %vm5720, %v5821, 0
  %5824 = vmatprep.subr.mxu0 0.0
  %5825 = vmatpush1.msra.mxu0 0.0
  %5826 = vmatprep.subr.mxu0 0.0
  %5827 = vmatpush1.msra.mxu0 0.0
  %5828 = vmatprep.subr.mxu0 0.0
  %5829 = vmatpush1.msra.mxu0 0.0
  %5830 = vmatprep.subr.mxu0 0.0
  %5831 = vmatpush1.msra.mxu0 0.0
  %5832 = vmatprep.subr.mxu0 0.0
  %5833 = vmatpush1.msra.mxu0 0.0
  %5834 = vmatprep.subr.mxu0 0.0
  %5835 = vmatpush1.msra.mxu0 0.0
  %5836 = vmatprep.subr.mxu0 0.0
  %5837 = vmatpush1.msra.mxu0 0.0
  %5838 = vmatprep.subr.mxu0 0.0
  %5839 = vmatpush1.msra.mxu0 0.0
  %5840 = vmatprep.subr.mxu0 0.0
  %5841 = vmatpush1.msra.mxu0 0.0
  %5842 = vmatprep.subr.mxu0 0.0
  %5843 = vmatpush1.msra.mxu0 0.0
  %5844 = vmatprep.subr.mxu0 0.0
  %5845 = vmatpush1.msra.mxu0 0.0
  %5846 = vmatprep.subr.mxu0 0.0
  %5847 = vmatpush1.msra.mxu0 0.0
  %5848 = vmatprep.subr.mxu0 0.0
  %5849 = vmatpush1.msra.mxu0 0.0
  %5850 = vmatprep.subr.mxu0 0.0
  %5851 = vmatpush1.msra.mxu0 0.0
  %5852 = vmatprep.subr.mxu0 0.0
  %5853 = vmatpush1.msra.mxu0 %v5799
  %5854 = vmatprep.subr.mxu0 0.0
  %5855 = vmatpush1.msra.mxu0 %v5798
  %5856 = vmatprep.subr.mxu0 0.0
  %5857 = vmatpush2.msra.mxu0 0.0
  %5858 = vmatprep.subr.mxu0 0.0
  %5859 = vmatpush2.msra.mxu0 0.0
  %5860 = vmatprep.subr.mxu0 0.0
  %5861 = vmatpush2.msra.mxu0 0.0
  %5862 = vmatprep.subr.mxu0 0.0
  %5863 = vmatpush2.msra.mxu0 0.0
  %5864 = vmatprep.subr.mxu0 0.0
  %5865 = vmatpush2.msra.mxu0 0.0
  %5866 = vmatprep.subr.mxu0 0.0
  %5867 = vmatpush2.msra.mxu0 0.0
  %5868 = vmatprep.subr.mxu0 0.0
  %5869 = vmatpush2.msra.mxu0 0.0
  %5870 = vmatprep.subr.mxu0 0.0
  %5871 = vmatpush2.msra.mxu0 0.0
  %5872 = vmatprep.subr.mxu0 0.0
  %5873 = vmatpush2.msra.mxu0 0.0
  %5874 = vmatprep.subr.mxu0 0.0
  %5875 = vmatpush2.msra.mxu0 0.0
  %5876 = vmatprep.subr.mxu0 0.0
  %5877 = vmatpush2.msra.mxu0 0.0
  %5878 = vmatprep.subr.mxu0 0.0
  %5879 = vmatpush2.msra.mxu0 0.0
  %5880 = vmatprep.subr.mxu0 0.0
  %5881 = vmatpush2.msra.mxu0 0.0
  %5882 = vmatprep.subr.mxu0 0.0
  %5883 = vmatpush2.msra.mxu0 0.0
  %5884 = vmatprep.subr.mxu0 0.0
  %5885 = vmatpush2.msra.mxu0 0.0
  %5886 = vmatprep.subr.mxu0 0.0
  %5887 = vmatpush2.msra.mxu0 0.0
  %5888 = vmatprep.mubr.f32.mxu0 0.0
  %5889 = vmatmul.mubr.f32.gmra.mxu0 %v5822
  %v5890 = vpop.f32.mrf.mxu0
  %v5891 = vadd.f32 0.0, %v5890
  %v5892 = vpop.f32.mrf.mxu0
  %5893 = vdwg.mxu0
  %v5902 = vsel %vm5808, %v3041, %v3032
  %v5903 = vsel %vm5810, %v3050, %v5902
  %v5904 = vsel %vm5812, %v3059, %v5903
  %v5905 = vsel %vm5814, %v3068, %v5904
  %v5906 = vsel %vm5816, %v3077, %v5905
  %v5907 = vsel %vm5818, %v3086, %v5906
  %v5908 = vsel %vm5820, %v3095, %v5907
  %v5909 = vsel %vm3022, %v5908, 0
  %5911 = vmatprep.subr.mxu0 0.0
  %5912 = vmatpush1.msra.mxu0 0.0
  %5913 = vmatprep.subr.mxu0 0.0
  %5914 = vmatpush1.msra.mxu0 0.0
  %5915 = vmatprep.subr.mxu0 0.0
  %5916 = vmatpush1.msra.mxu0 0.0
  %5917 = vmatprep.subr.mxu0 0.0
  %5918 = vmatpush1.msra.mxu0 0.0
  %5919 = vmatprep.subr.mxu0 0.0
  %5920 = vmatpush1.msra.mxu0 0.0
  %5921 = vmatprep.subr.mxu0 0.0
  %5922 = vmatpush1.msra.mxu0 0.0
  %5923 = vmatprep.subr.mxu0 0.0
  %5924 = vmatpush1.msra.mxu0 0.0
  %5925 = vmatprep.subr.mxu0 0.0
  %5926 = vmatpush1.msra.mxu0 0.0
  %5927 = vmatprep.subr.mxu0 0.0
  %5928 = vmatpush1.msra.mxu0 0.0
  %5929 = vmatprep.subr.mxu0 0.0
  %5930 = vmatpush1.msra.mxu0 0.0
  %5931 = vmatprep.subr.mxu0 0.0
  %5932 = vmatpush1.msra.mxu0 0.0
  %5933 = vmatprep.subr.mxu0 0.0
  %5934 = vmatpush1.msra.mxu0 0.0
  %5935 = vmatprep.subr.mxu0 0.0
  %5936 = vmatpush1.msra.mxu0 %v5797
  %5937 = vmatprep.subr.mxu0 0.0
  %5938 = vmatpush1.msra.mxu0 %v5796
  %5939 = vmatprep.subr.mxu0 0.0
  %5940 = vmatpush1.msra.mxu0 %v5795
  %5941 = vmatprep.subr.mxu0 0.0
  %5942 = vmatpush1.msra.mxu0 %v5794
  %5943 = vmatprep.subr.mxu0 0.0
  %5944 = vmatpush2.msra.mxu0 0.0
  %5945 = vmatprep.subr.mxu0 0.0
  %5946 = vmatpush2.msra.mxu0 0.0
  %5947 = vmatprep.subr.mxu0 0.0
  %5948 = vmatpush2.msra.mxu0 0.0
  %5949 = vmatprep.subr.mxu0 0.0
  %5950 = vmatpush2.msra.mxu0 0.0
  %5951 = vmatprep.subr.mxu0 0.0
  %5952 = vmatpush2.msra.mxu0 0.0
  %5953 = vmatprep.subr.mxu0 0.0
  %5954 = vmatpush2.msra.mxu0 0.0
  %5955 = vmatprep.subr.mxu0 0.0
  %5956 = vmatpush2.msra.mxu0 0.0
  %5957 = vmatprep.subr.mxu0 0.0
  %5958 = vmatpush2.msra.mxu0 0.0
  %5959 = vmatprep.subr.mxu0 0.0
  %5960 = vmatpush2.msra.mxu0 0.0
  %5961 = vmatprep.subr.mxu0 0.0
  %5962 = vmatpush2.msra.mxu0 0.0
  %5963 = vmatprep.subr.mxu0 0.0
  %5964 = vmatpush2.msra.mxu0 0.0
  %5965 = vmatprep.subr.mxu0 0.0
  %5966 = vmatpush2.msra.mxu0 0.0
  %5967 = vmatprep.subr.mxu0 0.0
  %5968 = vmatpush2.msra.mxu0 0.0
  %5969 = vmatprep.subr.mxu0 0.0
  %5970 = vmatpush2.msra.mxu0 0.0
  %5971 = vmatprep.subr.mxu0 0.0
  %5972 = vmatpush2.msra.mxu0 0.0
  %5973 = vmatprep.subr.mxu0 0.0
  %5974 = vmatpush2.msra.mxu0 0.0
  %5975 = vmatprep.mubr.f32.mxu0 0.0
  %5976 = vmatmul.mubr.f32.gmra.mxu0 %v5909
  %v5977 = vpop.f32.mrf.mxu0
  %v5978 = vadd.f32 %v5891, %v5977
  %v5979 = vpop.f32.mrf.mxu0
  %5980 = vdwg.mxu0
  %v5981 = vld [vmem:[%s12] sm:$0x1]
  %v5983 = vlaneseq
  %v5984 = vshrl.u32 %v5983, 7
  %v5985 = vsub.s32 0, %v5984
  %v5986 = vrot.slane %v5981, %v5985
  %v5988 = vadd.f32 %v5978, %v5986
  %5989 = vst [vmem:[%s13] sm:$0xff] %v5988
  // Predicated region
  $region54: #{cnn_forward.1} parent=0 // pred_check
    _
  $region55: #{cnn_forward.1} parent=0 // pred_check_branch
    %5991 = sbr.rel (0) target = $region57
  $region56: #{cnn_forward.1} parent=0 // pred_region
    _
  $region57: #{cnn_forward.1} parent=0 // pred_fallthru
    _
  // Predicated region
  $region58: #{cnn_forward.1} parent=0 // pred_check
    _
  $region59: #{cnn_forward.1} parent=0 // pred_check_branch
    %5993 = sbr.rel (0) target = $region61
  $region60: #{cnn_forward.1} parent=0 // pred_region
    _
  $region61: #{cnn_forward.1} parent=0 // pred_fallthru
    _

</llo_original>
